<compile_context>
chip_gen: v7x
topology: tpu7x:2x2x1
jax: 0.10.0
libtpu: 0.0.40
codegen_flags: <defaults>
</compile_context>

<pallas_src>
import functools

import jax
import jax.numpy as jnp
from jax.experimental import pallas as pl
from jax.experimental.pallas import tpu as pltpu


def bottleneck_kernel(x_ref, w1_ref, b1_ref, w2_ref, b2_ref, w3_ref, b3_ref,
                      o_ref, acc_ref, *, H, W, compute_dtype):
    """Fused bottleneck for one (block_n, H*W, Cin) tile. Everything stays in VMEM."""
    Bt = x_ref.shape[0]
    Cin = x_ref.shape[2]
    P = w1_ref.shape[1]          # planes (conv1 output channels)
    Cmid = w2_ref.shape[2]       # 64
    Cout = w3_ref.shape[1]       # 256
    M = Bt * H * W

    # ---- conv1 (1x1, BN1 scale pre-folded into w1) + bias + ReLU -> (M, P) f32
    h1 = jnp.dot(x_ref[...].reshape(M, Cin).astype(compute_dtype), w1_ref[...],
                 preferred_element_type=jnp.float32)
    h1 = jnp.maximum(h1 + b1_ref[...], 0.0)
    h1c = h1.astype(compute_dtype)          # shared matmul operand for all 9 taps

    # ---- conv2 (3x3, stride=1, pad=1), output-shift formulation.
    # For tap t=(dy,dx), oy=dy-1, ox=dx-1:
    #   out2[b,i,j,:] += (h1 @ w2[t])[b, i+oy, j+ox, :]   whenever (i+oy, j+ox) is in
    # range; the input zero-padding becomes "border outputs simply receive fewer
    # contributions", so no halo-padded scratch or im2col staging is needed.
    # The center tap (oy=ox=0) covers the full range and initializes the accumulator,
    # so acc_ref is fully overwritten every grid step (no cross-step / cross-core state).
    center = 4
    r = jnp.dot(h1c, w2_ref[center], preferred_element_type=jnp.float32)
    acc_ref[...] = r.reshape(Bt, H, W, Cmid)
    for t in range(9):
        if t == center:
            continue
        oy, ox = t // 3 - 1, t % 3 - 1
        r = jnp.dot(h1c, w2_ref[t], preferred_element_type=jnp.float32)
        r4 = r.reshape(Bt, H, W, Cmid)
        di0, di1 = max(0, -oy), H - max(0, oy)      # destination rows (output i)
        dj0, dj1 = max(0, -ox), W - max(0, ox)      # destination cols (output j)
        si0, si1 = max(0, oy), H - max(0, -oy)      # source rows (i + oy)
        sj0, sj1 = max(0, ox), W - max(0, -ox)      # source cols (j + ox)
        acc_ref[:, di0:di1, dj0:dj1, :] += r4[:, si0:si1, sj0:sj1, :]
    h2 = jnp.maximum(acc_ref[...].reshape(M, Cmid) + b2_ref[...], 0.0)

    # ---- conv3 (1x1, BN3 scale pre-folded) + bias + residual + ReLU
    h3 = jnp.dot(h2.astype(compute_dtype), w3_ref[...],
                 preferred_element_type=jnp.float32)
    # Re-read the identity from the still-resident input block (don't keep an f32 copy
    # live across all three matmuls); the add itself is in f32.
    identity = x_ref[...].reshape(M, Cin).astype(jnp.float32)
    out = jnp.maximum(h3 + b3_ref[...] + identity, 0.0)
    o_ref[...] = out.reshape(Bt, H * W, Cout).astype(o_ref.dtype)


def bottleneck_forward(x_nhwc, w1, s1, b1, w2, s2, b2, w3, s3, b3, *,
                       block_n=2, compute_dtype=jnp.bfloat16,
                       io_dtype=jnp.bfloat16,
                       vmem_limit_bytes=64 * 1024 * 1024):
    """x_nhwc: (N, H, W, Cin) f32. w1: (Cin, P); w2: (3, 3, P, Cmid) HWIO;
    w3: (Cmid, Cout). sN/bN: folded eval-mode BN scale/bias (per output channel).

    compute_dtype: dtype of the matmul operands (accumulation is always f32).
    io_dtype: dtype of the HBM-facing input/output of the pallas_call (the kernel is
    HBM-bound at realistic sizes, so bf16 I/O is ~2x wall-clock)."""
    N, H, W, Cin = x_nhwc.shape
    P = w1.shape[1]
    Cmid = w2.shape[3]
    Cout = w3.shape[1]
    assert Cin == Cout, "residual add requires inplanes == 256 (downsample=None)"
    assert N % block_n == 0

    s1 = s1.reshape(-1); b1 = b1.reshape(-1)
    s2 = s2.reshape(-1); b2 = b2.reshape(-1)
    s3 = s3.reshape(-1); b3 = b3.reshape(-1)

    # Fold BN scale into conv weights (exact: scale is per-output-channel).
    w1f = (w1 * s1[None, :]).astype(compute_dtype)
    # (3,3,P,Cmid) -> (9, P, Cmid); tap index t = dy*3 + dx matches the kernel.
    w2f = (w2 * s2[None, None, None, :]).reshape(9, P, Cmid).astype(compute_dtype)
    w3f = (w3 * s3[None, :]).astype(compute_dtype)
    b1r = b1.reshape(1, P).astype(jnp.float32)
    b2r = b2.reshape(1, Cmid).astype(jnp.float32)
    b3r = b3.reshape(1, Cout).astype(jnp.float32)

    # Lane-dense (N, H*W, C) views: channels (256, multiple of 128) on the lane axis;
    # kernel stores a flat (M, 256) slab -> unmasked vst.
    x3d = x_nhwc.reshape(N, H * W, Cin).astype(io_dtype)

    kernel = functools.partial(bottleneck_kernel, H=H, W=W,
                               compute_dtype=compute_dtype)
    resident = lambda a: pl.BlockSpec(a.shape, lambda n: (0,) * a.ndim)

    out = pl.pallas_call(
        kernel,
        out_shape=jax.ShapeDtypeStruct((N, H * W, Cout), io_dtype),
        grid_spec=pltpu.PrefetchScalarGridSpec(
            num_scalar_prefetch=0,
            grid=(N // block_n,),
            in_specs=[
                pl.BlockSpec((block_n, H * W, Cin), lambda n: (n, 0, 0)),
                resident(w1f), resident(b1r),
                resident(w2f), resident(b2r),
                resident(w3f), resident(b3r),
            ],
            out_specs=pl.BlockSpec((block_n, H * W, Cout), lambda n: (n, 0, 0)),
            # f32 conv2 accumulator; fully rewritten every step.
            scratch_shapes=[pltpu.VMEM((block_n, H, W, Cmid), jnp.float32)],
        ),
        compiler_params=pltpu.CompilerParams(
            dimension_semantics=("parallel",),
            vmem_limit_bytes=vmem_limit_bytes),
    )(x3d, w1f, b1r, w2f, b2r, w3f, b3r)
    return out.reshape(N, H, W, Cout)


def fold_bn(gamma, beta, mean, var, eps=1e-5):
    scale = gamma / jnp.sqrt(var + eps)
    bias = beta - mean * scale
    return scale[None, :].astype(jnp.float32), bias[None, :].astype(jnp.float32)


def reference(x_nhwc, w1, s1, b1, w2, s2, b2, w3, s3, b3):
    """Pure-JAX NHWC reference (lax conv, HIGHEST precision) for correctness check."""
    dn = ('NHWC', 'HWIO', 'NHWC')
    conv = functools.partial(jax.lax.conv_general_dilated,
                             window_strides=(1, 1), dimension_numbers=dn,
                             precision=jax.lax.Precision.HIGHEST)
    h = conv(x_nhwc, w1[None, None], padding='VALID')
    h = jnp.maximum(h * s1[0] + b1[0], 0.0)
    h = conv(h, w2, padding=((1, 1), (1, 1)))
    h = jnp.maximum(h * s2[0] + b2[0], 0.0)
    h = conv(h, w3[None, None], padding='VALID')
    h = h * s3[0] + b3[0]
    return jnp.maximum(h + x_nhwc, 0.0)


if __name__ == "__main__":
    # Small shapes consistent with the module: the residual forces inplanes == 256.
    # N=8, block_n=2 -> 4 grid steps (>=2 pipelined steps per TensorCore on v7x).
    N, H, W = 8, 8, 8
    inplanes, planes, cmid, cexp = 256, 32, 64, 256

    key = jax.random.PRNGKey(0)
    ks = jax.random.split(key, 16)

    # PyTorch NCHW input -> kernel NHWC
    x_nchw = jax.random.normal(ks[0], (N, inplanes, H, W), jnp.float32)
    x_nhwc = jnp.transpose(x_nchw, (0, 2, 3, 1))

    # Conv weights (deterministic). PyTorch conv weight is (Cout, Cin, kH, kW);
    # here built directly in matmul / HWIO form.
    w1 = 0.1 * jax.random.normal(ks[1], (inplanes, planes), jnp.float32)    # 1x1: Cin x Cout
    w2 = 0.1 * jax.random.normal(ks[2], (3, 3, planes, cmid), jnp.float32)  # HWIO
    w3 = 0.1 * jax.random.normal(ks[3], (cmid, cexp), jnp.float32)          # 1x1: Cin x Cout

    def bn_params(kg, kb, km, kv, c):
        gamma = 0.5 + jax.random.uniform(kg, (c,), jnp.float32)
        beta = 0.1 * jax.random.normal(kb, (c,), jnp.float32)
        mean = 0.1 * jax.random.normal(km, (c,), jnp.float32)
        var = 0.5 + jax.random.uniform(kv, (c,), jnp.float32)
        return fold_bn(gamma, beta, mean, var)

    s1, b1 = bn_params(ks[4], ks[5], ks[6], ks[7], planes)
    s2, b2 = bn_params(ks[8], ks[9], ks[10], ks[11], cmid)
    s3, b3 = bn_params(ks[12], ks[13], ks[14], ks[15], cexp)

    ref = reference(x_nhwc, w1, s1, b1, w2, s2, b2, w3, s3, b3)

    # f32 compute + f32 I/O path: tight structural check.
    out_f32 = bottleneck_forward(x_nhwc, w1, s1, b1, w2, s2, b2, w3, s3, b3,
                                 block_n=2, compute_dtype=jnp.float32,
                                 io_dtype=jnp.float32)
    out_f32 = jax.block_until_ready(out_f32)
    assert out_f32.shape == (N, H, W, cexp)
    err_f32 = float(jnp.max(jnp.abs(out_f32 - ref)))
    assert jnp.allclose(out_f32, ref, rtol=1e-2, atol=1e-2), err_f32

    # Default path: bf16 matmul operands + bf16 HBM I/O (f32 accumulation, bias,
    # conv2 accumulator and residual). Looser tolerance due to bf16 rounding.
    out_bf16 = bottleneck_forward(x_nhwc, w1, s1, b1, w2, s2, b2, w3, s3, b3,
                                  block_n=2)
    out_bf16 = jax.block_until_ready(out_bf16)
    assert out_bf16.shape == (N, H, W, cexp)
    out_bf16_f32 = out_bf16.astype(jnp.float32)
    err_bf16 = float(jnp.max(jnp.abs(out_bf16_f32 - ref)))
    assert jnp.allclose(out_bf16_f32, ref, rtol=1e-1, atol=2e-1), err_bf16

    # Back to PyTorch's NCHW convention if needed downstream.
    out_nchw = jnp.transpose(out_f32, (0, 3, 1, 2))
    assert out_nchw.shape == (N, cexp, H, W)

    print("KERNEL_OK")
</pallas_src>

<mosaic_0001>
module attributes {stable_mosaic.version = 11 : i64} {
  func.func @bottleneck_kernel(%arg0: i32, %arg1: memref<2x64x256xf32, #tpu.memory_space<vmem>>, %arg2: memref<256x32xf32, #tpu.memory_space<vmem>>, %arg3: memref<1x32xf32, #tpu.memory_space<vmem>>, %arg4: memref<9x32x64xf32, #tpu.memory_space<vmem>>, %arg5: memref<1x64xf32, #tpu.memory_space<vmem>>, %arg6: memref<64x256xf32, #tpu.memory_space<vmem>>, %arg7: memref<1x256xf32, #tpu.memory_space<vmem>>, %arg8: memref<2x64x256xf32, #tpu.memory_space<vmem>>, %arg9: memref<2x8x8x64xf32, #tpu.memory_space<vmem>>) attributes {dimension_semantics = [#tpu.dimension_semantics<parallel>], iteration_bounds = array<i64: 4>, scalar_prefetch = 0 : i64, scratch_operands = 1 : i64, tpu.core_type = #tpu.core_type<tc>, window_params = [{transform_indices = @transform_0, window_bounds = array<i64: 2, 64, 256>}, {pipeline_mode = #tpu.pipeline_mode<synchronous>, transform_indices = @transform_1, window_bounds = array<i64: 256, 32>}, {pipeline_mode = #tpu.pipeline_mode<synchronous>, transform_indices = @transform_2, window_bounds = array<i64: 1, 32>}, {pipeline_mode = #tpu.pipeline_mode<synchronous>, transform_indices = @transform_3, window_bounds = array<i64: 9, 32, 64>}, {pipeline_mode = #tpu.pipeline_mode<synchronous>, transform_indices = @transform_4, window_bounds = array<i64: 1, 64>}, {pipeline_mode = #tpu.pipeline_mode<synchronous>, transform_indices = @transform_5, window_bounds = array<i64: 64, 256>}, {pipeline_mode = #tpu.pipeline_mode<synchronous>, transform_indices = @transform_6, window_bounds = array<i64: 1, 256>}, {transform_indices = @transform_7, window_bounds = array<i64: 2, 64, 256>}]} {
    %c0 = arith.constant 0 : index
    %c0_0 = arith.constant 0 : index
    %c0_1 = arith.constant 0 : index
    %0 = vector.load %arg1[%c0, %c0_0, %c0_1] : memref<2x64x256xf32, #tpu.memory_space<vmem>>, vector<2x64x256xf32>
    %1 = vector.shape_cast %0 : vector<2x64x256xf32> to vector<128x256xf32>
    %c0_2 = arith.constant 0 : index
    %c0_3 = arith.constant 0 : index
    %2 = vector.load %arg2[%c0_2, %c0_3] : memref<256x32xf32, #tpu.memory_space<vmem>>, vector<256x32xf32>
    %cst = arith.constant dense<0.000000e+00> : vector<128x32xf32>
    %3 = tpu.matmul %1, %2, %cst {dimension_numbers = #tpu.dot_dimension_numbers<[1], [0], [0], [1], [0, 0, 1, 1], [], []>} : vector<128x256xf32>, vector<256x32xf32>, vector<128x32xf32> -> vector<128x32xf32>
    %c0_4 = arith.constant 0 : index
    %c0_5 = arith.constant 0 : index
    %4 = vector.load %arg3[%c0_4, %c0_5] : memref<1x32xf32, #tpu.memory_space<vmem>>, vector<1x32xf32>
    %5 = vector.broadcast %4 : vector<1x32xf32> to vector<128x32xf32>
    %6 = arith.addf %3, %5 : vector<128x32xf32>
    %cst_6 = arith.constant 0.000000e+00 : f32
    %7 = vector.broadcast %cst_6 : f32 to vector<128x32xf32>
    %8 = arith.maximumf %6, %7 : vector<128x32xf32>
    %c4 = arith.constant 4 : index
    %c0_7 = arith.constant 0 : index
    %c0_8 = arith.constant 0 : index
    %9 = vector.load %arg4[%c4, %c0_7, %c0_8] : memref<9x32x64xf32, #tpu.memory_space<vmem>>, vector<1x32x64xf32>
    %10 = vector.shape_cast %9 : vector<1x32x64xf32> to vector<32x64xf32>
    %cst_9 = arith.constant dense<0.000000e+00> : vector<128x64xf32>
    %11 = tpu.matmul %8, %10, %cst_9 {dimension_numbers = #tpu.dot_dimension_numbers<[1], [0], [0], [1], [0, 0, 1, 1], [], []>} : vector<128x32xf32>, vector<32x64xf32>, vector<128x64xf32> -> vector<128x64xf32>
    %12 = vector.shape_cast %11 : vector<128x64xf32> to vector<2x8x8x64xf32>
    %c0_10 = arith.constant 0 : index
    %c0_11 = arith.constant 0 : index
    %c0_12 = arith.constant 0 : index
    %c0_13 = arith.constant 0 : index
    %13 = vector.load %arg9[%c0_10, %c0_11, %c0_12, %c0_13] : memref<2x8x8x64xf32, #tpu.memory_space<vmem>>, vector<2x8x8x64xf32>
    tpu.vector_store %arg9[%c0_10, %c0_11, %c0_12, %c0_13], %12 {strides = array<i32>} : memref<2x8x8x64xf32, #tpu.memory_space<vmem>>, vector<2x8x8x64xf32>,
    %c0_14 = arith.constant 0 : index
    %c0_15 = arith.constant 0 : index
    %c0_16 = arith.constant 0 : index
    %14 = vector.load %arg4[%c0_14, %c0_15, %c0_16] : memref<9x32x64xf32, #tpu.memory_space<vmem>>, vector<1x32x64xf32>
    %15 = vector.shape_cast %14 : vector<1x32x64xf32> to vector<32x64xf32>
    %cst_17 = arith.constant dense<0.000000e+00> : vector<128x64xf32>
    %16 = tpu.matmul %8, %15, %cst_17 {dimension_numbers = #tpu.dot_dimension_numbers<[1], [0], [0], [1], [0, 0, 1, 1], [], []>} : vector<128x32xf32>, vector<32x64xf32>, vector<128x64xf32> -> vector<128x64xf32>
    %17 = vector.shape_cast %16 : vector<128x64xf32> to vector<2x8x8x64xf32>
    %c0_18 = arith.constant 0 : index
    %c1 = arith.constant 1 : index
    %c1_19 = arith.constant 1 : index
    %c0_20 = arith.constant 0 : index
    %18 = vector.load %arg9[%c0_18, %c1, %c1_19, %c0_20] : memref<2x8x8x64xf32, #tpu.memory_space<vmem>>, vector<2x7x7x64xf32>
    %19 = vector.extract_strided_slice %17 {offsets = [0, 0, 0, 0], sizes = [2, 7, 7, 64], strides = [1, 1, 1, 1]} : vector<2x8x8x64xf32> to vector<2x7x7x64xf32>
    %20 = arith.addf %18, %19 : vector<2x7x7x64xf32>
    %c0_21 = arith.constant 0 : index
    %c1_22 = arith.constant 1 : index
    %c1_23 = arith.constant 1 : index
    %c0_24 = arith.constant 0 : index
    %21 = vector.load %arg9[%c0_21, %c1_22, %c1_23, %c0_24] : memref<2x8x8x64xf32, #tpu.memory_space<vmem>>, vector<2x7x7x64xf32>
    tpu.vector_store %arg9[%c0_21, %c1_22, %c1_23, %c0_24], %20 {strides = array<i32>} : memref<2x8x8x64xf32, #tpu.memory_space<vmem>>, vector<2x7x7x64xf32>,
    %c1_25 = arith.constant 1 : index
    %c0_26 = arith.constant 0 : index
    %c0_27 = arith.constant 0 : index
    %22 = vector.load %arg4[%c1_25, %c0_26, %c0_27] : memref<9x32x64xf32, #tpu.memory_space<vmem>>, vector<1x32x64xf32>
    %23 = vector.shape_cast %22 : vector<1x32x64xf32> to vector<32x64xf32>
    %cst_28 = arith.constant dense<0.000000e+00> : vector<128x64xf32>
    %24 = tpu.matmul %8, %23, %cst_28 {dimension_numbers = #tpu.dot_dimension_numbers<[1], [0], [0], [1], [0, 0, 1, 1], [], []>} : vector<128x32xf32>, vector<32x64xf32>, vector<128x64xf32> -> vector<128x64xf32>
    %25 = vector.shape_cast %24 : vector<128x64xf32> to vector<2x8x8x64xf32>
    %c0_29 = arith.constant 0 : index
    %c1_30 = arith.constant 1 : index
    %c0_31 = arith.constant 0 : index
    %c0_32 = arith.constant 0 : index
    %26 = vector.load %arg9[%c0_29, %c1_30, %c0_31, %c0_32] : memref<2x8x8x64xf32, #tpu.memory_space<vmem>>, vector<2x7x8x64xf32>
    %27 = vector.extract_strided_slice %25 {offsets = [0, 0, 0, 0], sizes = [2, 7, 8, 64], strides = [1, 1, 1, 1]} : vector<2x8x8x64xf32> to vector<2x7x8x64xf32>
    %28 = arith.addf %26, %27 : vector<2x7x8x64xf32>
    %c0_33 = arith.constant 0 : index
    %c1_34 = arith.constant 1 : index
    %c0_35 = arith.constant 0 : index
    %c0_36 = arith.constant 0 : index
    %29 = vector.load %arg9[%c0_33, %c1_34, %c0_35, %c0_36] : memref<2x8x8x64xf32, #tpu.memory_space<vmem>>, vector<2x7x8x64xf32>
    tpu.vector_store %arg9[%c0_33, %c1_34, %c0_35, %c0_36], %28 {strides = array<i32>} : memref<2x8x8x64xf32, #tpu.memory_space<vmem>>, vector<2x7x8x64xf32>,
    %c2 = arith.constant 2 : index
    %c0_37 = arith.constant 0 : index
    %c0_38 = arith.constant 0 : index
    %30 = vector.load %arg4[%c2, %c0_37, %c0_38] : memref<9x32x64xf32, #tpu.memory_space<vmem>>, vector<1x32x64xf32>
    %31 = vector.shape_cast %30 : vector<1x32x64xf32> to vector<32x64xf32>
    %cst_39 = arith.constant dense<0.000000e+00> : vector<128x64xf32>
    %32 = tpu.matmul %8, %31, %cst_39 {dimension_numbers = #tpu.dot_dimension_numbers<[1], [0], [0], [1], [0, 0, 1, 1], [], []>} : vector<128x32xf32>, vector<32x64xf32>, vector<128x64xf32> -> vector<128x64xf32>
    %33 = vector.shape_cast %32 : vector<128x64xf32> to vector<2x8x8x64xf32>
    %c0_40 = arith.constant 0 : index
    %c1_41 = arith.constant 1 : index
    %c0_42 = arith.constant 0 : index
    %c0_43 = arith.constant 0 : index
    %34 = vector.load %arg9[%c0_40, %c1_41, %c0_42, %c0_43] : memref<2x8x8x64xf32, #tpu.memory_space<vmem>>, vector<2x7x7x64xf32>
    %35 = vector.extract_strided_slice %33 {offsets = [0, 0, 1, 0], sizes = [2, 7, 7, 64], strides = [1, 1, 1, 1]} : vector<2x8x8x64xf32> to vector<2x7x7x64xf32>
    %36 = arith.addf %34, %35 : vector<2x7x7x64xf32>
    %c0_44 = arith.constant 0 : index
    %c1_45 = arith.constant 1 : index
    %c0_46 = arith.constant 0 : index
    %c0_47 = arith.constant 0 : index
    %37 = vector.load %arg9[%c0_44, %c1_45, %c0_46, %c0_47] : memref<2x8x8x64xf32, #tpu.memory_space<vmem>>, vector<2x7x7x64xf32>
    tpu.vector_store %arg9[%c0_44, %c1_45, %c0_46, %c0_47], %36 {strides = array<i32>} : memref<2x8x8x64xf32, #tpu.memory_space<vmem>>, vector<2x7x7x64xf32>,
    %c3 = arith.constant 3 : index
    %c0_48 = arith.constant 0 : index
    %c0_49 = arith.constant 0 : index
    %38 = vector.load %arg4[%c3, %c0_48, %c0_49] : memref<9x32x64xf32, #tpu.memory_space<vmem>>, vector<1x32x64xf32>
    %39 = vector.shape_cast %38 : vector<1x32x64xf32> to vector<32x64xf32>
    %cst_50 = arith.constant dense<0.000000e+00> : vector<128x64xf32>
    %40 = tpu.matmul %8, %39, %cst_50 {dimension_numbers = #tpu.dot_dimension_numbers<[1], [0], [0], [1], [0, 0, 1, 1], [], []>} : vector<128x32xf32>, vector<32x64xf32>, vector<128x64xf32> -> vector<128x64xf32>
    %41 = vector.shape_cast %40 : vector<128x64xf32> to vector<2x8x8x64xf32>
    %c0_51 = arith.constant 0 : index
    %c0_52 = arith.constant 0 : index
    %c1_53 = arith.constant 1 : index
    %c0_54 = arith.constant 0 : index
    %42 = vector.load %arg9[%c0_51, %c0_52, %c1_53, %c0_54] : memref<2x8x8x64xf32, #tpu.memory_space<vmem>>, vector<2x8x7x64xf32>
    %43 = vector.extract_strided_slice %41 {offsets = [0, 0, 0, 0], sizes = [2, 8, 7, 64], strides = [1, 1, 1, 1]} : vector<2x8x8x64xf32> to vector<2x8x7x64xf32>
    %44 = arith.addf %42, %43 : vector<2x8x7x64xf32>
    %c0_55 = arith.constant 0 : index
    %c0_56 = arith.constant 0 : index
    %c1_57 = arith.constant 1 : index
    %c0_58 = arith.constant 0 : index
    %45 = vector.load %arg9[%c0_55, %c0_56, %c1_57, %c0_58] : memref<2x8x8x64xf32, #tpu.memory_space<vmem>>, vector<2x8x7x64xf32>
    tpu.vector_store %arg9[%c0_55, %c0_56, %c1_57, %c0_58], %44 {strides = array<i32>} : memref<2x8x8x64xf32, #tpu.memory_space<vmem>>, vector<2x8x7x64xf32>,
    %c5 = arith.constant 5 : index
    %c0_59 = arith.constant 0 : index
    %c0_60 = arith.constant 0 : index
    %46 = vector.load %arg4[%c5, %c0_59, %c0_60] : memref<9x32x64xf32, #tpu.memory_space<vmem>>, vector<1x32x64xf32>
    %47 = vector.shape_cast %46 : vector<1x32x64xf32> to vector<32x64xf32>
    %cst_61 = arith.constant dense<0.000000e+00> : vector<128x64xf32>
    %48 = tpu.matmul %8, %47, %cst_61 {dimension_numbers = #tpu.dot_dimension_numbers<[1], [0], [0], [1], [0, 0, 1, 1], [], []>} : vector<128x32xf32>, vector<32x64xf32>, vector<128x64xf32> -> vector<128x64xf32>
    %49 = vector.shape_cast %48 : vector<128x64xf32> to vector<2x8x8x64xf32>
    %c0_62 = arith.constant 0 : index
    %c0_63 = arith.constant 0 : index
    %c0_64 = arith.constant 0 : index
    %c0_65 = arith.constant 0 : index
    %50 = vector.load %arg9[%c0_62, %c0_63, %c0_64, %c0_65] : memref<2x8x8x64xf32, #tpu.memory_space<vmem>>, vector<2x8x7x64xf32>
    %51 = vector.extract_strided_slice %49 {offsets = [0, 0, 1, 0], sizes = [2, 8, 7, 64], strides = [1, 1, 1, 1]} : vector<2x8x8x64xf32> to vector<2x8x7x64xf32>
    %52 = arith.addf %50, %51 : vector<2x8x7x64xf32>
    %c0_66 = arith.constant 0 : index
    %c0_67 = arith.constant 0 : index
    %c0_68 = arith.constant 0 : index
    %c0_69 = arith.constant 0 : index
    %53 = vector.load %arg9[%c0_66, %c0_67, %c0_68, %c0_69] : memref<2x8x8x64xf32, #tpu.memory_space<vmem>>, vector<2x8x7x64xf32>
    tpu.vector_store %arg9[%c0_66, %c0_67, %c0_68, %c0_69], %52 {strides = array<i32>} : memref<2x8x8x64xf32, #tpu.memory_space<vmem>>, vector<2x8x7x64xf32>,
    %c6 = arith.constant 6 : index
    %c0_70 = arith.constant 0 : index
    %c0_71 = arith.constant 0 : index
    %54 = vector.load %arg4[%c6, %c0_70, %c0_71] : memref<9x32x64xf32, #tpu.memory_space<vmem>>, vector<1x32x64xf32>
    %55 = vector.shape_cast %54 : vector<1x32x64xf32> to vector<32x64xf32>
    %cst_72 = arith.constant dense<0.000000e+00> : vector<128x64xf32>
    %56 = tpu.matmul %8, %55, %cst_72 {dimension_numbers = #tpu.dot_dimension_numbers<[1], [0], [0], [1], [0, 0, 1, 1], [], []>} : vector<128x32xf32>, vector<32x64xf32>, vector<128x64xf32> -> vector<128x64xf32>
    %57 = vector.shape_cast %56 : vector<128x64xf32> to vector<2x8x8x64xf32>
    %c0_73 = arith.constant 0 : index
    %c0_74 = arith.constant 0 : index
    %c1_75 = arith.constant 1 : index
    %c0_76 = arith.constant 0 : index
    %58 = vector.load %arg9[%c0_73, %c0_74, %c1_75, %c0_76] : memref<2x8x8x64xf32, #tpu.memory_space<vmem>>, vector<2x7x7x64xf32>
    %59 = vector.extract_strided_slice %57 {offsets = [0, 1, 0, 0], sizes = [2, 7, 7, 64], strides = [1, 1, 1, 1]} : vector<2x8x8x64xf32> to vector<2x7x7x64xf32>
    %60 = arith.addf %58, %59 : vector<2x7x7x64xf32>
    %c0_77 = arith.constant 0 : index
    %c0_78 = arith.constant 0 : index
    %c1_79 = arith.constant 1 : index
    %c0_80 = arith.constant 0 : index
    %61 = vector.load %arg9[%c0_77, %c0_78, %c1_79, %c0_80] : memref<2x8x8x64xf32, #tpu.memory_space<vmem>>, vector<2x7x7x64xf32>
    tpu.vector_store %arg9[%c0_77, %c0_78, %c1_79, %c0_80], %60 {strides = array<i32>} : memref<2x8x8x64xf32, #tpu.memory_space<vmem>>, vector<2x7x7x64xf32>,
    %c7 = arith.constant 7 : index
    %c0_81 = arith.constant 0 : index
    %c0_82 = arith.constant 0 : index
    %62 = vector.load %arg4[%c7, %c0_81, %c0_82] : memref<9x32x64xf32, #tpu.memory_space<vmem>>, vector<1x32x64xf32>
    %63 = vector.shape_cast %62 : vector<1x32x64xf32> to vector<32x64xf32>
    %cst_83 = arith.constant dense<0.000000e+00> : vector<128x64xf32>
    %64 = tpu.matmul %8, %63, %cst_83 {dimension_numbers = #tpu.dot_dimension_numbers<[1], [0], [0], [1], [0, 0, 1, 1], [], []>} : vector<128x32xf32>, vector<32x64xf32>, vector<128x64xf32> -> vector<128x64xf32>
    %65 = vector.shape_cast %64 : vector<128x64xf32> to vector<2x8x8x64xf32>
    %c0_84 = arith.constant 0 : index
    %c0_85 = arith.constant 0 : index
    %c0_86 = arith.constant 0 : index
    %c0_87 = arith.constant 0 : index
    %66 = vector.load %arg9[%c0_84, %c0_85, %c0_86, %c0_87] : memref<2x8x8x64xf32, #tpu.memory_space<vmem>>, vector<2x7x8x64xf32>
    %67 = vector.extract_strided_slice %65 {offsets = [0, 1, 0, 0], sizes = [2, 7, 8, 64], strides = [1, 1, 1, 1]} : vector<2x8x8x64xf32> to vector<2x7x8x64xf32>
    %68 = arith.addf %66, %67 : vector<2x7x8x64xf32>
    %c0_88 = arith.constant 0 : index
    %c0_89 = arith.constant 0 : index
    %c0_90 = arith.constant 0 : index
    %c0_91 = arith.constant 0 : index
    %69 = vector.load %arg9[%c0_88, %c0_89, %c0_90, %c0_91] : memref<2x8x8x64xf32, #tpu.memory_space<vmem>>, vector<2x7x8x64xf32>
    tpu.vector_store %arg9[%c0_88, %c0_89, %c0_90, %c0_91], %68 {strides = array<i32>} : memref<2x8x8x64xf32, #tpu.memory_space<vmem>>, vector<2x7x8x64xf32>,
    %c8 = arith.constant 8 : index
    %c0_92 = arith.constant 0 : index
    %c0_93 = arith.constant 0 : index
    %70 = vector.load %arg4[%c8, %c0_92, %c0_93] : memref<9x32x64xf32, #tpu.memory_space<vmem>>, vector<1x32x64xf32>
    %71 = vector.shape_cast %70 : vector<1x32x64xf32> to vector<32x64xf32>
    %cst_94 = arith.constant dense<0.000000e+00> : vector<128x64xf32>
    %72 = tpu.matmul %8, %71, %cst_94 {dimension_numbers = #tpu.dot_dimension_numbers<[1], [0], [0], [1], [0, 0, 1, 1], [], []>} : vector<128x32xf32>, vector<32x64xf32>, vector<128x64xf32> -> vector<128x64xf32>
    %73 = vector.shape_cast %72 : vector<128x64xf32> to vector<2x8x8x64xf32>
    %c0_95 = arith.constant 0 : index
    %c0_96 = arith.constant 0 : index
    %c0_97 = arith.constant 0 : index
    %c0_98 = arith.constant 0 : index
    %74 = vector.load %arg9[%c0_95, %c0_96, %c0_97, %c0_98] : memref<2x8x8x64xf32, #tpu.memory_space<vmem>>, vector<2x7x7x64xf32>
    %75 = vector.extract_strided_slice %73 {offsets = [0, 1, 1, 0], sizes = [2, 7, 7, 64], strides = [1, 1, 1, 1]} : vector<2x8x8x64xf32> to vector<2x7x7x64xf32>
    %76 = arith.addf %74, %75 : vector<2x7x7x64xf32>
    %c0_99 = arith.constant 0 : index
    %c0_100 = arith.constant 0 : index
    %c0_101 = arith.constant 0 : index
    %c0_102 = arith.constant 0 : index
    %77 = vector.load %arg9[%c0_99, %c0_100, %c0_101, %c0_102] : memref<2x8x8x64xf32, #tpu.memory_space<vmem>>, vector<2x7x7x64xf32>
    tpu.vector_store %arg9[%c0_99, %c0_100, %c0_101, %c0_102], %76 {strides = array<i32>} : memref<2x8x8x64xf32, #tpu.memory_space<vmem>>, vector<2x7x7x64xf32>,
    %c0_103 = arith.constant 0 : index
    %c0_104 = arith.constant 0 : index
    %c0_105 = arith.constant 0 : index
    %c0_106 = arith.constant 0 : index
    %78 = vector.load %arg9[%c0_103, %c0_104, %c0_105, %c0_106] : memref<2x8x8x64xf32, #tpu.memory_space<vmem>>, vector<2x8x8x64xf32>
    %79 = vector.shape_cast %78 : vector<2x8x8x64xf32> to vector<128x64xf32>
    %c0_107 = arith.constant 0 : index
    %c0_108 = arith.constant 0 : index
    %80 = vector.load %arg5[%c0_107, %c0_108] : memref<1x64xf32, #tpu.memory_space<vmem>>, vector<1x64xf32>
    %81 = vector.broadcast %80 : vector<1x64xf32> to vector<128x64xf32>
    %82 = arith.addf %79, %81 : vector<128x64xf32>
    %cst_109 = arith.constant 0.000000e+00 : f32
    %83 = vector.broadcast %cst_109 : f32 to vector<128x64xf32>
    %84 = arith.maximumf %82, %83 : vector<128x64xf32>
    %c0_110 = arith.constant 0 : index
    %c0_111 = arith.constant 0 : index
    %85 = vector.load %arg6[%c0_110, %c0_111] : memref<64x256xf32, #tpu.memory_space<vmem>>, vector<64x256xf32>
    %cst_112 = arith.constant dense<0.000000e+00> : vector<128x256xf32>
    %86 = tpu.matmul %84, %85, %cst_112 {dimension_numbers = #tpu.dot_dimension_numbers<[1], [0], [0], [1], [0, 0, 1, 1], [], []>} : vector<128x64xf32>, vector<64x256xf32>, vector<128x256xf32> -> vector<128x256xf32>
    %c0_113 = arith.constant 0 : index
    %c0_114 = arith.constant 0 : index
    %c0_115 = arith.constant 0 : index
    %87 = vector.load %arg1[%c0_113, %c0_114, %c0_115] : memref<2x64x256xf32, #tpu.memory_space<vmem>>, vector<2x64x256xf32>
    %88 = vector.shape_cast %87 : vector<2x64x256xf32> to vector<128x256xf32>
    %c0_116 = arith.constant 0 : index
    %c0_117 = arith.constant 0 : index
    %89 = vector.load %arg7[%c0_116, %c0_117] : memref<1x256xf32, #tpu.memory_space<vmem>>, vector<1x256xf32>
    %90 = vector.broadcast %89 : vector<1x256xf32> to vector<128x256xf32>
    %91 = arith.addf %86, %90 : vector<128x256xf32>
    %92 = arith.addf %91, %88 : vector<128x256xf32>
    %cst_118 = arith.constant 0.000000e+00 : f32
    %93 = vector.broadcast %cst_118 : f32 to vector<128x256xf32>
    %94 = arith.maximumf %92, %93 : vector<128x256xf32>
    %95 = vector.shape_cast %94 : vector<128x256xf32> to vector<2x64x256xf32>
    %c0_119 = arith.constant 0 : index
    %c0_120 = arith.constant 0 : index
    %c0_121 = arith.constant 0 : index
    %96 = vector.load %arg8[%c0_119, %c0_120, %c0_121] : memref<2x64x256xf32, #tpu.memory_space<vmem>>, vector<2x64x256xf32>
    tpu.vector_store %arg8[%c0_119, %c0_120, %c0_121], %95 {strides = array<i32>} : memref<2x64x256xf32, #tpu.memory_space<vmem>>, vector<2x64x256xf32>,
    return
  }
  func.func @transform_0(%arg0: i32) -> (i32, i32, i32) {
    %c0_i32 = arith.constant 0 : i32
    %c0_i32_0 = arith.constant 0 : i32
    %c0_i32_1 = arith.constant 0 : i32
    return %arg0, %c0_i32, %c0_i32_0 : i32, i32, i32
  }
  func.func @transform_1(%arg0: i32) -> (i32, i32) {
    %c0_i32 = arith.constant 0 : i32
    %c0_i32_0 = arith.constant 0 : i32
    %c0_i32_1 = arith.constant 0 : i32
    return %c0_i32, %c0_i32_0 : i32, i32
  }
  func.func @transform_2(%arg0: i32) -> (i32, i32) {
    %c0_i32 = arith.constant 0 : i32
    %c0_i32_0 = arith.constant 0 : i32
    %c0_i32_1 = arith.constant 0 : i32
    return %c0_i32, %c0_i32_0 : i32, i32
  }
  func.func @transform_3(%arg0: i32) -> (i32, i32, i32) {
    %c0_i32 = arith.constant 0 : i32
    %c0_i32_0 = arith.constant 0 : i32
    %c0_i32_1 = arith.constant 0 : i32
    %c0_i32_2 = arith.constant 0 : i32
    return %c0_i32, %c0_i32_0, %c0_i32_1 : i32, i32, i32
  }
  func.func @transform_4(%arg0: i32) -> (i32, i32) {
    %c0_i32 = arith.constant 0 : i32
    %c0_i32_0 = arith.constant 0 : i32
    %c0_i32_1 = arith.constant 0 : i32
    return %c0_i32, %c0_i32_0 : i32, i32
  }
  func.func @transform_5(%arg0: i32) -> (i32, i32) {
    %c0_i32 = arith.constant 0 : i32
    %c0_i32_0 = arith.constant 0 : i32
    %c0_i32_1 = arith.constant 0 : i32
    return %c0_i32, %c0_i32_0 : i32, i32
  }
  func.func @transform_6(%arg0: i32) -> (i32, i32) {
    %c0_i32 = arith.constant 0 : i32
    %c0_i32_0 = arith.constant 0 : i32
    %c0_i32_1 = arith.constant 0 : i32
    return %c0_i32, %c0_i32_0 : i32, i32
  }
  func.func @transform_7(%arg0: i32) -> (i32, i32, i32) {
    %c0_i32 = arith.constant 0 : i32
    %c0_i32_0 = arith.constant 0 : i32
    %c0_i32_1 = arith.constant 0 : i32
    return %arg0, %c0_i32, %c0_i32_0 : i32, i32, i32
  }
}

</mosaic_0001>

<llo_original>
// kernel: tpu_custom_call.1
$region0: #{tpu_custom_call.1}
  #allocation0 [shape = 'u32[]', space=smem, size = 0x4, offset = 0x4, fixed_abs, tag = 'smem constant byte address 0x4 - core index']
  #allocation1 [shape = 'u32[144,128]{1,0:T(1,128)}', space=vmem, size = 0x12000, scoped, tag = 'internal scratch']
  #allocation2 [shape = 'f32[2,8,8,64]{3,2,1,0:T(8,128)}', space=vmem, size = 0x10000, scoped, tag = 'scratch operand']
  %s0 = inlined_call_operand.hbm [shape: f32[8,64,256], index: 0, kind: input, shape index: {}]
  %s1 = inlined_call_operand.hbm [shape: f32[256,32], index: 1, kind: input, shape index: {}]
  %s2 = inlined_call_operand.hbm [shape: f32[1,32], index: 2, kind: input, shape index: {}]
  %s3 = inlined_call_operand.hbm [shape: f32[9,32,64], index: 3, kind: input, shape index: {}]
  %s4 = inlined_call_operand.hbm [shape: f32[1,64], index: 4, kind: input, shape index: {}]
  %s5 = inlined_call_operand.hbm [shape: f32[64,256], index: 5, kind: input, shape index: {}]
  %s6 = inlined_call_operand.hbm [shape: f32[1,256], index: 6, kind: input, shape index: {}]
  %s7 = inlined_call_operand.hbm [shape: f32[8,64,256], index: 7, kind: output, shape index: {}]
  %s8 = sld [smem:[#allocation0]]
  $region89: #{tpu_custom_call.1} parent=0
    _
  %s10 = ssub.s32 1, %s8
  %s11 = scalar_select 0, %s10, %s8
  $region1: #{tpu_custom_call.1} parent=0
    #allocation3 [shape = 'u8[262144]{0}', space=vmem, size = 0x40000, scoped, tag = 'input window, operand 0']
    #allocation4 [shape = 's32[2]{0}', space=sflag, size = 0x8, scoped, tag = 'scoped memory for tpu_custom_call.1']
    #allocation5 [shape = 's32[2]{0}', space=sflag, size = 0x8, scoped, tag = 'scoped memory for tpu_custom_call.1']
    #allocation6 [shape = 'u8[131072]{0}', space=vmem, size = 0x20000, scoped, tag = 'input window, operand 1, single buffered']
    #allocation7 [shape = 's32[1]{0}', space=sflag, size = 0x4, scoped, tag = 'scoped memory for tpu_custom_call.1']
    #allocation8 [shape = 'u8[512]{0}', space=vmem, size = 0x400, scoped, tag = 'input window, operand 2, single buffered']
    #allocation9 [shape = 'u8[147456]{0}', space=vmem, size = 0x24000, scoped, tag = 'input window, operand 3, single buffered']
    #allocation10 [shape = 's32[1]{0}', space=sflag, size = 0x4, scoped, tag = 'scoped memory for tpu_custom_call.1']
    #allocation11 [shape = 'u8[512]{0}', space=vmem, size = 0x400, scoped, tag = 'input window, operand 4, single buffered']
    #allocation12 [shape = 'u8[65536]{0}', space=vmem, size = 0x10000, scoped, tag = 'input window, operand 5, single buffered']
    #allocation13 [shape = 's32[1]{0}', space=sflag, size = 0x4, scoped, tag = 'scoped memory for tpu_custom_call.1']
    #allocation14 [shape = 'u8[1024]{0}', space=vmem, size = 0x400, scoped, tag = 'input window, operand 6, single buffered']
    #allocation15 [shape = 'u8[262144]{0}', space=vmem, size = 0x40000, scoped, tag = 'output window, operand 0']
    %12 = vsyncpa [#allocation4], 0
    %s13 = scalar_lea.sflag [#allocation4], 1
    %14 = vsyncpa %s13, 0
    %15 = vsyncpa [#allocation7], 0
    %16 = vsyncpa [#allocation10], 0
    %17 = vsyncpa [#allocation13], 0
    %18 = vsyncpa [#allocation5], 0
    %s19 = scalar_lea.sflag [#allocation5], 1
    %20 = vsyncpa %s19, 0
    loop: start=0, step=1, limit=6
    $region2: #{tpu_custom_call.1} parent=1 // loop_pre_header
      _
    $region3: #{tpu_custom_call.1} parent=1 // loop_header
      %s22 = sphi 0, %s26
      %p23 = scmp.ge.s32.totalorder %s22, 6
      %s32 = sphi 0, %s34
      %s35 = sphi 0, %s32
      %s36 = sphi 0, %s35
      %s52 = sphi 0, %s36
      %s56 = sphi 0, %s56
      %s58 = sphi 0, %s56
      %s59 = sphi 0, %s58
      %s73 = sphi 0, %s59
      %s77 = sphi 0, %s77
      %s79 = sphi 0, %s77
      %s80 = sphi 0, %s79
      %s94 = sphi 0, %s80
      %s98 = sphi 0, %s98
      %s100 = sphi 0, %s98
      %s101 = sphi 0, %s100
      %s115 = sphi 0, %s101
      %s119 = sphi 0, %s119
      %s121 = sphi 0, %s119
      %s122 = sphi 0, %s121
      %s136 = sphi 0, %s122
      %s140 = sphi 0, %s140
      %s142 = sphi 0, %s140
      %s143 = sphi 0, %s142
      %s157 = sphi 0, %s143
      %s161 = sphi 0, %s161
      %s163 = sphi 0, %s161
      %s164 = sphi 0, %s163
      %s178 = sphi 0, %s164
      %s184 = sphi 0, %s186
      %s187 = sphi 0, %s184
      %s188 = sphi 0, %s187
      %s204 = sphi 0, %s188
    $region4: #{tpu_custom_call.1} parent=1 // loop_header_branch
      %25 = sbr.rel (%p23) target = $region8
    $region5: #{tpu_custom_call.1} parent=1 // loop_body
      %s27 = ssub.s32 %s22, 1
      %s28 = ssub.s32 %s22, 2
      %s29 = sadd.s32 %s22, 1
      %s30 = ssub.s32 %s22, %s29
      %p31 = scmp.eq.s32.totalorder %s30, 0
      %s33 = sadd.s32 %s32, 1
      %s34 = scalar_select %p31, %s32, %s33
      %p37 = pneg %p31
      %p38 = scmp.eq.s32.totalorder %s22, 3
      %p39 = por %p37, %p38
      %p40 = scmp.ne.s32.totalorder %s32, %s35
      %p41 = scmp.eq.s32.totalorder %s22, 0
      %p42 = por %p40, %p41
      %p43 = scmp.ne.s32.totalorder %s32, %s35
      %p44 = scmp.eq.s32.totalorder %s27, 3
      %p45 = por %p43, %p44
      %p46 = scmp.ne.s32.totalorder %s35, %s36
      %p47 = scmp.eq.s32.totalorder %s27, 0
      %p48 = por %p46, %p47
      %p49 = scmp.ne.s32.totalorder %s35, %s36
      %p50 = scmp.eq.s32.totalorder %s28, 3
      %p51 = por %p49, %p50
      %p53 = scmp.ne.s32.totalorder %s36, %s52
      %p54 = scmp.eq.s32.totalorder %s28, 0
      %p55 = por %p53, %p54
      %s57 = sadd.s32 %s56, 1
      %p60 = scmp.eq.s32.totalorder %s22, 3
      %p61 = scmp.ne.s32.totalorder %s56, %s58
      %p62 = scmp.eq.s32.totalorder %s22, 0
      %p63 = por %p61, %p62
      %p64 = scmp.ne.s32.totalorder %s56, %s58
      %p65 = scmp.eq.s32.totalorder %s27, 3
      %p66 = por %p64, %p65
      %p67 = scmp.ne.s32.totalorder %s58, %s59
      %p68 = scmp.eq.s32.totalorder %s27, 0
      %p69 = por %p67, %p68
      %p70 = scmp.ne.s32.totalorder %s58, %s59
      %p71 = scmp.eq.s32.totalorder %s28, 3
      %p72 = por %p70, %p71
      %p74 = scmp.ne.s32.totalorder %s59, %s73
      %p75 = scmp.eq.s32.totalorder %s28, 0
      %p76 = por %p74, %p75
      %s78 = sadd.s32 %s77, 1
      %p81 = scmp.eq.s32.totalorder %s22, 3
      %p82 = scmp.ne.s32.totalorder %s77, %s79
      %p83 = scmp.eq.s32.totalorder %s22, 0
      %p84 = por %p82, %p83
      %p85 = scmp.ne.s32.totalorder %s77, %s79
      %p86 = scmp.eq.s32.totalorder %s27, 3
      %p87 = por %p85, %p86
      %p88 = scmp.ne.s32.totalorder %s79, %s80
      %p89 = scmp.eq.s32.totalorder %s27, 0
      %p90 = por %p88, %p89
      %p91 = scmp.ne.s32.totalorder %s79, %s80
      %p92 = scmp.eq.s32.totalorder %s28, 3
      %p93 = por %p91, %p92
      %p95 = scmp.ne.s32.totalorder %s80, %s94
      %p96 = scmp.eq.s32.totalorder %s28, 0
      %p97 = por %p95, %p96
      %s99 = sadd.s32 %s98, 1
      %p102 = scmp.eq.s32.totalorder %s22, 3
      %p103 = scmp.ne.s32.totalorder %s98, %s100
      %p104 = scmp.eq.s32.totalorder %s22, 0
      %p105 = por %p103, %p104
      %p106 = scmp.ne.s32.totalorder %s98, %s100
      %p107 = scmp.eq.s32.totalorder %s27, 3
      %p108 = por %p106, %p107
      %p109 = scmp.ne.s32.totalorder %s100, %s101
      %p110 = scmp.eq.s32.totalorder %s27, 0
      %p111 = por %p109, %p110
      %p112 = scmp.ne.s32.totalorder %s100, %s101
      %p113 = scmp.eq.s32.totalorder %s28, 3
      %p114 = por %p112, %p113
      %p116 = scmp.ne.s32.totalorder %s101, %s115
      %p117 = scmp.eq.s32.totalorder %s28, 0
      %p118 = por %p116, %p117
      %s120 = sadd.s32 %s119, 1
      %p123 = scmp.eq.s32.totalorder %s22, 3
      %p124 = scmp.ne.s32.totalorder %s119, %s121
      %p125 = scmp.eq.s32.totalorder %s22, 0
      %p126 = por %p124, %p125
      %p127 = scmp.ne.s32.totalorder %s119, %s121
      %p128 = scmp.eq.s32.totalorder %s27, 3
      %p129 = por %p127, %p128
      %p130 = scmp.ne.s32.totalorder %s121, %s122
      %p131 = scmp.eq.s32.totalorder %s27, 0
      %p132 = por %p130, %p131
      %p133 = scmp.ne.s32.totalorder %s121, %s122
      %p134 = scmp.eq.s32.totalorder %s28, 3
      %p135 = por %p133, %p134
      %p137 = scmp.ne.s32.totalorder %s122, %s136
      %p138 = scmp.eq.s32.totalorder %s28, 0
      %p139 = por %p137, %p138
      %s141 = sadd.s32 %s140, 1
      %p144 = scmp.eq.s32.totalorder %s22, 3
      %p145 = scmp.ne.s32.totalorder %s140, %s142
      %p146 = scmp.eq.s32.totalorder %s22, 0
      %p147 = por %p145, %p146
      %p148 = scmp.ne.s32.totalorder %s140, %s142
      %p149 = scmp.eq.s32.totalorder %s27, 3
      %p150 = por %p148, %p149
      %p151 = scmp.ne.s32.totalorder %s142, %s143
      %p152 = scmp.eq.s32.totalorder %s27, 0
      %p153 = por %p151, %p152
      %p154 = scmp.ne.s32.totalorder %s142, %s143
      %p155 = scmp.eq.s32.totalorder %s28, 3
      %p156 = por %p154, %p155
      %p158 = scmp.ne.s32.totalorder %s143, %s157
      %p159 = scmp.eq.s32.totalorder %s28, 0
      %p160 = por %p158, %p159
      %s162 = sadd.s32 %s161, 1
      %p165 = scmp.eq.s32.totalorder %s22, 3
      %p166 = scmp.ne.s32.totalorder %s161, %s163
      %p167 = scmp.eq.s32.totalorder %s22, 0
      %p168 = por %p166, %p167
      %p169 = scmp.ne.s32.totalorder %s161, %s163
      %p170 = scmp.eq.s32.totalorder %s27, 3
      %p171 = por %p169, %p170
      %p172 = scmp.ne.s32.totalorder %s163, %s164
      %p173 = scmp.eq.s32.totalorder %s27, 0
      %p174 = por %p172, %p173
      %p175 = scmp.ne.s32.totalorder %s163, %s164
      %p176 = scmp.eq.s32.totalorder %s28, 3
      %p177 = por %p175, %p176
      %p179 = scmp.ne.s32.totalorder %s164, %s178
      %p180 = scmp.eq.s32.totalorder %s28, 0
      %p181 = por %p179, %p180
      %s182 = ssub.s32 %s22, %s29
      %p183 = scmp.eq.s32.totalorder %s182, 0
      %s185 = sadd.s32 %s184, 1
      %s186 = scalar_select %p183, %s184, %s185
      %p189 = pneg %p183
      %p190 = scmp.eq.s32.totalorder %s22, 3
      %p191 = por %p189, %p190
      %p192 = scmp.ne.s32.totalorder %s184, %s187
      %p193 = scmp.eq.s32.totalorder %s22, 0
      %p194 = por %p192, %p193
      %p195 = scmp.ne.s32.totalorder %s184, %s187
      %p196 = scmp.eq.s32.totalorder %s27, 3
      %p197 = por %p195, %p196
      %p198 = scmp.ne.s32.totalorder %s187, %s188
      %p199 = scmp.eq.s32.totalorder %s27, 0
      %p200 = por %p198, %p199
      %p201 = scmp.ne.s32.totalorder %s187, %s188
      %p202 = scmp.eq.s32.totalorder %s28, 3
      %p203 = por %p201, %p202
      %p205 = scmp.ne.s32.totalorder %s188, %s204
      %p206 = scmp.eq.s32.totalorder %s28, 0
      %p207 = por %p205, %p206
      %p208 = scmp.le.s32.totalorder 1, %s22
      %p209 = scmp.lt.s32.totalorder %s22, 5
      %p210 = pnand %p208, %p209
      %p211 = pneg %p210
      // Predicated region
      $region9: #{tpu_custom_call.1} parent=5 // pred_check
        _
      $region10: #{tpu_custom_call.1} parent=5 // pred_check_branch
        %213 = sbr.rel (%p210) target = $region12
      $region11: #{tpu_custom_call.1} parent=5 // pred_region
        %s214 = ssub.s32 %s22, 1
        // Predicated region
        $region13: #{tpu_custom_call.1} parent=11 // pred_check
          %p215 = pneg %p69
        $region14: #{tpu_custom_call.1} parent=11 // pred_check_branch
          %217 = sbr.rel (%p215) target = $region16
        $region15: #{tpu_custom_call.1} parent=11 // pred_region
          %s219 = ssub.s32 4096, 4096
          %220 = vsyncadd [#allocation7], %s219
          %s221 = sshll.u32 [#allocation6], 4
          %s222 = int_to_ptr.vmem [resolvable:$true] %s221
          %227 = dma.hbm_to_vmem [thread:$0]  %s1, 4096, %s222, [#allocation7], 128, 128, 8
        $region16: #{tpu_custom_call.1} parent=11 // pred_fallthru
          _
        // Predicated region
        $region17: #{tpu_custom_call.1} parent=11 // pred_check
          %p228 = pneg %p90
        $region18: #{tpu_custom_call.1} parent=11 // pred_check_branch
          %230 = sbr.rel (%p228) target = $region20
        $region19: #{tpu_custom_call.1} parent=11 // pred_region
          %s232 = ssub.s32 16, 16
          %233 = vsyncadd [#allocation7], %s232
          %s235 = sshll.u32 [#allocation8], 4
          %s236 = int_to_ptr.vmem [resolvable:$true] %s235
          %238 = dma.hbm_to_vmem [thread:$0]  %s2, 16, %s236, [#allocation7]
        $region20: #{tpu_custom_call.1} parent=11 // pred_fallthru
          _
        // Predicated region
        $region21: #{tpu_custom_call.1} parent=11 // pred_check
          %p239 = pneg %p111
        $region22: #{tpu_custom_call.1} parent=11 // pred_check_branch
          %241 = sbr.rel (%p239) target = $region24
        $region23: #{tpu_custom_call.1} parent=11 // pred_region
          %s243 = ssub.s32 4608, 4608
          %244 = vsyncadd [#allocation10], %s243
          %s245 = sshll.u32 [#allocation9], 4
          %s246 = int_to_ptr.vmem [resolvable:$true] %s245
          %251 = dma.hbm_to_vmem [thread:$0]  %s3, 4608, %s246, [#allocation10], 128, 128, 8
        $region24: #{tpu_custom_call.1} parent=11 // pred_fallthru
          _
        // Predicated region
        $region25: #{tpu_custom_call.1} parent=11 // pred_check
          %p252 = pneg %p132
        $region26: #{tpu_custom_call.1} parent=11 // pred_check_branch
          %254 = sbr.rel (%p252) target = $region28
        $region27: #{tpu_custom_call.1} parent=11 // pred_region
          %s256 = ssub.s32 16, 16
          %257 = vsyncadd [#allocation10], %s256
          %s259 = sshll.u32 [#allocation11], 4
          %s260 = int_to_ptr.vmem [resolvable:$true] %s259
          %262 = dma.hbm_to_vmem [thread:$0]  %s4, 16, %s260, [#allocation10]
        $region28: #{tpu_custom_call.1} parent=11 // pred_fallthru
          _
        // Predicated region
        $region29: #{tpu_custom_call.1} parent=11 // pred_check
          %p263 = pneg %p153
        $region30: #{tpu_custom_call.1} parent=11 // pred_check_branch
          %265 = sbr.rel (%p263) target = $region32
        $region31: #{tpu_custom_call.1} parent=11 // pred_region
          %s267 = ssub.s32 2048, 2048
          %268 = vsyncadd [#allocation13], %s267
          %s269 = sshll.u32 [#allocation12], 4
          %s270 = int_to_ptr.vmem [resolvable:$true] %s269
          %275 = dma.hbm_to_vmem [thread:$0]  %s5, 2048, %s270, [#allocation13], 256, 256, 16
        $region32: #{tpu_custom_call.1} parent=11 // pred_fallthru
          _
        // Predicated region
        $region33: #{tpu_custom_call.1} parent=11 // pred_check
          %p276 = pneg %p174
        $region34: #{tpu_custom_call.1} parent=11 // pred_check_branch
          %278 = sbr.rel (%p276) target = $region36
        $region35: #{tpu_custom_call.1} parent=11 // pred_region
          %s280 = ssub.s32 32, 32
          %281 = vsyncadd [#allocation13], %s280
          %s283 = sshll.u32 [#allocation14], 4
          %s284 = int_to_ptr.vmem [resolvable:$true] %s283
          %286 = dma.hbm_to_vmem [thread:$0]  %s6, 32, %s284, [#allocation13]
        $region36: #{tpu_custom_call.1} parent=11 // pred_fallthru
          _
      $region12: #{tpu_custom_call.1} parent=5 // pred_fallthru
        _
      %p287 = scmp.lt.s32.totalorder %s22, 4
      // Predicated region
      $region37: #{tpu_custom_call.1} parent=5 // pred_check
        %p288 = pneg %p287
      $region38: #{tpu_custom_call.1} parent=5 // pred_check_branch
        %290 = sbr.rel (%p288) target = $region40
      $region39: #{tpu_custom_call.1} parent=5 // pred_region
        // Predicated region
        $region41: #{tpu_custom_call.1} parent=39 // pred_check
          %p291 = pneg %p42
        $region42: #{tpu_custom_call.1} parent=39 // pred_check_branch
          %293 = sbr.rel (%p291) target = $region44
        $region43: #{tpu_custom_call.1} parent=39 // pred_region
          %s294 = sand.u32 %s32, 1
          %s295 = scalar_lea.sflag [#allocation4], %s294
          %s296 = sand.u32 %s32, 1
          %s297 = smul.addr %s296, 256
          %s298 = scalar_lea.vmem [#allocation3], %s297
          %s299 = smul.u32 2, %s22
          %s301 = ssub.s32 4096, 4096
          %302 = vsyncadd %s295, %s301
          %s303 = smul.addr %s299, 16
          %s304 = smul.addr %s303, 128
          %s305 = scalar_lea.hbm %s0, %s304
          %s306 = sshll.u32 %s298, 4
          %s307 = int_to_ptr.vmem [resolvable:$true] %s306
          %312 = dma.hbm_to_vmem [thread:$0]  %s305, 4096, %s307, %s295, 256, 256, 16
        $region44: #{tpu_custom_call.1} parent=39 // pred_fallthru
          _
      $region40: #{tpu_custom_call.1} parent=5 // pred_fallthru
        _
      %p313 = scmp.le.s32.totalorder 1, %s22
      %p314 = scmp.lt.s32.totalorder %s22, 5
      %p315 = pnand %p313, %p314
      %p316 = pneg %p315
      // Predicated region
      $region45: #{tpu_custom_call.1} parent=5 // pred_check
        _
      $region46: #{tpu_custom_call.1} parent=5 // pred_check_branch
        %318 = sbr.rel (%p315) target = $region48
      $region47: #{tpu_custom_call.1} parent=5 // pred_region
        %s319 = ssub.s32 %s22, 1
        %s320 = sand.u32 %s35, 1
        %s321 = scalar_lea.sflag [#allocation4], %s320
        %s322 = sand.u32 %s35, 1
        %s323 = smul.addr %s322, 256
        %s324 = scalar_lea.vmem [#allocation3], %s323
        // Predicated region
        $region49: #{tpu_custom_call.1} parent=47 // pred_check
          %p325 = pneg %p48
        $region50: #{tpu_custom_call.1} parent=47 // pred_check_branch
          %327 = sbr.rel (%p325) target = $region52
        $region51: #{tpu_custom_call.1} parent=47 // pred_region
          %328 = dma.done %s321, 4096
        $region52: #{tpu_custom_call.1} parent=47 // pred_fallthru
          _
        // Predicated region
        $region53: #{tpu_custom_call.1} parent=47 // pred_check
          %p329 = pneg %p69
        $region54: #{tpu_custom_call.1} parent=47 // pred_check_branch
          %331 = sbr.rel (%p329) target = $region56
        $region55: #{tpu_custom_call.1} parent=47 // pred_region
          %332 = dma.done [#allocation7], 4096
        $region56: #{tpu_custom_call.1} parent=47 // pred_fallthru
          _
        // Predicated region
        $region57: #{tpu_custom_call.1} parent=47 // pred_check
          %p333 = pneg %p90
        $region58: #{tpu_custom_call.1} parent=47 // pred_check_branch
          %335 = sbr.rel (%p333) target = $region60
        $region59: #{tpu_custom_call.1} parent=47 // pred_region
          %336 = dma.done [#allocation7], 16
        $region60: #{tpu_custom_call.1} parent=47 // pred_fallthru
          _
        // Predicated region
        $region61: #{tpu_custom_call.1} parent=47 // pred_check
          %p337 = pneg %p111
        $region62: #{tpu_custom_call.1} parent=47 // pred_check_branch
          %339 = sbr.rel (%p337) target = $region64
        $region63: #{tpu_custom_call.1} parent=47 // pred_region
          %340 = dma.done [#allocation10], 4608
        $region64: #{tpu_custom_call.1} parent=47 // pred_fallthru
          _
        // Predicated region
        $region65: #{tpu_custom_call.1} parent=47 // pred_check
          %p341 = pneg %p132
        $region66: #{tpu_custom_call.1} parent=47 // pred_check_branch
          %343 = sbr.rel (%p341) target = $region68
        $region67: #{tpu_custom_call.1} parent=47 // pred_region
          %344 = dma.done [#allocation10], 16
        $region68: #{tpu_custom_call.1} parent=47 // pred_fallthru
          _
        // Predicated region
        $region69: #{tpu_custom_call.1} parent=47 // pred_check
          %p345 = pneg %p153
        $region70: #{tpu_custom_call.1} parent=47 // pred_check_branch
          %347 = sbr.rel (%p345) target = $region72
        $region71: #{tpu_custom_call.1} parent=47 // pred_region
          %348 = dma.done [#allocation13], 2048
        $region72: #{tpu_custom_call.1} parent=47 // pred_fallthru
          _
        // Predicated region
        $region73: #{tpu_custom_call.1} parent=47 // pred_check
          %p349 = pneg %p174
        $region74: #{tpu_custom_call.1} parent=47 // pred_check_branch
          %351 = sbr.rel (%p349) target = $region76
        $region75: #{tpu_custom_call.1} parent=47 // pred_region
          %352 = dma.done [#allocation13], 32
        $region76: #{tpu_custom_call.1} parent=47 // pred_fallthru
          _
        %s353 = sand.u32 %s35, 1
        %s354 = scalar_lea.sflag [#allocation4], %s353
        %s355 = sand.u32 %s35, 1
        %s356 = smul.addr %s355, 256
        %s357 = scalar_lea.vmem [#allocation3], %s356
        %p358 = pneg %p48
        %p359 = pneg %p45
        %p360 = pneg %p69
        %p361 = pneg %p66
        %p362 = pneg %p90
        %p363 = pneg %p87
        %p364 = pneg %p111
        %p365 = pneg %p108
        %p366 = pneg %p132
        %p367 = pneg %p129
        %p368 = pneg %p153
        %p369 = pneg %p150
        %p370 = pneg %p174
        %p371 = pneg %p171
        %p372 = pneg %p200
        %p373 = pneg %p197
        %s374 = sand.u32 %s187, 1
        %s375 = scalar_lea.sflag [#allocation5], %s374
        %s376 = sand.u32 %s187, 1
        %s377 = smul.addr %s376, 256
        %s378 = scalar_lea.vmem [#allocation15], %s377
        %s379 = smul.u32 2, %s27
        %s380 = smul.u32 2, %s27
        %v381 = vld [vmem:[%s324] sm:$0xff]
        %v382 = vld [vmem:[%s324 + $0x8] sm:$0xff]
        %v383 = vld [vmem:[%s324 + $0x10] sm:$0xff]
        %v384 = vld [vmem:[%s324 + $0x18] sm:$0xff]
        %v385 = vld [vmem:[%s324 + $0x20] sm:$0xff]
        %v386 = vld [vmem:[%s324 + $0x28] sm:$0xff]
        %v387 = vld [vmem:[%s324 + $0x30] sm:$0xff]
        %v388 = vld [vmem:[%s324 + $0x38] sm:$0xff]
        %v389 = vld [vmem:[%s324 + $0x40] sm:$0xff]
        %v390 = vld [vmem:[%s324 + $0x48] sm:$0xff]
        %v391 = vld [vmem:[%s324 + $0x50] sm:$0xff]
        %v392 = vld [vmem:[%s324 + $0x58] sm:$0xff]
        %v393 = vld [vmem:[%s324 + $0x60] sm:$0xff]
        %v394 = vld [vmem:[%s324 + $0x68] sm:$0xff]
        %v395 = vld [vmem:[%s324 + $0x70] sm:$0xff]
        %v396 = vld [vmem:[%s324 + $0x78] sm:$0xff]
        %v397 = vld [vmem:[%s324 + $0x80] sm:$0xff]
        %v398 = vld [vmem:[%s324 + $0x88] sm:$0xff]
        %v399 = vld [vmem:[%s324 + $0x90] sm:$0xff]
        %v400 = vld [vmem:[%s324 + $0x98] sm:$0xff]
        %v401 = vld [vmem:[%s324 + $0xa0] sm:$0xff]
        %v402 = vld [vmem:[%s324 + $0xa8] sm:$0xff]
        %v403 = vld [vmem:[%s324 + $0xb0] sm:$0xff]
        %v404 = vld [vmem:[%s324 + $0xb8] sm:$0xff]
        %v405 = vld [vmem:[%s324 + $0xc0] sm:$0xff]
        %v406 = vld [vmem:[%s324 + $0xc8] sm:$0xff]
        %v407 = vld [vmem:[%s324 + $0xd0] sm:$0xff]
        %v408 = vld [vmem:[%s324 + $0xd8] sm:$0xff]
        %v409 = vld [vmem:[%s324 + $0xe0] sm:$0xff]
        %v410 = vld [vmem:[%s324 + $0xe8] sm:$0xff]
        %v411 = vld [vmem:[%s324 + $0xf0] sm:$0xff]
        %v412 = vld [vmem:[%s324 + $0xf8] sm:$0xff]
        %v413 = vld [vmem:[#allocation6] sm:$0xff]
        %v414 = vld [vmem:[#allocation6 + $0x8] sm:$0xff]
        %v415 = vld [vmem:[#allocation6 + $0x10] sm:$0xff]
        %v416 = vld [vmem:[#allocation6 + $0x18] sm:$0xff]
        %v417 = vld [vmem:[#allocation6 + $0x20] sm:$0xff]
        %v418 = vld [vmem:[#allocation6 + $0x28] sm:$0xff]
        %v419 = vld [vmem:[#allocation6 + $0x30] sm:$0xff]
        %v420 = vld [vmem:[#allocation6 + $0x38] sm:$0xff]
        %v421 = vld [vmem:[#allocation6 + $0x40] sm:$0xff]
        %v422 = vld [vmem:[#allocation6 + $0x48] sm:$0xff]
        %v423 = vld [vmem:[#allocation6 + $0x50] sm:$0xff]
        %v424 = vld [vmem:[#allocation6 + $0x58] sm:$0xff]
        %v425 = vld [vmem:[#allocation6 + $0x60] sm:$0xff]
        %v426 = vld [vmem:[#allocation6 + $0x68] sm:$0xff]
        %v427 = vld [vmem:[#allocation6 + $0x70] sm:$0xff]
        %v428 = vld [vmem:[#allocation6 + $0x78] sm:$0xff]
        %v429 = vld [vmem:[#allocation6 + $0x80] sm:$0xff]
        %v430 = vld [vmem:[#allocation6 + $0x88] sm:$0xff]
        %v431 = vld [vmem:[#allocation6 + $0x90] sm:$0xff]
        %v432 = vld [vmem:[#allocation6 + $0x98] sm:$0xff]
        %v433 = vld [vmem:[#allocation6 + $0xa0] sm:$0xff]
        %v434 = vld [vmem:[#allocation6 + $0xa8] sm:$0xff]
        %v435 = vld [vmem:[#allocation6 + $0xb0] sm:$0xff]
        %v436 = vld [vmem:[#allocation6 + $0xb8] sm:$0xff]
        %v437 = vld [vmem:[#allocation6 + $0xc0] sm:$0xff]
        %v438 = vld [vmem:[#allocation6 + $0xc8] sm:$0xff]
        %v439 = vld [vmem:[#allocation6 + $0xd0] sm:$0xff]
        %v440 = vld [vmem:[#allocation6 + $0xd8] sm:$0xff]
        %v441 = vld [vmem:[#allocation6 + $0xe0] sm:$0xff]
        %v442 = vld [vmem:[#allocation6 + $0xe8] sm:$0xff]
        %v443 = vld [vmem:[#allocation6 + $0xf0] sm:$0xff]
        %v444 = vld [vmem:[#allocation6 + $0xf8] sm:$0xff]
        %v445 = vld [vmem:[#allocation8] sm:$0x1]
        %v447 = vlaneseq
        %v448 = vshrl.u32 %v447, 7
        %v449 = vsub.s32 0, %v448
        %v450 = vrot.slane %v445, %v449
        %452 = vmatprep.subr.mxu0 0.0
        %453 = vmatpush1.msra.mxu0 %v413
        %454 = vmatprep.subr.mxu0 0.0
        %455 = vmatpush1.msra.mxu0 %v414
        %456 = vmatprep.subr.mxu0 0.0
        %457 = vmatpush1.msra.mxu0 %v415
        %458 = vmatprep.subr.mxu0 0.0
        %459 = vmatpush1.msra.mxu0 %v416
        %460 = vmatprep.subr.mxu0 0.0
        %461 = vmatpush1.msra.mxu0 %v417
        %462 = vmatprep.subr.mxu0 0.0
        %463 = vmatpush1.msra.mxu0 %v418
        %464 = vmatprep.subr.mxu0 0.0
        %465 = vmatpush1.msra.mxu0 %v419
        %466 = vmatprep.subr.mxu0 0.0
        %467 = vmatpush1.msra.mxu0 %v420
        %468 = vmatprep.subr.mxu0 0.0
        %469 = vmatpush1.msra.mxu0 %v421
        %470 = vmatprep.subr.mxu0 0.0
        %471 = vmatpush1.msra.mxu0 %v422
        %472 = vmatprep.subr.mxu0 0.0
        %473 = vmatpush1.msra.mxu0 %v423
        %474 = vmatprep.subr.mxu0 0.0
        %475 = vmatpush1.msra.mxu0 %v424
        %476 = vmatprep.subr.mxu0 0.0
        %477 = vmatpush1.msra.mxu0 %v425
        %478 = vmatprep.subr.mxu0 0.0
        %479 = vmatpush1.msra.mxu0 %v426
        %480 = vmatprep.subr.mxu0 0.0
        %481 = vmatpush1.msra.mxu0 %v427
        %482 = vmatprep.subr.mxu0 0.0
        %483 = vmatpush1.msra.mxu0 %v428
        %484 = vmatprep.subr.mxu0 0.0
        %485 = vmatpush1.msra.mxu0 %v429
        %486 = vmatprep.subr.mxu0 0.0
        %487 = vmatpush1.msra.mxu0 %v430
        %488 = vmatprep.subr.mxu0 0.0
        %489 = vmatpush1.msra.mxu0 %v431
        %490 = vmatprep.subr.mxu0 0.0
        %491 = vmatpush1.msra.mxu0 %v432
        %492 = vmatprep.subr.mxu0 0.0
        %493 = vmatpush1.msra.mxu0 %v433
        %494 = vmatprep.subr.mxu0 0.0
        %495 = vmatpush1.msra.mxu0 %v434
        %496 = vmatprep.subr.mxu0 0.0
        %497 = vmatpush1.msra.mxu0 %v435
        %498 = vmatprep.subr.mxu0 0.0
        %499 = vmatpush1.msra.mxu0 %v436
        %500 = vmatprep.subr.mxu0 0.0
        %501 = vmatpush1.msra.mxu0 %v437
        %502 = vmatprep.subr.mxu0 0.0
        %503 = vmatpush1.msra.mxu0 %v438
        %504 = vmatprep.subr.mxu0 0.0
        %505 = vmatpush1.msra.mxu0 %v439
        %506 = vmatprep.subr.mxu0 0.0
        %507 = vmatpush1.msra.mxu0 %v440
        %508 = vmatprep.subr.mxu0 0.0
        %509 = vmatpush1.msra.mxu0 %v441
        %510 = vmatprep.subr.mxu0 0.0
        %511 = vmatpush1.msra.mxu0 %v442
        %512 = vmatprep.subr.mxu0 0.0
        %513 = vmatpush1.msra.mxu0 %v443
        %514 = vmatprep.subr.mxu0 0.0
        %515 = vmatpush1.msra.mxu0 %v444
        %516 = vmatprep.mubr.f32.mxu0 %v382
        %517 = vmatmul.mubr.f32.gmra.mrb[0].mxu0 %v381
        %v518 = vpop.f32.mrb[0].mxu0
        %v519 = vadd.f32 %v450, %v518
        %v520 = vpop.f32.mrb[0].mxu0
        %521 = vmatprep.mubr.f32.mxu0 %v384
        %522 = vmatmul.mubr.f32.gmra.mrb[0].mxu0 %v383
        %v523 = vpop.f32.mrb[0].mxu0
        %v524 = vadd.f32 %v450, %v523
        %v525 = vpop.f32.mrb[0].mxu0
        %526 = vmatprep.mubr.f32.mxu0 %v386
        %527 = vmatmul.mubr.f32.gmra.mrb[0].mxu0 %v385
        %v528 = vpop.f32.mrb[0].mxu0
        %v529 = vadd.f32 %v450, %v528
        %v530 = vpop.f32.mrb[0].mxu0
        %531 = vmatprep.mubr.f32.mxu0 %v388
        %532 = vmatmul.mubr.f32.gmra.mrb[0].mxu0 %v387
        %v533 = vpop.f32.mrb[0].mxu0
        %v534 = vadd.f32 %v450, %v533
        %v535 = vpop.f32.mrb[0].mxu0
        %536 = vmatprep.mubr.f32.mxu0 %v390
        %537 = vmatmul.mubr.f32.gmra.mrb[0].mxu0 %v389
        %v538 = vpop.f32.mrb[0].mxu0
        %v539 = vadd.f32 %v450, %v538
        %v540 = vpop.f32.mrb[0].mxu0
        %541 = vmatprep.mubr.f32.mxu0 %v392
        %542 = vmatmul.mubr.f32.gmra.mrb[0].mxu0 %v391
        %v543 = vpop.f32.mrb[0].mxu0
        %v544 = vadd.f32 %v450, %v543
        %v545 = vpop.f32.mrb[0].mxu0
        %546 = vmatprep.mubr.f32.mxu0 %v394
        %547 = vmatmul.mubr.f32.gmra.mrb[0].mxu0 %v393
        %v548 = vpop.f32.mrb[0].mxu0
        %v549 = vadd.f32 %v450, %v548
        %v550 = vpop.f32.mrb[0].mxu0
        %551 = vmatprep.mubr.f32.mxu0 %v396
        %552 = vmatmul.mubr.f32.gmra.mrb[0].mxu0 %v395
        %v553 = vpop.f32.mrb[0].mxu0
        %v554 = vadd.f32 %v450, %v553
        %v555 = vpop.f32.mrb[0].mxu0
        %556 = vmatprep.mubr.f32.mxu0 %v398
        %557 = vmatmul.mubr.f32.gmra.mrb[0].mxu0 %v397
        %v558 = vpop.f32.mrb[0].mxu0
        %v559 = vadd.f32 %v450, %v558
        %v560 = vpop.f32.mrb[0].mxu0
        %561 = vmatprep.mubr.f32.mxu0 %v400
        %562 = vmatmul.mubr.f32.gmra.mrb[0].mxu0 %v399
        %v563 = vpop.f32.mrb[0].mxu0
        %v564 = vadd.f32 %v450, %v563
        %v565 = vpop.f32.mrb[0].mxu0
        %566 = vmatprep.mubr.f32.mxu0 %v402
        %567 = vmatmul.mubr.f32.gmra.mrb[0].mxu0 %v401
        %v568 = vpop.f32.mrb[0].mxu0
        %v569 = vadd.f32 %v450, %v568
        %v570 = vpop.f32.mrb[0].mxu0
        %571 = vmatprep.mubr.f32.mxu0 %v404
        %572 = vmatmul.mubr.f32.gmra.mrb[0].mxu0 %v403
        %v573 = vpop.f32.mrb[0].mxu0
        %v574 = vadd.f32 %v450, %v573
        %v575 = vpop.f32.mrb[0].mxu0
        %576 = vmatprep.mubr.f32.mxu0 %v406
        %577 = vmatmul.mubr.f32.gmra.mrb[0].mxu0 %v405
        %v578 = vpop.f32.mrb[0].mxu0
        %v579 = vadd.f32 %v450, %v578
        %v580 = vpop.f32.mrb[0].mxu0
        %581 = vmatprep.mubr.f32.mxu0 %v408
        %582 = vmatmul.mubr.f32.gmra.mrb[0].mxu0 %v407
        %v583 = vpop.f32.mrb[0].mxu0
        %v584 = vadd.f32 %v450, %v583
        %v585 = vpop.f32.mrb[0].mxu0
        %586 = vmatprep.mubr.f32.mxu0 %v410
        %587 = vmatmul.mubr.f32.gmra.mrb[0].mxu0 %v409
        %v588 = vpop.f32.mrb[0].mxu0
        %v589 = vadd.f32 %v450, %v588
        %v590 = vpop.f32.mrb[0].mxu0
        %591 = vmatprep.mubr.f32.mxu0 %v412
        %592 = vmatmul.mubr.f32.gmra.mrb[0].mxu0 %v411
        %v593 = vpop.f32.mrb[0].mxu0
        %v594 = vadd.f32 %v450, %v593
        %v595 = vpop.f32.mrb[0].mxu0
        %596 = vdwg.mxu0
        %v597 = vmax.f32 %v519, 0.0
        %v598 = vmax.f32 %v524, 0.0
        %v599 = vmax.f32 %v529, 0.0
        %v600 = vmax.f32 %v534, 0.0
        %v601 = vmax.f32 %v539, 0.0
        %v602 = vmax.f32 %v544, 0.0
        %v603 = vmax.f32 %v549, 0.0
        %v604 = vmax.f32 %v554, 0.0
        %v605 = vmax.f32 %v559, 0.0
        %v606 = vmax.f32 %v564, 0.0
        %v607 = vmax.f32 %v569, 0.0
        %v608 = vmax.f32 %v574, 0.0
        %v609 = vmax.f32 %v579, 0.0
        %v610 = vmax.f32 %v584, 0.0
        %v611 = vmax.f32 %v589, 0.0
        %v612 = vmax.f32 %v594, 0.0
        %s613 = scalar_lea.vmem [#allocation9], 128
        %v614 = vld [vmem:[%s613] sm:$0xff]
        %v615 = vld [vmem:[%s613 + $0x8] sm:$0xff]
        %v616 = vld [vmem:[%s613 + $0x10] sm:$0xff]
        %v617 = vld [vmem:[%s613 + $0x18] sm:$0xff]
        %vm618 = vcmask 261120
        %v620 = vsel %vm618, %v597, 0
        %v623 = vsel %vm618, %v598, 0
        %v626 = vsel %vm618, %v599, 0
        %v629 = vsel %vm618, %v600, 0
        %v632 = vsel %vm618, %v601, 0
        %v635 = vsel %vm618, %v602, 0
        %v638 = vsel %vm618, %v603, 0
        %v641 = vsel %vm618, %v604, 0
        %v644 = vsel %vm618, %v605, 0
        %v647 = vsel %vm618, %v606, 0
        %v650 = vsel %vm618, %v607, 0
        %v653 = vsel %vm618, %v608, 0
        %v656 = vsel %vm618, %v609, 0
        %v659 = vsel %vm618, %v610, 0
        %v662 = vsel %vm618, %v611, 0
        %v665 = vsel %vm618, %v612, 0
        %667 = vmatprep.subr.mxu0 0.0
        %668 = vmatpush1.msra.mxu0 %v614
        %669 = vmatprep.subr.mxu0 0.0
        %670 = vmatpush1.msra.mxu0 %v615
        %671 = vmatprep.subr.mxu0 0.0
        %672 = vmatpush1.msra.mxu0 %v616
        %673 = vmatprep.subr.mxu0 0.0
        %674 = vmatpush1.msra.mxu0 %v617
        %675 = vmatprep.subr.mxu0 0.0
        %676 = vmatpush1.msra.mxu0 0.0
        %677 = vmatprep.subr.mxu0 0.0
        %678 = vmatpush1.msra.mxu0 0.0
        %679 = vmatprep.subr.mxu0 0.0
        %680 = vmatpush1.msra.mxu0 0.0
        %681 = vmatprep.subr.mxu0 0.0
        %682 = vmatpush1.msra.mxu0 0.0
        %683 = vmatprep.subr.mxu0 0.0
        %684 = vmatpush1.msra.mxu0 0.0
        %685 = vmatprep.subr.mxu0 0.0
        %686 = vmatpush1.msra.mxu0 0.0
        %687 = vmatprep.subr.mxu0 0.0
        %688 = vmatpush1.msra.mxu0 0.0
        %689 = vmatprep.subr.mxu0 0.0
        %690 = vmatpush1.msra.mxu0 0.0
        %691 = vmatprep.subr.mxu0 0.0
        %692 = vmatpush1.msra.mxu0 0.0
        %693 = vmatprep.subr.mxu0 0.0
        %694 = vmatpush1.msra.mxu0 0.0
        %695 = vmatprep.subr.mxu0 0.0
        %696 = vmatpush1.msra.mxu0 0.0
        %697 = vmatprep.subr.mxu0 0.0
        %698 = vmatpush1.msra.mxu0 0.0
        %699 = vmatprep.subr.mxu0 0.0
        %700 = vmatpush1.msra.mxu0 0.0
        %701 = vmatprep.subr.mxu0 0.0
        %702 = vmatpush1.msra.mxu0 0.0
        %703 = vmatprep.subr.mxu0 0.0
        %704 = vmatpush1.msra.mxu0 0.0
        %705 = vmatprep.subr.mxu0 0.0
        %706 = vmatpush1.msra.mxu0 0.0
        %707 = vmatprep.subr.mxu0 0.0
        %708 = vmatpush1.msra.mxu0 0.0
        %709 = vmatprep.subr.mxu0 0.0
        %710 = vmatpush1.msra.mxu0 0.0
        %711 = vmatprep.subr.mxu0 0.0
        %712 = vmatpush1.msra.mxu0 0.0
        %713 = vmatprep.subr.mxu0 0.0
        %714 = vmatpush1.msra.mxu0 0.0
        %715 = vmatprep.subr.mxu0 0.0
        %716 = vmatpush1.msra.mxu0 0.0
        %717 = vmatprep.subr.mxu0 0.0
        %718 = vmatpush1.msra.mxu0 0.0
        %719 = vmatprep.subr.mxu0 0.0
        %720 = vmatpush1.msra.mxu0 0.0
        %721 = vmatprep.subr.mxu0 0.0
        %722 = vmatpush1.msra.mxu0 0.0
        %723 = vmatprep.subr.mxu0 0.0
        %724 = vmatpush1.msra.mxu0 0.0
        %725 = vmatprep.subr.mxu0 0.0
        %726 = vmatpush1.msra.mxu0 0.0
        %727 = vmatprep.subr.mxu0 0.0
        %728 = vmatpush1.msra.mxu0 0.0
        %729 = vmatprep.subr.mxu0 0.0
        %730 = vmatpush1.msra.mxu0 0.0
        %731 = vmatprep.mubr.f32.mxu0 0.0
        %732 = vmatmul.mubr.f32.gmra.mrb[0].mxu0 %v620
        %v733 = vpop.f32.mrb[0].mxu0
        %v734 = vadd.f32 0.0, %v733
        %v735 = vpop.f32.mrb[0].mxu0
        %736 = vmatprep.mubr.f32.mxu0 0.0
        %737 = vmatmul.mubr.f32.gmra.mrb[0].mxu0 %v623
        %v738 = vpop.f32.mrb[0].mxu0
        %v739 = vadd.f32 0.0, %v738
        %v740 = vpop.f32.mrb[0].mxu0
        %741 = vmatprep.mubr.f32.mxu0 0.0
        %742 = vmatmul.mubr.f32.gmra.mrb[0].mxu0 %v626
        %v743 = vpop.f32.mrb[0].mxu0
        %v744 = vadd.f32 0.0, %v743
        %v745 = vpop.f32.mrb[0].mxu0
        %746 = vmatprep.mubr.f32.mxu0 0.0
        %747 = vmatmul.mubr.f32.gmra.mrb[0].mxu0 %v629
        %v748 = vpop.f32.mrb[0].mxu0
        %v749 = vadd.f32 0.0, %v748
        %v750 = vpop.f32.mrb[0].mxu0
        %751 = vmatprep.mubr.f32.mxu0 0.0
        %752 = vmatmul.mubr.f32.gmra.mrb[0].mxu0 %v632
        %v753 = vpop.f32.mrb[0].mxu0
        %v754 = vadd.f32 0.0, %v753
        %v755 = vpop.f32.mrb[0].mxu0
        %756 = vmatprep.mubr.f32.mxu0 0.0
        %757 = vmatmul.mubr.f32.gmra.mrb[0].mxu0 %v635
        %v758 = vpop.f32.mrb[0].mxu0
        %v759 = vadd.f32 0.0, %v758
        %v760 = vpop.f32.mrb[0].mxu0
        %761 = vmatprep.mubr.f32.mxu0 0.0
        %762 = vmatmul.mubr.f32.gmra.mrb[0].mxu0 %v638
        %v763 = vpop.f32.mrb[0].mxu0
        %v764 = vadd.f32 0.0, %v763
        %v765 = vpop.f32.mrb[0].mxu0
        %766 = vmatprep.mubr.f32.mxu0 0.0
        %767 = vmatmul.mubr.f32.gmra.mrb[0].mxu0 %v641
        %v768 = vpop.f32.mrb[0].mxu0
        %v769 = vadd.f32 0.0, %v768
        %v770 = vpop.f32.mrb[0].mxu0
        %771 = vmatprep.mubr.f32.mxu0 0.0
        %772 = vmatmul.mubr.f32.gmra.mrb[0].mxu0 %v644
        %v773 = vpop.f32.mrb[0].mxu0
        %v774 = vadd.f32 0.0, %v773
        %v775 = vpop.f32.mrb[0].mxu0
        %776 = vmatprep.mubr.f32.mxu0 0.0
        %777 = vmatmul.mubr.f32.gmra.mrb[0].mxu0 %v647
        %v778 = vpop.f32.mrb[0].mxu0
        %v779 = vadd.f32 0.0, %v778
        %v780 = vpop.f32.mrb[0].mxu0
        %781 = vmatprep.mubr.f32.mxu0 0.0
        %782 = vmatmul.mubr.f32.gmra.mrb[0].mxu0 %v650
        %v783 = vpop.f32.mrb[0].mxu0
        %v784 = vadd.f32 0.0, %v783
        %v785 = vpop.f32.mrb[0].mxu0
        %786 = vmatprep.mubr.f32.mxu0 0.0
        %787 = vmatmul.mubr.f32.gmra.mrb[0].mxu0 %v653
        %v788 = vpop.f32.mrb[0].mxu0
        %v789 = vadd.f32 0.0, %v788
        %v790 = vpop.f32.mrb[0].mxu0
        %791 = vmatprep.mubr.f32.mxu0 0.0
        %792 = vmatmul.mubr.f32.gmra.mrb[0].mxu0 %v656
        %v793 = vpop.f32.mrb[0].mxu0
        %v794 = vadd.f32 0.0, %v793
        %v795 = vpop.f32.mrb[0].mxu0
        %796 = vmatprep.mubr.f32.mxu0 0.0
        %797 = vmatmul.mubr.f32.gmra.mrb[0].mxu0 %v659
        %v798 = vpop.f32.mrb[0].mxu0
        %v799 = vadd.f32 0.0, %v798
        %v800 = vpop.f32.mrb[0].mxu0
        %801 = vmatprep.mubr.f32.mxu0 0.0
        %802 = vmatmul.mubr.f32.gmra.mrb[0].mxu0 %v662
        %v803 = vpop.f32.mrb[0].mxu0
        %v804 = vadd.f32 0.0, %v803
        %v805 = vpop.f32.mrb[0].mxu0
        %806 = vmatprep.mubr.f32.mxu0 0.0
        %807 = vmatmul.mubr.f32.gmra.mrb[0].mxu0 %v665
        %v808 = vpop.f32.mrb[0].mxu0
        %v809 = vadd.f32 0.0, %v808
        %v810 = vpop.f32.mrb[0].mxu0
        %811 = vdwg.mxu0
        %vm812 = vcmask 523264
        %813 = vst.msk [vmem:[#allocation2] sm:$0xff] %vm812, %v734
        %814 = vst.msk [vmem:[#allocation2 + $0x8] sm:$0xff] %vm812, %v739
        %815 = vst.msk [vmem:[#allocation2 + $0x10] sm:$0xff] %vm812, %v744
        %816 = vst.msk [vmem:[#allocation2 + $0x18] sm:$0xff] %vm812, %v749
        %817 = vst.msk [vmem:[#allocation2 + $0x20] sm:$0xff] %vm812, %v754
        %818 = vst.msk [vmem:[#allocation2 + $0x28] sm:$0xff] %vm812, %v759
        %819 = vst.msk [vmem:[#allocation2 + $0x30] sm:$0xff] %vm812, %v764
        %820 = vst.msk [vmem:[#allocation2 + $0x38] sm:$0xff] %vm812, %v769
        %821 = vst.msk [vmem:[#allocation2 + $0x40] sm:$0xff] %vm812, %v774
        %822 = vst.msk [vmem:[#allocation2 + $0x48] sm:$0xff] %vm812, %v779
        %823 = vst.msk [vmem:[#allocation2 + $0x50] sm:$0xff] %vm812, %v784
        %824 = vst.msk [vmem:[#allocation2 + $0x58] sm:$0xff] %vm812, %v789
        %825 = vst.msk [vmem:[#allocation2 + $0x60] sm:$0xff] %vm812, %v794
        %826 = vst.msk [vmem:[#allocation2 + $0x68] sm:$0xff] %vm812, %v799
        %827 = vst.msk [vmem:[#allocation2 + $0x70] sm:$0xff] %vm812, %v804
        %828 = vst.msk [vmem:[#allocation2 + $0x78] sm:$0xff] %vm812, %v809
        %v829 = vld [vmem:[#allocation9] sm:$0xff]
        %v830 = vld [vmem:[#allocation9 + $0x8] sm:$0xff]
        %v831 = vld [vmem:[#allocation9 + $0x10] sm:$0xff]
        %v832 = vld [vmem:[#allocation9 + $0x18] sm:$0xff]
        %833 = vmatprep.subr.mxu0 0.0
        %834 = vmatpush1.msra.mxu0 %v829
        %835 = vmatprep.subr.mxu0 0.0
        %836 = vmatpush1.msra.mxu0 %v830
        %837 = vmatprep.subr.mxu0 0.0
        %838 = vmatpush1.msra.mxu0 %v831
        %839 = vmatprep.subr.mxu0 0.0
        %840 = vmatpush1.msra.mxu0 %v832
        %841 = vmatprep.subr.mxu0 0.0
        %842 = vmatpush1.msra.mxu0 0.0
        %843 = vmatprep.subr.mxu0 0.0
        %844 = vmatpush1.msra.mxu0 0.0
        %845 = vmatprep.subr.mxu0 0.0
        %846 = vmatpush1.msra.mxu0 0.0
        %847 = vmatprep.subr.mxu0 0.0
        %848 = vmatpush1.msra.mxu0 0.0
        %849 = vmatprep.subr.mxu0 0.0
        %850 = vmatpush1.msra.mxu0 0.0
        %851 = vmatprep.subr.mxu0 0.0
        %852 = vmatpush1.msra.mxu0 0.0
        %853 = vmatprep.subr.mxu0 0.0
        %854 = vmatpush1.msra.mxu0 0.0
        %855 = vmatprep.subr.mxu0 0.0
        %856 = vmatpush1.msra.mxu0 0.0
        %857 = vmatprep.subr.mxu0 0.0
        %858 = vmatpush1.msra.mxu0 0.0
        %859 = vmatprep.subr.mxu0 0.0
        %860 = vmatpush1.msra.mxu0 0.0
        %861 = vmatprep.subr.mxu0 0.0
        %862 = vmatpush1.msra.mxu0 0.0
        %863 = vmatprep.subr.mxu0 0.0
        %864 = vmatpush1.msra.mxu0 0.0
        %865 = vmatprep.subr.mxu0 0.0
        %866 = vmatpush1.msra.mxu0 0.0
        %867 = vmatprep.subr.mxu0 0.0
        %868 = vmatpush1.msra.mxu0 0.0
        %869 = vmatprep.subr.mxu0 0.0
        %870 = vmatpush1.msra.mxu0 0.0
        %871 = vmatprep.subr.mxu0 0.0
        %872 = vmatpush1.msra.mxu0 0.0
        %873 = vmatprep.subr.mxu0 0.0
        %874 = vmatpush1.msra.mxu0 0.0
        %875 = vmatprep.subr.mxu0 0.0
        %876 = vmatpush1.msra.mxu0 0.0
        %877 = vmatprep.subr.mxu0 0.0
        %878 = vmatpush1.msra.mxu0 0.0
        %879 = vmatprep.subr.mxu0 0.0
        %880 = vmatpush1.msra.mxu0 0.0
        %881 = vmatprep.subr.mxu0 0.0
        %882 = vmatpush1.msra.mxu0 0.0
        %883 = vmatprep.subr.mxu0 0.0
        %884 = vmatpush1.msra.mxu0 0.0
        %885 = vmatprep.subr.mxu0 0.0
        %886 = vmatpush1.msra.mxu0 0.0
        %887 = vmatprep.subr.mxu0 0.0
        %888 = vmatpush1.msra.mxu0 0.0
        %889 = vmatprep.subr.mxu0 0.0
        %890 = vmatpush1.msra.mxu0 0.0
        %891 = vmatprep.subr.mxu0 0.0
        %892 = vmatpush1.msra.mxu0 0.0
        %893 = vmatprep.subr.mxu0 0.0
        %894 = vmatpush1.msra.mxu0 0.0
        %895 = vmatprep.subr.mxu0 0.0
        %896 = vmatpush1.msra.mxu0 0.0
        %897 = vmatprep.mubr.f32.mxu0 0.0
        %898 = vmatmul.mubr.f32.gmra.mrb[0].mxu0 %v620
        %v899 = vpop.f32.mrb[0].mxu0
        %v900 = vadd.f32 0.0, %v899
        %v901 = vpop.f32.mrb[0].mxu0
        %902 = vmatprep.mubr.f32.mxu0 0.0
        %903 = vmatmul.mubr.f32.gmra.mrb[0].mxu0 %v623
        %v904 = vpop.f32.mrb[0].mxu0
        %v905 = vadd.f32 0.0, %v904
        %v906 = vpop.f32.mrb[0].mxu0
        %907 = vmatprep.mubr.f32.mxu0 0.0
        %908 = vmatmul.mubr.f32.gmra.mrb[0].mxu0 %v626
        %v909 = vpop.f32.mrb[0].mxu0
        %v910 = vadd.f32 0.0, %v909
        %v911 = vpop.f32.mrb[0].mxu0
        %912 = vmatprep.mubr.f32.mxu0 0.0
        %913 = vmatmul.mubr.f32.gmra.mrb[0].mxu0 %v629
        %v914 = vpop.f32.mrb[0].mxu0
        %v915 = vadd.f32 0.0, %v914
        %v916 = vpop.f32.mrb[0].mxu0
        %917 = vmatprep.mubr.f32.mxu0 0.0
        %918 = vmatmul.mubr.f32.gmra.mrb[0].mxu0 %v632
        %v919 = vpop.f32.mrb[0].mxu0
        %v920 = vadd.f32 0.0, %v919
        %v921 = vpop.f32.mrb[0].mxu0
        %922 = vmatprep.mubr.f32.mxu0 0.0
        %923 = vmatmul.mubr.f32.gmra.mrb[0].mxu0 %v635
        %v924 = vpop.f32.mrb[0].mxu0
        %v925 = vadd.f32 0.0, %v924
        %v926 = vpop.f32.mrb[0].mxu0
        %927 = vmatprep.mubr.f32.mxu0 0.0
        %928 = vmatmul.mubr.f32.gmra.mrb[0].mxu0 %v638
        %v929 = vpop.f32.mrb[0].mxu0
        %v930 = vadd.f32 0.0, %v929
        %v931 = vpop.f32.mrb[0].mxu0
        %932 = vmatprep.mubr.f32.mxu0 0.0
        %933 = vmatmul.mubr.f32.gmra.mrb[0].mxu0 %v641
        %v934 = vpop.f32.mrb[0].mxu0
        %v935 = vpop.f32.mrb[0].mxu0
        %936 = vmatprep.mubr.f32.mxu0 0.0
        %937 = vmatmul.mubr.f32.gmra.mrb[0].mxu0 %v644
        %v938 = vpop.f32.mrb[0].mxu0
        %v939 = vadd.f32 0.0, %v938
        %v940 = vpop.f32.mrb[0].mxu0
        %941 = vmatprep.mubr.f32.mxu0 0.0
        %942 = vmatmul.mubr.f32.gmra.mrb[0].mxu0 %v647
        %v943 = vpop.f32.mrb[0].mxu0
        %v944 = vadd.f32 0.0, %v943
        %v945 = vpop.f32.mrb[0].mxu0
        %946 = vmatprep.mubr.f32.mxu0 0.0
        %947 = vmatmul.mubr.f32.gmra.mrb[0].mxu0 %v650
        %v948 = vpop.f32.mrb[0].mxu0
        %v949 = vadd.f32 0.0, %v948
        %v950 = vpop.f32.mrb[0].mxu0
        %951 = vmatprep.mubr.f32.mxu0 0.0
        %952 = vmatmul.mubr.f32.gmra.mrb[0].mxu0 %v653
        %v953 = vpop.f32.mrb[0].mxu0
        %v954 = vadd.f32 0.0, %v953
        %v955 = vpop.f32.mrb[0].mxu0
        %956 = vmatprep.mubr.f32.mxu0 0.0
        %957 = vmatmul.mubr.f32.gmra.mrb[0].mxu0 %v656
        %v958 = vpop.f32.mrb[0].mxu0
        %v959 = vadd.f32 0.0, %v958
        %v960 = vpop.f32.mrb[0].mxu0
        %961 = vmatprep.mubr.f32.mxu0 0.0
        %962 = vmatmul.mubr.f32.gmra.mrb[0].mxu0 %v659
        %v963 = vpop.f32.mrb[0].mxu0
        %v964 = vadd.f32 0.0, %v963
        %v965 = vpop.f32.mrb[0].mxu0
        %966 = vmatprep.mubr.f32.mxu0 0.0
        %967 = vmatmul.mubr.f32.gmra.mrb[0].mxu0 %v662
        %v968 = vpop.f32.mrb[0].mxu0
        %v969 = vadd.f32 0.0, %v968
        %v970 = vpop.f32.mrb[0].mxu0
        %971 = vmatprep.mubr.f32.mxu0 0.0
        %972 = vmatmul.mubr.f32.gmra.mrb[0].mxu0 %v665
        %v973 = vpop.f32.mrb[0].mxu0
        %v974 = vpop.f32.mrb[0].mxu0
        %975 = vdwg.mxu0
        %s976 = scalar_lea.vmem [#allocation2], 8
        %v977 = vld [vmem:[%s976 + $0x1] sm:$0x7f]
        %v978 = vld [vmem:[%s976 + $0x9] sm:$0x7f]
        %v979 = vld [vmem:[%s976 + $0x11] sm:$0x7f]
        %v980 = vld [vmem:[%s976 + $0x19] sm:$0x7f]
        %v981 = vld [vmem:[%s976 + $0x21] sm:$0x7f]
        %v982 = vld [vmem:[%s976 + $0x29] sm:$0x7f]
        %v983 = vld [vmem:[%s976 + $0x31] sm:$0x7f]
        %v984 = vld [vmem:[%s976 + $0x41] sm:$0x7f]
        %v985 = vld [vmem:[%s976 + $0x49] sm:$0x7f]
        %v986 = vld [vmem:[%s976 + $0x51] sm:$0x7f]
        %v987 = vld [vmem:[%s976 + $0x59] sm:$0x7f]
        %v988 = vld [vmem:[%s976 + $0x61] sm:$0x7f]
        %v989 = vld [vmem:[%s976 + $0x69] sm:$0x7f]
        %v990 = vld [vmem:[%s976 + $0x71] sm:$0x7f]
        %v991 = vadd.f32 %v977, %v900
        %v992 = vadd.f32 %v978, %v905
        %v993 = vadd.f32 %v979, %v910
        %v994 = vadd.f32 %v980, %v915
        %v995 = vadd.f32 %v981, %v920
        %v996 = vadd.f32 %v982, %v925
        %v997 = vadd.f32 %v983, %v930
        %v998 = vadd.f32 %v984, %v939
        %v999 = vadd.f32 %v985, %v944
        %v1000 = vadd.f32 %v986, %v949
        %v1001 = vadd.f32 %v987, %v954
        %v1002 = vadd.f32 %v988, %v959
        %v1003 = vadd.f32 %v989, %v964
        %v1004 = vadd.f32 %v990, %v969
        %vm1005 = vcmask 522240
        %1006 = vst.msk [vmem:[%s976 + $0x1] sm:$0x7f] %vm1005, %v991
        %1007 = vst.msk [vmem:[%s976 + $0x9] sm:$0x7f] %vm1005, %v992
        %1008 = vst.msk [vmem:[%s976 + $0x11] sm:$0x7f] %vm1005, %v993
        %1009 = vst.msk [vmem:[%s976 + $0x19] sm:$0x7f] %vm1005, %v994
        %1010 = vst.msk [vmem:[%s976 + $0x21] sm:$0x7f] %vm1005, %v995
        %1011 = vst.msk [vmem:[%s976 + $0x29] sm:$0x7f] %vm1005, %v996
        %1012 = vst.msk [vmem:[%s976 + $0x31] sm:$0x7f] %vm1005, %v997
        %1013 = vst.msk [vmem:[%s976 + $0x41] sm:$0x7f] %vm1005, %v998
        %1014 = vst.msk [vmem:[%s976 + $0x49] sm:$0x7f] %vm1005, %v999
        %1015 = vst.msk [vmem:[%s976 + $0x51] sm:$0x7f] %vm1005, %v1000
        %1016 = vst.msk [vmem:[%s976 + $0x59] sm:$0x7f] %vm1005, %v1001
        %1017 = vst.msk [vmem:[%s976 + $0x61] sm:$0x7f] %vm1005, %v1002
        %1018 = vst.msk [vmem:[%s976 + $0x69] sm:$0x7f] %vm1005, %v1003
        %1019 = vst.msk [vmem:[%s976 + $0x71] sm:$0x7f] %vm1005, %v1004
        %s1020 = scalar_lea.vmem [#allocation9], 32
        %v1021 = vld [vmem:[%s1020] sm:$0xff]
        %v1022 = vld [vmem:[%s1020 + $0x8] sm:$0xff]
        %v1023 = vld [vmem:[%s1020 + $0x10] sm:$0xff]
        %v1024 = vld [vmem:[%s1020 + $0x18] sm:$0xff]
        %1025 = vmatprep.subr.mxu0 0.0
        %1026 = vmatpush1.msra.mxu0 %v1021
        %1027 = vmatprep.subr.mxu0 0.0
        %1028 = vmatpush1.msra.mxu0 %v1022
        %1029 = vmatprep.subr.mxu0 0.0
        %1030 = vmatpush1.msra.mxu0 %v1023
        %1031 = vmatprep.subr.mxu0 0.0
        %1032 = vmatpush1.msra.mxu0 %v1024
        %1033 = vmatprep.subr.mxu0 0.0
        %1034 = vmatpush1.msra.mxu0 0.0
        %1035 = vmatprep.subr.mxu0 0.0
        %1036 = vmatpush1.msra.mxu0 0.0
        %1037 = vmatprep.subr.mxu0 0.0
        %1038 = vmatpush1.msra.mxu0 0.0
        %1039 = vmatprep.subr.mxu0 0.0
        %1040 = vmatpush1.msra.mxu0 0.0
        %1041 = vmatprep.subr.mxu0 0.0
        %1042 = vmatpush1.msra.mxu0 0.0
        %1043 = vmatprep.subr.mxu0 0.0
        %1044 = vmatpush1.msra.mxu0 0.0
        %1045 = vmatprep.subr.mxu0 0.0
        %1046 = vmatpush1.msra.mxu0 0.0
        %1047 = vmatprep.subr.mxu0 0.0
        %1048 = vmatpush1.msra.mxu0 0.0
        %1049 = vmatprep.subr.mxu0 0.0
        %1050 = vmatpush1.msra.mxu0 0.0
        %1051 = vmatprep.subr.mxu0 0.0
        %1052 = vmatpush1.msra.mxu0 0.0
        %1053 = vmatprep.subr.mxu0 0.0
        %1054 = vmatpush1.msra.mxu0 0.0
        %1055 = vmatprep.subr.mxu0 0.0
        %1056 = vmatpush1.msra.mxu0 0.0
        %1057 = vmatprep.subr.mxu0 0.0
        %1058 = vmatpush1.msra.mxu0 0.0
        %1059 = vmatprep.subr.mxu0 0.0
        %1060 = vmatpush1.msra.mxu0 0.0
        %1061 = vmatprep.subr.mxu0 0.0
        %1062 = vmatpush1.msra.mxu0 0.0
        %1063 = vmatprep.subr.mxu0 0.0
        %1064 = vmatpush1.msra.mxu0 0.0
        %1065 = vmatprep.subr.mxu0 0.0
        %1066 = vmatpush1.msra.mxu0 0.0
        %1067 = vmatprep.subr.mxu0 0.0
        %1068 = vmatpush1.msra.mxu0 0.0
        %1069 = vmatprep.subr.mxu0 0.0
        %1070 = vmatpush1.msra.mxu0 0.0
        %1071 = vmatprep.subr.mxu0 0.0
        %1072 = vmatpush1.msra.mxu0 0.0
        %1073 = vmatprep.subr.mxu0 0.0
        %1074 = vmatpush1.msra.mxu0 0.0
        %1075 = vmatprep.subr.mxu0 0.0
        %1076 = vmatpush1.msra.mxu0 0.0
        %1077 = vmatprep.subr.mxu0 0.0
        %1078 = vmatpush1.msra.mxu0 0.0
        %1079 = vmatprep.subr.mxu0 0.0
        %1080 = vmatpush1.msra.mxu0 0.0
        %1081 = vmatprep.subr.mxu0 0.0
        %1082 = vmatpush1.msra.mxu0 0.0
        %1083 = vmatprep.subr.mxu0 0.0
        %1084 = vmatpush1.msra.mxu0 0.0
        %1085 = vmatprep.subr.mxu0 0.0
        %1086 = vmatpush1.msra.mxu0 0.0
        %1087 = vmatprep.subr.mxu0 0.0
        %1088 = vmatpush1.msra.mxu0 0.0
        %1089 = vmatprep.mubr.f32.mxu0 0.0
        %1090 = vmatmul.mubr.f32.gmra.mrb[0].mxu0 %v620
        %v1091 = vpop.f32.mrb[0].mxu0
        %v1092 = vadd.f32 0.0, %v1091
        %v1093 = vpop.f32.mrb[0].mxu0
        %1094 = vmatprep.mubr.f32.mxu0 0.0
        %1095 = vmatmul.mubr.f32.gmra.mrb[0].mxu0 %v623
        %v1096 = vpop.f32.mrb[0].mxu0
        %v1097 = vadd.f32 0.0, %v1096
        %v1098 = vpop.f32.mrb[0].mxu0
        %1099 = vmatprep.mubr.f32.mxu0 0.0
        %1100 = vmatmul.mubr.f32.gmra.mrb[0].mxu0 %v626
        %v1101 = vpop.f32.mrb[0].mxu0
        %v1102 = vadd.f32 0.0, %v1101
        %v1103 = vpop.f32.mrb[0].mxu0
        %1104 = vmatprep.mubr.f32.mxu0 0.0
        %1105 = vmatmul.mubr.f32.gmra.mrb[0].mxu0 %v629
        %v1106 = vpop.f32.mrb[0].mxu0
        %v1107 = vadd.f32 0.0, %v1106
        %v1108 = vpop.f32.mrb[0].mxu0
        %1109 = vmatprep.mubr.f32.mxu0 0.0
        %1110 = vmatmul.mubr.f32.gmra.mrb[0].mxu0 %v632
        %v1111 = vpop.f32.mrb[0].mxu0
        %v1112 = vadd.f32 0.0, %v1111
        %v1113 = vpop.f32.mrb[0].mxu0
        %1114 = vmatprep.mubr.f32.mxu0 0.0
        %1115 = vmatmul.mubr.f32.gmra.mrb[0].mxu0 %v635
        %v1116 = vpop.f32.mrb[0].mxu0
        %v1117 = vadd.f32 0.0, %v1116
        %v1118 = vpop.f32.mrb[0].mxu0
        %1119 = vmatprep.mubr.f32.mxu0 0.0
        %1120 = vmatmul.mubr.f32.gmra.mrb[0].mxu0 %v638
        %v1121 = vpop.f32.mrb[0].mxu0
        %v1122 = vadd.f32 0.0, %v1121
        %v1123 = vpop.f32.mrb[0].mxu0
        %1124 = vmatprep.mubr.f32.mxu0 0.0
        %1125 = vmatmul.mubr.f32.gmra.mrb[0].mxu0 %v641
        %v1126 = vpop.f32.mrb[0].mxu0
        %v1127 = vpop.f32.mrb[0].mxu0
        %1128 = vmatprep.mubr.f32.mxu0 0.0
        %1129 = vmatmul.mubr.f32.gmra.mrb[0].mxu0 %v644
        %v1130 = vpop.f32.mrb[0].mxu0
        %v1131 = vadd.f32 0.0, %v1130
        %v1132 = vpop.f32.mrb[0].mxu0
        %1133 = vmatprep.mubr.f32.mxu0 0.0
        %1134 = vmatmul.mubr.f32.gmra.mrb[0].mxu0 %v647
        %v1135 = vpop.f32.mrb[0].mxu0
        %v1136 = vadd.f32 0.0, %v1135
        %v1137 = vpop.f32.mrb[0].mxu0
        %1138 = vmatprep.mubr.f32.mxu0 0.0
        %1139 = vmatmul.mubr.f32.gmra.mrb[0].mxu0 %v650
        %v1140 = vpop.f32.mrb[0].mxu0
        %v1141 = vadd.f32 0.0, %v1140
        %v1142 = vpop.f32.mrb[0].mxu0
        %1143 = vmatprep.mubr.f32.mxu0 0.0
        %1144 = vmatmul.mubr.f32.gmra.mrb[0].mxu0 %v653
        %v1145 = vpop.f32.mrb[0].mxu0
        %v1146 = vadd.f32 0.0, %v1145
        %v1147 = vpop.f32.mrb[0].mxu0
        %1148 = vmatprep.mubr.f32.mxu0 0.0
        %1149 = vmatmul.mubr.f32.gmra.mrb[0].mxu0 %v656
        %v1150 = vpop.f32.mrb[0].mxu0
        %v1151 = vadd.f32 0.0, %v1150
        %v1152 = vpop.f32.mrb[0].mxu0
        %1153 = vmatprep.mubr.f32.mxu0 0.0
        %1154 = vmatmul.mubr.f32.gmra.mrb[0].mxu0 %v659
        %v1155 = vpop.f32.mrb[0].mxu0
        %v1156 = vadd.f32 0.0, %v1155
        %v1157 = vpop.f32.mrb[0].mxu0
        %1158 = vmatprep.mubr.f32.mxu0 0.0
        %1159 = vmatmul.mubr.f32.gmra.mrb[0].mxu0 %v662
        %v1160 = vpop.f32.mrb[0].mxu0
        %v1161 = vadd.f32 0.0, %v1160
        %v1162 = vpop.f32.mrb[0].mxu0
        %1163 = vmatprep.mubr.f32.mxu0 0.0
        %1164 = vmatmul.mubr.f32.gmra.mrb[0].mxu0 %v665
        %v1165 = vpop.f32.mrb[0].mxu0
        %v1166 = vpop.f32.mrb[0].mxu0
        %1167 = vdwg.mxu0
        %v1168 = vld [vmem:[%s976] sm:$0xff]
        %v1169 = vld [vmem:[%s976 + $0x8] sm:$0xff]
        %v1170 = vld [vmem:[%s976 + $0x10] sm:$0xff]
        %v1171 = vld [vmem:[%s976 + $0x18] sm:$0xff]
        %v1172 = vld [vmem:[%s976 + $0x20] sm:$0xff]
        %v1173 = vld [vmem:[%s976 + $0x28] sm:$0xff]
        %v1174 = vld [vmem:[%s976 + $0x30] sm:$0xff]
        %v1175 = vld [vmem:[%s976 + $0x40] sm:$0xff]
        %v1176 = vld [vmem:[%s976 + $0x48] sm:$0xff]
        %v1177 = vld [vmem:[%s976 + $0x50] sm:$0xff]
        %v1178 = vld [vmem:[%s976 + $0x58] sm:$0xff]
        %v1179 = vld [vmem:[%s976 + $0x60] sm:$0xff]
        %v1180 = vld [vmem:[%s976 + $0x68] sm:$0xff]
        %v1181 = vld [vmem:[%s976 + $0x70] sm:$0xff]
        %v1182 = vadd.f32 %v1168, %v1092
        %v1183 = vadd.f32 %v1169, %v1097
        %v1184 = vadd.f32 %v1170, %v1102
        %v1185 = vadd.f32 %v1171, %v1107
        %v1186 = vadd.f32 %v1172, %v1112
        %v1187 = vadd.f32 %v1173, %v1117
        %v1188 = vadd.f32 %v1174, %v1122
        %v1189 = vadd.f32 %v1175, %v1131
        %v1190 = vadd.f32 %v1176, %v1136
        %v1191 = vadd.f32 %v1177, %v1141
        %v1192 = vadd.f32 %v1178, %v1146
        %v1193 = vadd.f32 %v1179, %v1151
        %v1194 = vadd.f32 %v1180, %v1156
        %v1195 = vadd.f32 %v1181, %v1161
        %1196 = vst.msk [vmem:[%s976] sm:$0xff] %vm812, %v1182
        %1197 = vst.msk [vmem:[%s976 + $0x8] sm:$0xff] %vm812, %v1183
        %1198 = vst.msk [vmem:[%s976 + $0x10] sm:$0xff] %vm812, %v1184
        %1199 = vst.msk [vmem:[%s976 + $0x18] sm:$0xff] %vm812, %v1185
        %1200 = vst.msk [vmem:[%s976 + $0x20] sm:$0xff] %vm812, %v1186
        %1201 = vst.msk [vmem:[%s976 + $0x28] sm:$0xff] %vm812, %v1187
        %1202 = vst.msk [vmem:[%s976 + $0x30] sm:$0xff] %vm812, %v1188
        %1203 = vst.msk [vmem:[%s976 + $0x40] sm:$0xff] %vm812, %v1189
        %1204 = vst.msk [vmem:[%s976 + $0x48] sm:$0xff] %vm812, %v1190
        %1205 = vst.msk [vmem:[%s976 + $0x50] sm:$0xff] %vm812, %v1191
        %1206 = vst.msk [vmem:[%s976 + $0x58] sm:$0xff] %vm812, %v1192
        %1207 = vst.msk [vmem:[%s976 + $0x60] sm:$0xff] %vm812, %v1193
        %1208 = vst.msk [vmem:[%s976 + $0x68] sm:$0xff] %vm812, %v1194
        %1209 = vst.msk [vmem:[%s976 + $0x70] sm:$0xff] %vm812, %v1195
        %s1210 = scalar_lea.vmem [#allocation9], 64
        %v1211 = vld [vmem:[%s1210] sm:$0xff]
        %v1212 = vld [vmem:[%s1210 + $0x8] sm:$0xff]
        %v1213 = vld [vmem:[%s1210 + $0x10] sm:$0xff]
        %v1214 = vld [vmem:[%s1210 + $0x18] sm:$0xff]
        %1215 = vmatprep.subr.mxu0 0.0
        %1216 = vmatpush1.msra.mxu0 %v1211
        %1217 = vmatprep.subr.mxu0 0.0
        %1218 = vmatpush1.msra.mxu0 %v1212
        %1219 = vmatprep.subr.mxu0 0.0
        %1220 = vmatpush1.msra.mxu0 %v1213
        %1221 = vmatprep.subr.mxu0 0.0
        %1222 = vmatpush1.msra.mxu0 %v1214
        %1223 = vmatprep.subr.mxu0 0.0
        %1224 = vmatpush1.msra.mxu0 0.0
        %1225 = vmatprep.subr.mxu0 0.0
        %1226 = vmatpush1.msra.mxu0 0.0
        %1227 = vmatprep.subr.mxu0 0.0
        %1228 = vmatpush1.msra.mxu0 0.0
        %1229 = vmatprep.subr.mxu0 0.0
        %1230 = vmatpush1.msra.mxu0 0.0
        %1231 = vmatprep.subr.mxu0 0.0
        %1232 = vmatpush1.msra.mxu0 0.0
        %1233 = vmatprep.subr.mxu0 0.0
        %1234 = vmatpush1.msra.mxu0 0.0
        %1235 = vmatprep.subr.mxu0 0.0
        %1236 = vmatpush1.msra.mxu0 0.0
        %1237 = vmatprep.subr.mxu0 0.0
        %1238 = vmatpush1.msra.mxu0 0.0
        %1239 = vmatprep.subr.mxu0 0.0
        %1240 = vmatpush1.msra.mxu0 0.0
        %1241 = vmatprep.subr.mxu0 0.0
        %1242 = vmatpush1.msra.mxu0 0.0
        %1243 = vmatprep.subr.mxu0 0.0
        %1244 = vmatpush1.msra.mxu0 0.0
        %1245 = vmatprep.subr.mxu0 0.0
        %1246 = vmatpush1.msra.mxu0 0.0
        %1247 = vmatprep.subr.mxu0 0.0
        %1248 = vmatpush1.msra.mxu0 0.0
        %1249 = vmatprep.subr.mxu0 0.0
        %1250 = vmatpush1.msra.mxu0 0.0
        %1251 = vmatprep.subr.mxu0 0.0
        %1252 = vmatpush1.msra.mxu0 0.0
        %1253 = vmatprep.subr.mxu0 0.0
        %1254 = vmatpush1.msra.mxu0 0.0
        %1255 = vmatprep.subr.mxu0 0.0
        %1256 = vmatpush1.msra.mxu0 0.0
        %1257 = vmatprep.subr.mxu0 0.0
        %1258 = vmatpush1.msra.mxu0 0.0
        %1259 = vmatprep.subr.mxu0 0.0
        %1260 = vmatpush1.msra.mxu0 0.0
        %1261 = vmatprep.subr.mxu0 0.0
        %1262 = vmatpush1.msra.mxu0 0.0
        %1263 = vmatprep.subr.mxu0 0.0
        %1264 = vmatpush1.msra.mxu0 0.0
        %1265 = vmatprep.subr.mxu0 0.0
        %1266 = vmatpush1.msra.mxu0 0.0
        %1267 = vmatprep.subr.mxu0 0.0
        %1268 = vmatpush1.msra.mxu0 0.0
        %1269 = vmatprep.subr.mxu0 0.0
        %1270 = vmatpush1.msra.mxu0 0.0
        %1271 = vmatprep.subr.mxu0 0.0
        %1272 = vmatpush1.msra.mxu0 0.0
        %1273 = vmatprep.subr.mxu0 0.0
        %1274 = vmatpush1.msra.mxu0 0.0
        %1275 = vmatprep.subr.mxu0 0.0
        %1276 = vmatpush1.msra.mxu0 0.0
        %1277 = vmatprep.subr.mxu0 0.0
        %1278 = vmatpush1.msra.mxu0 0.0
        %1279 = vmatprep.mubr.f32.mxu0 0.0
        %1280 = vmatmul.mubr.f32.gmra.mrb[0].mxu0 %v620
        %v1281 = vpop.f32.mrb[0].mxu0
        %v1282 = vadd.f32 0.0, %v1281
        %v1283 = vpop.f32.mrb[0].mxu0
        %1284 = vmatprep.mubr.f32.mxu0 0.0
        %1285 = vmatmul.mubr.f32.gmra.mrb[0].mxu0 %v623
        %v1286 = vpop.f32.mrb[0].mxu0
        %v1287 = vadd.f32 0.0, %v1286
        %v1288 = vpop.f32.mrb[0].mxu0
        %1289 = vmatprep.mubr.f32.mxu0 0.0
        %1290 = vmatmul.mubr.f32.gmra.mrb[0].mxu0 %v626
        %v1291 = vpop.f32.mrb[0].mxu0
        %v1292 = vadd.f32 0.0, %v1291
        %v1293 = vpop.f32.mrb[0].mxu0
        %1294 = vmatprep.mubr.f32.mxu0 0.0
        %1295 = vmatmul.mubr.f32.gmra.mrb[0].mxu0 %v629
        %v1296 = vpop.f32.mrb[0].mxu0
        %v1297 = vadd.f32 0.0, %v1296
        %v1298 = vpop.f32.mrb[0].mxu0
        %1299 = vmatprep.mubr.f32.mxu0 0.0
        %1300 = vmatmul.mubr.f32.gmra.mrb[0].mxu0 %v632
        %v1301 = vpop.f32.mrb[0].mxu0
        %v1302 = vadd.f32 0.0, %v1301
        %v1303 = vpop.f32.mrb[0].mxu0
        %1304 = vmatprep.mubr.f32.mxu0 0.0
        %1305 = vmatmul.mubr.f32.gmra.mrb[0].mxu0 %v635
        %v1306 = vpop.f32.mrb[0].mxu0
        %v1307 = vadd.f32 0.0, %v1306
        %v1308 = vpop.f32.mrb[0].mxu0
        %1309 = vmatprep.mubr.f32.mxu0 0.0
        %1310 = vmatmul.mubr.f32.gmra.mrb[0].mxu0 %v638
        %v1311 = vpop.f32.mrb[0].mxu0
        %v1312 = vadd.f32 0.0, %v1311
        %v1313 = vpop.f32.mrb[0].mxu0
        %1314 = vmatprep.mubr.f32.mxu0 0.0
        %1315 = vmatmul.mubr.f32.gmra.mrb[0].mxu0 %v641
        %v1316 = vpop.f32.mrb[0].mxu0
        %v1317 = vpop.f32.mrb[0].mxu0
        %1318 = vmatprep.mubr.f32.mxu0 0.0
        %1319 = vmatmul.mubr.f32.gmra.mrb[0].mxu0 %v644
        %v1320 = vpop.f32.mrb[0].mxu0
        %v1321 = vadd.f32 0.0, %v1320
        %v1322 = vpop.f32.mrb[0].mxu0
        %1323 = vmatprep.mubr.f32.mxu0 0.0
        %1324 = vmatmul.mubr.f32.gmra.mrb[0].mxu0 %v647
        %v1325 = vpop.f32.mrb[0].mxu0
        %v1326 = vadd.f32 0.0, %v1325
        %v1327 = vpop.f32.mrb[0].mxu0
        %1328 = vmatprep.mubr.f32.mxu0 0.0
        %1329 = vmatmul.mubr.f32.gmra.mrb[0].mxu0 %v650
        %v1330 = vpop.f32.mrb[0].mxu0
        %v1331 = vadd.f32 0.0, %v1330
        %v1332 = vpop.f32.mrb[0].mxu0
        %1333 = vmatprep.mubr.f32.mxu0 0.0
        %1334 = vmatmul.mubr.f32.gmra.mrb[0].mxu0 %v653
        %v1335 = vpop.f32.mrb[0].mxu0
        %v1336 = vadd.f32 0.0, %v1335
        %v1337 = vpop.f32.mrb[0].mxu0
        %1338 = vmatprep.mubr.f32.mxu0 0.0
        %1339 = vmatmul.mubr.f32.gmra.mrb[0].mxu0 %v656
        %v1340 = vpop.f32.mrb[0].mxu0
        %v1341 = vadd.f32 0.0, %v1340
        %v1342 = vpop.f32.mrb[0].mxu0
        %1343 = vmatprep.mubr.f32.mxu0 0.0
        %1344 = vmatmul.mubr.f32.gmra.mrb[0].mxu0 %v659
        %v1345 = vpop.f32.mrb[0].mxu0
        %v1346 = vadd.f32 0.0, %v1345
        %v1347 = vpop.f32.mrb[0].mxu0
        %1348 = vmatprep.mubr.f32.mxu0 0.0
        %1349 = vmatmul.mubr.f32.gmra.mrb[0].mxu0 %v662
        %v1350 = vpop.f32.mrb[0].mxu0
        %v1351 = vadd.f32 0.0, %v1350
        %v1352 = vpop.f32.mrb[0].mxu0
        %1353 = vmatprep.mubr.f32.mxu0 0.0
        %1354 = vmatmul.mubr.f32.gmra.mrb[0].mxu0 %v665
        %v1355 = vpop.f32.mrb[0].mxu0
        %v1356 = vpop.f32.mrb[0].mxu0
        %1357 = vdwg.mxu0
        %v1358 = vld [vmem:[%s976] sm:$0x7f]
        %v1359 = vld [vmem:[%s976 + $0x8] sm:$0x7f]
        %v1360 = vld [vmem:[%s976 + $0x10] sm:$0x7f]
        %v1361 = vld [vmem:[%s976 + $0x18] sm:$0x7f]
        %v1362 = vld [vmem:[%s976 + $0x20] sm:$0x7f]
        %v1363 = vld [vmem:[%s976 + $0x28] sm:$0x7f]
        %v1364 = vld [vmem:[%s976 + $0x30] sm:$0x7f]
        %v1365 = vld [vmem:[%s976 + $0x40] sm:$0x7f]
        %v1366 = vld [vmem:[%s976 + $0x48] sm:$0x7f]
        %v1367 = vld [vmem:[%s976 + $0x50] sm:$0x7f]
        %v1368 = vld [vmem:[%s976 + $0x58] sm:$0x7f]
        %v1369 = vld [vmem:[%s976 + $0x60] sm:$0x7f]
        %v1370 = vld [vmem:[%s976 + $0x68] sm:$0x7f]
        %v1371 = vld [vmem:[%s976 + $0x70] sm:$0x7f]
        %v1386 = vrot.slane %v1282, 1
        %v1387 = vrot.slane %v1287, 1
        %v1388 = vrot.slane %v1292, 1
        %v1389 = vrot.slane %v1297, 1
        %v1390 = vrot.slane %v1302, 1
        %v1391 = vrot.slane %v1307, 1
        %v1392 = vrot.slane %v1312, 1
        %v1393 = vrot.slane %v1321, 1
        %v1394 = vrot.slane %v1326, 1
        %v1395 = vrot.slane %v1331, 1
        %v1396 = vrot.slane %v1336, 1
        %v1397 = vrot.slane %v1341, 1
        %v1398 = vrot.slane %v1346, 1
        %v1399 = vrot.slane %v1351, 1
        %v1414 = vadd.f32 %v1358, %v1386
        %v1415 = vadd.f32 %v1359, %v1387
        %v1416 = vadd.f32 %v1360, %v1388
        %v1417 = vadd.f32 %v1361, %v1389
        %v1418 = vadd.f32 %v1362, %v1390
        %v1419 = vadd.f32 %v1363, %v1391
        %v1420 = vadd.f32 %v1364, %v1392
        %v1421 = vadd.f32 %v1365, %v1393
        %v1422 = vadd.f32 %v1366, %v1394
        %v1423 = vadd.f32 %v1367, %v1395
        %v1424 = vadd.f32 %v1368, %v1396
        %v1425 = vadd.f32 %v1369, %v1397
        %v1426 = vadd.f32 %v1370, %v1398
        %v1427 = vadd.f32 %v1371, %v1399
        %1428 = vst.msk [vmem:[%s976] sm:$0x7f] %vm1005, %v1414
        %1429 = vst.msk [vmem:[%s976 + $0x8] sm:$0x7f] %vm1005, %v1415
        %1430 = vst.msk [vmem:[%s976 + $0x10] sm:$0x7f] %vm1005, %v1416
        %1431 = vst.msk [vmem:[%s976 + $0x18] sm:$0x7f] %vm1005, %v1417
        %1432 = vst.msk [vmem:[%s976 + $0x20] sm:$0x7f] %vm1005, %v1418
        %1433 = vst.msk [vmem:[%s976 + $0x28] sm:$0x7f] %vm1005, %v1419
        %1434 = vst.msk [vmem:[%s976 + $0x30] sm:$0x7f] %vm1005, %v1420
        %1435 = vst.msk [vmem:[%s976 + $0x40] sm:$0x7f] %vm1005, %v1421
        %1436 = vst.msk [vmem:[%s976 + $0x48] sm:$0x7f] %vm1005, %v1422
        %1437 = vst.msk [vmem:[%s976 + $0x50] sm:$0x7f] %vm1005, %v1423
        %1438 = vst.msk [vmem:[%s976 + $0x58] sm:$0x7f] %vm1005, %v1424
        %1439 = vst.msk [vmem:[%s976 + $0x60] sm:$0x7f] %vm1005, %v1425
        %1440 = vst.msk [vmem:[%s976 + $0x68] sm:$0x7f] %vm1005, %v1426
        %1441 = vst.msk [vmem:[%s976 + $0x70] sm:$0x7f] %vm1005, %v1427
        %s1442 = scalar_lea.vmem [#allocation9], 96
        %v1443 = vld [vmem:[%s1442] sm:$0xff]
        %v1444 = vld [vmem:[%s1442 + $0x8] sm:$0xff]
        %v1445 = vld [vmem:[%s1442 + $0x10] sm:$0xff]
        %v1446 = vld [vmem:[%s1442 + $0x18] sm:$0xff]
        %1447 = vmatprep.subr.mxu0 0.0
        %1448 = vmatpush1.msra.mxu0 %v1443
        %1449 = vmatprep.subr.mxu0 0.0
        %1450 = vmatpush1.msra.mxu0 %v1444
        %1451 = vmatprep.subr.mxu0 0.0
        %1452 = vmatpush1.msra.mxu0 %v1445
        %1453 = vmatprep.subr.mxu0 0.0
        %1454 = vmatpush1.msra.mxu0 %v1446
        %1455 = vmatprep.subr.mxu0 0.0
        %1456 = vmatpush1.msra.mxu0 0.0
        %1457 = vmatprep.subr.mxu0 0.0
        %1458 = vmatpush1.msra.mxu0 0.0
        %1459 = vmatprep.subr.mxu0 0.0
        %1460 = vmatpush1.msra.mxu0 0.0
        %1461 = vmatprep.subr.mxu0 0.0
        %1462 = vmatpush1.msra.mxu0 0.0
        %1463 = vmatprep.subr.mxu0 0.0
        %1464 = vmatpush1.msra.mxu0 0.0
        %1465 = vmatprep.subr.mxu0 0.0
        %1466 = vmatpush1.msra.mxu0 0.0
        %1467 = vmatprep.subr.mxu0 0.0
        %1468 = vmatpush1.msra.mxu0 0.0
        %1469 = vmatprep.subr.mxu0 0.0
        %1470 = vmatpush1.msra.mxu0 0.0
        %1471 = vmatprep.subr.mxu0 0.0
        %1472 = vmatpush1.msra.mxu0 0.0
        %1473 = vmatprep.subr.mxu0 0.0
        %1474 = vmatpush1.msra.mxu0 0.0
        %1475 = vmatprep.subr.mxu0 0.0
        %1476 = vmatpush1.msra.mxu0 0.0
        %1477 = vmatprep.subr.mxu0 0.0
        %1478 = vmatpush1.msra.mxu0 0.0
        %1479 = vmatprep.subr.mxu0 0.0
        %1480 = vmatpush1.msra.mxu0 0.0
        %1481 = vmatprep.subr.mxu0 0.0
        %1482 = vmatpush1.msra.mxu0 0.0
        %1483 = vmatprep.subr.mxu0 0.0
        %1484 = vmatpush1.msra.mxu0 0.0
        %1485 = vmatprep.subr.mxu0 0.0
        %1486 = vmatpush1.msra.mxu0 0.0
        %1487 = vmatprep.subr.mxu0 0.0
        %1488 = vmatpush1.msra.mxu0 0.0
        %1489 = vmatprep.subr.mxu0 0.0
        %1490 = vmatpush1.msra.mxu0 0.0
        %1491 = vmatprep.subr.mxu0 0.0
        %1492 = vmatpush1.msra.mxu0 0.0
        %1493 = vmatprep.subr.mxu0 0.0
        %1494 = vmatpush1.msra.mxu0 0.0
        %1495 = vmatprep.subr.mxu0 0.0
        %1496 = vmatpush1.msra.mxu0 0.0
        %1497 = vmatprep.subr.mxu0 0.0
        %1498 = vmatpush1.msra.mxu0 0.0
        %1499 = vmatprep.subr.mxu0 0.0
        %1500 = vmatpush1.msra.mxu0 0.0
        %1501 = vmatprep.subr.mxu0 0.0
        %1502 = vmatpush1.msra.mxu0 0.0
        %1503 = vmatprep.subr.mxu0 0.0
        %1504 = vmatpush1.msra.mxu0 0.0
        %1505 = vmatprep.subr.mxu0 0.0
        %1506 = vmatpush1.msra.mxu0 0.0
        %1507 = vmatprep.subr.mxu0 0.0
        %1508 = vmatpush1.msra.mxu0 0.0
        %1509 = vmatprep.subr.mxu0 0.0
        %1510 = vmatpush1.msra.mxu0 0.0
        %1511 = vmatprep.mubr.f32.mxu0 0.0
        %1512 = vmatmul.mubr.f32.gmra.mrb[0].mxu0 %v620
        %v1513 = vpop.f32.mrb[0].mxu0
        %v1514 = vadd.f32 0.0, %v1513
        %v1515 = vpop.f32.mrb[0].mxu0
        %1516 = vmatprep.mubr.f32.mxu0 0.0
        %1517 = vmatmul.mubr.f32.gmra.mrb[0].mxu0 %v623
        %v1518 = vpop.f32.mrb[0].mxu0
        %v1519 = vadd.f32 0.0, %v1518
        %v1520 = vpop.f32.mrb[0].mxu0
        %1521 = vmatprep.mubr.f32.mxu0 0.0
        %1522 = vmatmul.mubr.f32.gmra.mrb[0].mxu0 %v626
        %v1523 = vpop.f32.mrb[0].mxu0
        %v1524 = vadd.f32 0.0, %v1523
        %v1525 = vpop.f32.mrb[0].mxu0
        %1526 = vmatprep.mubr.f32.mxu0 0.0
        %1527 = vmatmul.mubr.f32.gmra.mrb[0].mxu0 %v629
        %v1528 = vpop.f32.mrb[0].mxu0
        %v1529 = vadd.f32 0.0, %v1528
        %v1530 = vpop.f32.mrb[0].mxu0
        %1531 = vmatprep.mubr.f32.mxu0 0.0
        %1532 = vmatmul.mubr.f32.gmra.mrb[0].mxu0 %v632
        %v1533 = vpop.f32.mrb[0].mxu0
        %v1534 = vadd.f32 0.0, %v1533
        %v1535 = vpop.f32.mrb[0].mxu0
        %1536 = vmatprep.mubr.f32.mxu0 0.0
        %1537 = vmatmul.mubr.f32.gmra.mrb[0].mxu0 %v635
        %v1538 = vpop.f32.mrb[0].mxu0
        %v1539 = vadd.f32 0.0, %v1538
        %v1540 = vpop.f32.mrb[0].mxu0
        %1541 = vmatprep.mubr.f32.mxu0 0.0
        %1542 = vmatmul.mubr.f32.gmra.mrb[0].mxu0 %v638
        %v1543 = vpop.f32.mrb[0].mxu0
        %v1544 = vadd.f32 0.0, %v1543
        %v1545 = vpop.f32.mrb[0].mxu0
        %1546 = vmatprep.mubr.f32.mxu0 0.0
        %1547 = vmatmul.mubr.f32.gmra.mrb[0].mxu0 %v641
        %v1548 = vpop.f32.mrb[0].mxu0
        %v1549 = vadd.f32 0.0, %v1548
        %v1550 = vpop.f32.mrb[0].mxu0
        %1551 = vmatprep.mubr.f32.mxu0 0.0
        %1552 = vmatmul.mubr.f32.gmra.mrb[0].mxu0 %v644
        %v1553 = vpop.f32.mrb[0].mxu0
        %v1554 = vadd.f32 0.0, %v1553
        %v1555 = vpop.f32.mrb[0].mxu0
        %1556 = vmatprep.mubr.f32.mxu0 0.0
        %1557 = vmatmul.mubr.f32.gmra.mrb[0].mxu0 %v647
        %v1558 = vpop.f32.mrb[0].mxu0
        %v1559 = vadd.f32 0.0, %v1558
        %v1560 = vpop.f32.mrb[0].mxu0
        %1561 = vmatprep.mubr.f32.mxu0 0.0
        %1562 = vmatmul.mubr.f32.gmra.mrb[0].mxu0 %v650
        %v1563 = vpop.f32.mrb[0].mxu0
        %v1564 = vadd.f32 0.0, %v1563
        %v1565 = vpop.f32.mrb[0].mxu0
        %1566 = vmatprep.mubr.f32.mxu0 0.0
        %1567 = vmatmul.mubr.f32.gmra.mrb[0].mxu0 %v653
        %v1568 = vpop.f32.mrb[0].mxu0
        %v1569 = vadd.f32 0.0, %v1568
        %v1570 = vpop.f32.mrb[0].mxu0
        %1571 = vmatprep.mubr.f32.mxu0 0.0
        %1572 = vmatmul.mubr.f32.gmra.mrb[0].mxu0 %v656
        %v1573 = vpop.f32.mrb[0].mxu0
        %v1574 = vadd.f32 0.0, %v1573
        %v1575 = vpop.f32.mrb[0].mxu0
        %1576 = vmatprep.mubr.f32.mxu0 0.0
        %1577 = vmatmul.mubr.f32.gmra.mrb[0].mxu0 %v659
        %v1578 = vpop.f32.mrb[0].mxu0
        %v1579 = vadd.f32 0.0, %v1578
        %v1580 = vpop.f32.mrb[0].mxu0
        %1581 = vmatprep.mubr.f32.mxu0 0.0
        %1582 = vmatmul.mubr.f32.gmra.mrb[0].mxu0 %v662
        %v1583 = vpop.f32.mrb[0].mxu0
        %v1584 = vadd.f32 0.0, %v1583
        %v1585 = vpop.f32.mrb[0].mxu0
        %1586 = vmatprep.mubr.f32.mxu0 0.0
        %1587 = vmatmul.mubr.f32.gmra.mrb[0].mxu0 %v665
        %v1588 = vpop.f32.mrb[0].mxu0
        %v1589 = vadd.f32 0.0, %v1588
        %v1590 = vpop.f32.mrb[0].mxu0
        %1591 = vdwg.mxu0
        %v1592 = vld [vmem:[#allocation2 + $0x1] sm:$0x7f]
        %v1593 = vld [vmem:[#allocation2 + $0x9] sm:$0x7f]
        %v1594 = vld [vmem:[#allocation2 + $0x11] sm:$0x7f]
        %v1595 = vld [vmem:[#allocation2 + $0x19] sm:$0x7f]
        %v1596 = vld [vmem:[#allocation2 + $0x21] sm:$0x7f]
        %v1597 = vld [vmem:[#allocation2 + $0x29] sm:$0x7f]
        %v1598 = vld [vmem:[#allocation2 + $0x31] sm:$0x7f]
        %v1599 = vld [vmem:[#allocation2 + $0x39] sm:$0x7f]
        %v1600 = vld [vmem:[#allocation2 + $0x41] sm:$0x7f]
        %v1601 = vld [vmem:[#allocation2 + $0x49] sm:$0x7f]
        %v1602 = vld [vmem:[#allocation2 + $0x51] sm:$0x7f]
        %v1603 = vld [vmem:[#allocation2 + $0x59] sm:$0x7f]
        %v1604 = vld [vmem:[#allocation2 + $0x61] sm:$0x7f]
        %v1605 = vld [vmem:[#allocation2 + $0x69] sm:$0x7f]
        %v1606 = vld [vmem:[#allocation2 + $0x71] sm:$0x7f]
        %v1607 = vld [vmem:[#allocation2 + $0x79] sm:$0x7f]
        %v1608 = vadd.f32 %v1592, %v1514
        %v1609 = vadd.f32 %v1593, %v1519
        %v1610 = vadd.f32 %v1594, %v1524
        %v1611 = vadd.f32 %v1595, %v1529
        %v1612 = vadd.f32 %v1596, %v1534
        %v1613 = vadd.f32 %v1597, %v1539
        %v1614 = vadd.f32 %v1598, %v1544
        %v1615 = vadd.f32 %v1599, %v1549
        %v1616 = vadd.f32 %v1600, %v1554
        %v1617 = vadd.f32 %v1601, %v1559
        %v1618 = vadd.f32 %v1602, %v1564
        %v1619 = vadd.f32 %v1603, %v1569
        %v1620 = vadd.f32 %v1604, %v1574
        %v1621 = vadd.f32 %v1605, %v1579
        %v1622 = vadd.f32 %v1606, %v1584
        %v1623 = vadd.f32 %v1607, %v1589
        %1624 = vst.msk [vmem:[#allocation2 + $0x1] sm:$0x7f] %vm1005, %v1608
        %1625 = vst.msk [vmem:[#allocation2 + $0x9] sm:$0x7f] %vm1005, %v1609
        %1626 = vst.msk [vmem:[#allocation2 + $0x11] sm:$0x7f] %vm1005, %v1610
        %1627 = vst.msk [vmem:[#allocation2 + $0x19] sm:$0x7f] %vm1005, %v1611
        %1628 = vst.msk [vmem:[#allocation2 + $0x21] sm:$0x7f] %vm1005, %v1612
        %1629 = vst.msk [vmem:[#allocation2 + $0x29] sm:$0x7f] %vm1005, %v1613
        %1630 = vst.msk [vmem:[#allocation2 + $0x31] sm:$0x7f] %vm1005, %v1614
        %1631 = vst.msk [vmem:[#allocation2 + $0x39] sm:$0x7f] %vm1005, %v1615
        %1632 = vst.msk [vmem:[#allocation2 + $0x41] sm:$0x7f] %vm1005, %v1616
        %1633 = vst.msk [vmem:[#allocation2 + $0x49] sm:$0x7f] %vm1005, %v1617
        %1634 = vst.msk [vmem:[#allocation2 + $0x51] sm:$0x7f] %vm1005, %v1618
        %1635 = vst.msk [vmem:[#allocation2 + $0x59] sm:$0x7f] %vm1005, %v1619
        %1636 = vst.msk [vmem:[#allocation2 + $0x61] sm:$0x7f] %vm1005, %v1620
        %1637 = vst.msk [vmem:[#allocation2 + $0x69] sm:$0x7f] %vm1005, %v1621
        %1638 = vst.msk [vmem:[#allocation2 + $0x71] sm:$0x7f] %vm1005, %v1622
        %1639 = vst.msk [vmem:[#allocation2 + $0x79] sm:$0x7f] %vm1005, %v1623
        %s1640 = scalar_lea.vmem [#allocation9], 160
        %v1641 = vld [vmem:[%s1640] sm:$0xff]
        %v1642 = vld [vmem:[%s1640 + $0x8] sm:$0xff]
        %v1643 = vld [vmem:[%s1640 + $0x10] sm:$0xff]
        %v1644 = vld [vmem:[%s1640 + $0x18] sm:$0xff]
        %1645 = vmatprep.subr.mxu0 0.0
        %1646 = vmatpush1.msra.mxu0 %v1641
        %1647 = vmatprep.subr.mxu0 0.0
        %1648 = vmatpush1.msra.mxu0 %v1642
        %1649 = vmatprep.subr.mxu0 0.0
        %1650 = vmatpush1.msra.mxu0 %v1643
        %1651 = vmatprep.subr.mxu0 0.0
        %1652 = vmatpush1.msra.mxu0 %v1644
        %1653 = vmatprep.subr.mxu0 0.0
        %1654 = vmatpush1.msra.mxu0 0.0
        %1655 = vmatprep.subr.mxu0 0.0
        %1656 = vmatpush1.msra.mxu0 0.0
        %1657 = vmatprep.subr.mxu0 0.0
        %1658 = vmatpush1.msra.mxu0 0.0
        %1659 = vmatprep.subr.mxu0 0.0
        %1660 = vmatpush1.msra.mxu0 0.0
        %1661 = vmatprep.subr.mxu0 0.0
        %1662 = vmatpush1.msra.mxu0 0.0
        %1663 = vmatprep.subr.mxu0 0.0
        %1664 = vmatpush1.msra.mxu0 0.0
        %1665 = vmatprep.subr.mxu0 0.0
        %1666 = vmatpush1.msra.mxu0 0.0
        %1667 = vmatprep.subr.mxu0 0.0
        %1668 = vmatpush1.msra.mxu0 0.0
        %1669 = vmatprep.subr.mxu0 0.0
        %1670 = vmatpush1.msra.mxu0 0.0
        %1671 = vmatprep.subr.mxu0 0.0
        %1672 = vmatpush1.msra.mxu0 0.0
        %1673 = vmatprep.subr.mxu0 0.0
        %1674 = vmatpush1.msra.mxu0 0.0
        %1675 = vmatprep.subr.mxu0 0.0
        %1676 = vmatpush1.msra.mxu0 0.0
        %1677 = vmatprep.subr.mxu0 0.0
        %1678 = vmatpush1.msra.mxu0 0.0
        %1679 = vmatprep.subr.mxu0 0.0
        %1680 = vmatpush1.msra.mxu0 0.0
        %1681 = vmatprep.subr.mxu0 0.0
        %1682 = vmatpush1.msra.mxu0 0.0
        %1683 = vmatprep.subr.mxu0 0.0
        %1684 = vmatpush1.msra.mxu0 0.0
        %1685 = vmatprep.subr.mxu0 0.0
        %1686 = vmatpush1.msra.mxu0 0.0
        %1687 = vmatprep.subr.mxu0 0.0
        %1688 = vmatpush1.msra.mxu0 0.0
        %1689 = vmatprep.subr.mxu0 0.0
        %1690 = vmatpush1.msra.mxu0 0.0
        %1691 = vmatprep.subr.mxu0 0.0
        %1692 = vmatpush1.msra.mxu0 0.0
        %1693 = vmatprep.subr.mxu0 0.0
        %1694 = vmatpush1.msra.mxu0 0.0
        %1695 = vmatprep.subr.mxu0 0.0
        %1696 = vmatpush1.msra.mxu0 0.0
        %1697 = vmatprep.subr.mxu0 0.0
        %1698 = vmatpush1.msra.mxu0 0.0
        %1699 = vmatprep.subr.mxu0 0.0
        %1700 = vmatpush1.msra.mxu0 0.0
        %1701 = vmatprep.subr.mxu0 0.0
        %1702 = vmatpush1.msra.mxu0 0.0
        %1703 = vmatprep.subr.mxu0 0.0
        %1704 = vmatpush1.msra.mxu0 0.0
        %1705 = vmatprep.subr.mxu0 0.0
        %1706 = vmatpush1.msra.mxu0 0.0
        %1707 = vmatprep.subr.mxu0 0.0
        %1708 = vmatpush1.msra.mxu0 0.0
        %1709 = vmatprep.mubr.f32.mxu0 0.0
        %1710 = vmatmul.mubr.f32.gmra.mrb[0].mxu0 %v620
        %v1711 = vpop.f32.mrb[0].mxu0
        %v1712 = vadd.f32 0.0, %v1711
        %v1713 = vpop.f32.mrb[0].mxu0
        %1714 = vmatprep.mubr.f32.mxu0 0.0
        %1715 = vmatmul.mubr.f32.gmra.mrb[0].mxu0 %v623
        %v1716 = vpop.f32.mrb[0].mxu0
        %v1717 = vadd.f32 0.0, %v1716
        %v1718 = vpop.f32.mrb[0].mxu0
        %1719 = vmatprep.mubr.f32.mxu0 0.0
        %1720 = vmatmul.mubr.f32.gmra.mrb[0].mxu0 %v626
        %v1721 = vpop.f32.mrb[0].mxu0
        %v1722 = vadd.f32 0.0, %v1721
        %v1723 = vpop.f32.mrb[0].mxu0
        %1724 = vmatprep.mubr.f32.mxu0 0.0
        %1725 = vmatmul.mubr.f32.gmra.mrb[0].mxu0 %v629
        %v1726 = vpop.f32.mrb[0].mxu0
        %v1727 = vadd.f32 0.0, %v1726
        %v1728 = vpop.f32.mrb[0].mxu0
        %1729 = vmatprep.mubr.f32.mxu0 0.0
        %1730 = vmatmul.mubr.f32.gmra.mrb[0].mxu0 %v632
        %v1731 = vpop.f32.mrb[0].mxu0
        %v1732 = vadd.f32 0.0, %v1731
        %v1733 = vpop.f32.mrb[0].mxu0
        %1734 = vmatprep.mubr.f32.mxu0 0.0
        %1735 = vmatmul.mubr.f32.gmra.mrb[0].mxu0 %v635
        %v1736 = vpop.f32.mrb[0].mxu0
        %v1737 = vadd.f32 0.0, %v1736
        %v1738 = vpop.f32.mrb[0].mxu0
        %1739 = vmatprep.mubr.f32.mxu0 0.0
        %1740 = vmatmul.mubr.f32.gmra.mrb[0].mxu0 %v638
        %v1741 = vpop.f32.mrb[0].mxu0
        %v1742 = vadd.f32 0.0, %v1741
        %v1743 = vpop.f32.mrb[0].mxu0
        %1744 = vmatprep.mubr.f32.mxu0 0.0
        %1745 = vmatmul.mubr.f32.gmra.mrb[0].mxu0 %v641
        %v1746 = vpop.f32.mrb[0].mxu0
        %v1747 = vadd.f32 0.0, %v1746
        %v1748 = vpop.f32.mrb[0].mxu0
        %1749 = vmatprep.mubr.f32.mxu0 0.0
        %1750 = vmatmul.mubr.f32.gmra.mrb[0].mxu0 %v644
        %v1751 = vpop.f32.mrb[0].mxu0
        %v1752 = vadd.f32 0.0, %v1751
        %v1753 = vpop.f32.mrb[0].mxu0
        %1754 = vmatprep.mubr.f32.mxu0 0.0
        %1755 = vmatmul.mubr.f32.gmra.mrb[0].mxu0 %v647
        %v1756 = vpop.f32.mrb[0].mxu0
        %v1757 = vadd.f32 0.0, %v1756
        %v1758 = vpop.f32.mrb[0].mxu0
        %1759 = vmatprep.mubr.f32.mxu0 0.0
        %1760 = vmatmul.mubr.f32.gmra.mrb[0].mxu0 %v650
        %v1761 = vpop.f32.mrb[0].mxu0
        %v1762 = vadd.f32 0.0, %v1761
        %v1763 = vpop.f32.mrb[0].mxu0
        %1764 = vmatprep.mubr.f32.mxu0 0.0
        %1765 = vmatmul.mubr.f32.gmra.mrb[0].mxu0 %v653
        %v1766 = vpop.f32.mrb[0].mxu0
        %v1767 = vadd.f32 0.0, %v1766
        %v1768 = vpop.f32.mrb[0].mxu0
        %1769 = vmatprep.mubr.f32.mxu0 0.0
        %1770 = vmatmul.mubr.f32.gmra.mrb[0].mxu0 %v656
        %v1771 = vpop.f32.mrb[0].mxu0
        %v1772 = vadd.f32 0.0, %v1771
        %v1773 = vpop.f32.mrb[0].mxu0
        %1774 = vmatprep.mubr.f32.mxu0 0.0
        %1775 = vmatmul.mubr.f32.gmra.mrb[0].mxu0 %v659
        %v1776 = vpop.f32.mrb[0].mxu0
        %v1777 = vadd.f32 0.0, %v1776
        %v1778 = vpop.f32.mrb[0].mxu0
        %1779 = vmatprep.mubr.f32.mxu0 0.0
        %1780 = vmatmul.mubr.f32.gmra.mrb[0].mxu0 %v662
        %v1781 = vpop.f32.mrb[0].mxu0
        %v1782 = vadd.f32 0.0, %v1781
        %v1783 = vpop.f32.mrb[0].mxu0
        %1784 = vmatprep.mubr.f32.mxu0 0.0
        %1785 = vmatmul.mubr.f32.gmra.mrb[0].mxu0 %v665
        %v1786 = vpop.f32.mrb[0].mxu0
        %v1787 = vadd.f32 0.0, %v1786
        %v1788 = vpop.f32.mrb[0].mxu0
        %1789 = vdwg.mxu0
        %v1790 = vld [vmem:[#allocation2] sm:$0x7f]
        %v1791 = vld [vmem:[#allocation2 + $0x8] sm:$0x7f]
        %v1792 = vld [vmem:[#allocation2 + $0x10] sm:$0x7f]
        %v1793 = vld [vmem:[#allocation2 + $0x18] sm:$0x7f]
        %v1794 = vld [vmem:[#allocation2 + $0x20] sm:$0x7f]
        %v1795 = vld [vmem:[#allocation2 + $0x28] sm:$0x7f]
        %v1796 = vld [vmem:[#allocation2 + $0x30] sm:$0x7f]
        %v1797 = vld [vmem:[#allocation2 + $0x38] sm:$0x7f]
        %v1798 = vld [vmem:[#allocation2 + $0x40] sm:$0x7f]
        %v1799 = vld [vmem:[#allocation2 + $0x48] sm:$0x7f]
        %v1800 = vld [vmem:[#allocation2 + $0x50] sm:$0x7f]
        %v1801 = vld [vmem:[#allocation2 + $0x58] sm:$0x7f]
        %v1802 = vld [vmem:[#allocation2 + $0x60] sm:$0x7f]
        %v1803 = vld [vmem:[#allocation2 + $0x68] sm:$0x7f]
        %v1804 = vld [vmem:[#allocation2 + $0x70] sm:$0x7f]
        %v1805 = vld [vmem:[#allocation2 + $0x78] sm:$0x7f]
        %v1822 = vrot.slane %v1712, 1
        %v1823 = vrot.slane %v1717, 1
        %v1824 = vrot.slane %v1722, 1
        %v1825 = vrot.slane %v1727, 1
        %v1826 = vrot.slane %v1732, 1
        %v1827 = vrot.slane %v1737, 1
        %v1828 = vrot.slane %v1742, 1
        %v1829 = vrot.slane %v1747, 1
        %v1830 = vrot.slane %v1752, 1
        %v1831 = vrot.slane %v1757, 1
        %v1832 = vrot.slane %v1762, 1
        %v1833 = vrot.slane %v1767, 1
        %v1834 = vrot.slane %v1772, 1
        %v1835 = vrot.slane %v1777, 1
        %v1836 = vrot.slane %v1782, 1
        %v1837 = vrot.slane %v1787, 1
        %v1854 = vadd.f32 %v1790, %v1822
        %v1855 = vadd.f32 %v1791, %v1823
        %v1856 = vadd.f32 %v1792, %v1824
        %v1857 = vadd.f32 %v1793, %v1825
        %v1858 = vadd.f32 %v1794, %v1826
        %v1859 = vadd.f32 %v1795, %v1827
        %v1860 = vadd.f32 %v1796, %v1828
        %v1861 = vadd.f32 %v1797, %v1829
        %v1862 = vadd.f32 %v1798, %v1830
        %v1863 = vadd.f32 %v1799, %v1831
        %v1864 = vadd.f32 %v1800, %v1832
        %v1865 = vadd.f32 %v1801, %v1833
        %v1866 = vadd.f32 %v1802, %v1834
        %v1867 = vadd.f32 %v1803, %v1835
        %v1868 = vadd.f32 %v1804, %v1836
        %v1869 = vadd.f32 %v1805, %v1837
        %1870 = vst.msk [vmem:[#allocation2] sm:$0x7f] %vm1005, %v1854
        %1871 = vst.msk [vmem:[#allocation2 + $0x8] sm:$0x7f] %vm1005, %v1855
        %1872 = vst.msk [vmem:[#allocation2 + $0x10] sm:$0x7f] %vm1005, %v1856
        %1873 = vst.msk [vmem:[#allocation2 + $0x18] sm:$0x7f] %vm1005, %v1857
        %1874 = vst.msk [vmem:[#allocation2 + $0x20] sm:$0x7f] %vm1005, %v1858
        %1875 = vst.msk [vmem:[#allocation2 + $0x28] sm:$0x7f] %vm1005, %v1859
        %1876 = vst.msk [vmem:[#allocation2 + $0x30] sm:$0x7f] %vm1005, %v1860
        %1877 = vst.msk [vmem:[#allocation2 + $0x38] sm:$0x7f] %vm1005, %v1861
        %1878 = vst.msk [vmem:[#allocation2 + $0x40] sm:$0x7f] %vm1005, %v1862
        %1879 = vst.msk [vmem:[#allocation2 + $0x48] sm:$0x7f] %vm1005, %v1863
        %1880 = vst.msk [vmem:[#allocation2 + $0x50] sm:$0x7f] %vm1005, %v1864
        %1881 = vst.msk [vmem:[#allocation2 + $0x58] sm:$0x7f] %vm1005, %v1865
        %1882 = vst.msk [vmem:[#allocation2 + $0x60] sm:$0x7f] %vm1005, %v1866
        %1883 = vst.msk [vmem:[#allocation2 + $0x68] sm:$0x7f] %vm1005, %v1867
        %1884 = vst.msk [vmem:[#allocation2 + $0x70] sm:$0x7f] %vm1005, %v1868
        %1885 = vst.msk [vmem:[#allocation2 + $0x78] sm:$0x7f] %vm1005, %v1869
        %s1886 = scalar_lea.vmem [#allocation9], 192
        %v1887 = vld [vmem:[%s1886] sm:$0xff]
        %v1888 = vld [vmem:[%s1886 + $0x8] sm:$0xff]
        %v1889 = vld [vmem:[%s1886 + $0x10] sm:$0xff]
        %v1890 = vld [vmem:[%s1886 + $0x18] sm:$0xff]
        %1891 = vmatprep.subr.mxu0 0.0
        %1892 = vmatpush1.msra.mxu0 %v1887
        %1893 = vmatprep.subr.mxu0 0.0
        %1894 = vmatpush1.msra.mxu0 %v1888
        %1895 = vmatprep.subr.mxu0 0.0
        %1896 = vmatpush1.msra.mxu0 %v1889
        %1897 = vmatprep.subr.mxu0 0.0
        %1898 = vmatpush1.msra.mxu0 %v1890
        %1899 = vmatprep.subr.mxu0 0.0
        %1900 = vmatpush1.msra.mxu0 0.0
        %1901 = vmatprep.subr.mxu0 0.0
        %1902 = vmatpush1.msra.mxu0 0.0
        %1903 = vmatprep.subr.mxu0 0.0
        %1904 = vmatpush1.msra.mxu0 0.0
        %1905 = vmatprep.subr.mxu0 0.0
        %1906 = vmatpush1.msra.mxu0 0.0
        %1907 = vmatprep.subr.mxu0 0.0
        %1908 = vmatpush1.msra.mxu0 0.0
        %1909 = vmatprep.subr.mxu0 0.0
        %1910 = vmatpush1.msra.mxu0 0.0
        %1911 = vmatprep.subr.mxu0 0.0
        %1912 = vmatpush1.msra.mxu0 0.0
        %1913 = vmatprep.subr.mxu0 0.0
        %1914 = vmatpush1.msra.mxu0 0.0
        %1915 = vmatprep.subr.mxu0 0.0
        %1916 = vmatpush1.msra.mxu0 0.0
        %1917 = vmatprep.subr.mxu0 0.0
        %1918 = vmatpush1.msra.mxu0 0.0
        %1919 = vmatprep.subr.mxu0 0.0
        %1920 = vmatpush1.msra.mxu0 0.0
        %1921 = vmatprep.subr.mxu0 0.0
        %1922 = vmatpush1.msra.mxu0 0.0
        %1923 = vmatprep.subr.mxu0 0.0
        %1924 = vmatpush1.msra.mxu0 0.0
        %1925 = vmatprep.subr.mxu0 0.0
        %1926 = vmatpush1.msra.mxu0 0.0
        %1927 = vmatprep.subr.mxu0 0.0
        %1928 = vmatpush1.msra.mxu0 0.0
        %1929 = vmatprep.subr.mxu0 0.0
        %1930 = vmatpush1.msra.mxu0 0.0
        %1931 = vmatprep.subr.mxu0 0.0
        %1932 = vmatpush1.msra.mxu0 0.0
        %1933 = vmatprep.subr.mxu0 0.0
        %1934 = vmatpush1.msra.mxu0 0.0
        %1935 = vmatprep.subr.mxu0 0.0
        %1936 = vmatpush1.msra.mxu0 0.0
        %1937 = vmatprep.subr.mxu0 0.0
        %1938 = vmatpush1.msra.mxu0 0.0
        %1939 = vmatprep.subr.mxu0 0.0
        %1940 = vmatpush1.msra.mxu0 0.0
        %1941 = vmatprep.subr.mxu0 0.0
        %1942 = vmatpush1.msra.mxu0 0.0
        %1943 = vmatprep.subr.mxu0 0.0
        %1944 = vmatpush1.msra.mxu0 0.0
        %1945 = vmatprep.subr.mxu0 0.0
        %1946 = vmatpush1.msra.mxu0 0.0
        %1947 = vmatprep.subr.mxu0 0.0
        %1948 = vmatpush1.msra.mxu0 0.0
        %1949 = vmatprep.subr.mxu0 0.0
        %1950 = vmatpush1.msra.mxu0 0.0
        %1951 = vmatprep.subr.mxu0 0.0
        %1952 = vmatpush1.msra.mxu0 0.0
        %1953 = vmatprep.subr.mxu0 0.0
        %1954 = vmatpush1.msra.mxu0 0.0
        %1955 = vmatprep.mubr.f32.mxu0 0.0
        %1956 = vmatmul.mubr.f32.gmra.mrb[0].mxu0 %v620
        %v1957 = vpop.f32.mrb[0].mxu0
        %v1958 = vpop.f32.mrb[0].mxu0
        %1959 = vmatprep.mubr.f32.mxu0 0.0
        %1960 = vmatmul.mubr.f32.gmra.mrb[0].mxu0 %v623
        %v1961 = vpop.f32.mrb[0].mxu0
        %v1962 = vadd.f32 0.0, %v1961
        %v1963 = vpop.f32.mrb[0].mxu0
        %1964 = vmatprep.mubr.f32.mxu0 0.0
        %1965 = vmatmul.mubr.f32.gmra.mrb[0].mxu0 %v626
        %v1966 = vpop.f32.mrb[0].mxu0
        %v1967 = vadd.f32 0.0, %v1966
        %v1968 = vpop.f32.mrb[0].mxu0
        %1969 = vmatprep.mubr.f32.mxu0 0.0
        %1970 = vmatmul.mubr.f32.gmra.mrb[0].mxu0 %v629
        %v1971 = vpop.f32.mrb[0].mxu0
        %v1972 = vadd.f32 0.0, %v1971
        %v1973 = vpop.f32.mrb[0].mxu0
        %1974 = vmatprep.mubr.f32.mxu0 0.0
        %1975 = vmatmul.mubr.f32.gmra.mrb[0].mxu0 %v632
        %v1976 = vpop.f32.mrb[0].mxu0
        %v1977 = vadd.f32 0.0, %v1976
        %v1978 = vpop.f32.mrb[0].mxu0
        %1979 = vmatprep.mubr.f32.mxu0 0.0
        %1980 = vmatmul.mubr.f32.gmra.mrb[0].mxu0 %v635
        %v1981 = vpop.f32.mrb[0].mxu0
        %v1982 = vadd.f32 0.0, %v1981
        %v1983 = vpop.f32.mrb[0].mxu0
        %1984 = vmatprep.mubr.f32.mxu0 0.0
        %1985 = vmatmul.mubr.f32.gmra.mrb[0].mxu0 %v638
        %v1986 = vpop.f32.mrb[0].mxu0
        %v1987 = vadd.f32 0.0, %v1986
        %v1988 = vpop.f32.mrb[0].mxu0
        %1989 = vmatprep.mubr.f32.mxu0 0.0
        %1990 = vmatmul.mubr.f32.gmra.mrb[0].mxu0 %v641
        %v1991 = vpop.f32.mrb[0].mxu0
        %v1992 = vadd.f32 0.0, %v1991
        %v1993 = vpop.f32.mrb[0].mxu0
        %1994 = vmatprep.mubr.f32.mxu0 0.0
        %1995 = vmatmul.mubr.f32.gmra.mrb[0].mxu0 %v644
        %v1996 = vpop.f32.mrb[0].mxu0
        %v1997 = vpop.f32.mrb[0].mxu0
        %1998 = vmatprep.mubr.f32.mxu0 0.0
        %1999 = vmatmul.mubr.f32.gmra.mrb[0].mxu0 %v647
        %v2000 = vpop.f32.mrb[0].mxu0
        %v2001 = vadd.f32 0.0, %v2000
        %v2002 = vpop.f32.mrb[0].mxu0
        %2003 = vmatprep.mubr.f32.mxu0 0.0
        %2004 = vmatmul.mubr.f32.gmra.mrb[0].mxu0 %v650
        %v2005 = vpop.f32.mrb[0].mxu0
        %v2006 = vadd.f32 0.0, %v2005
        %v2007 = vpop.f32.mrb[0].mxu0
        %2008 = vmatprep.mubr.f32.mxu0 0.0
        %2009 = vmatmul.mubr.f32.gmra.mrb[0].mxu0 %v653
        %v2010 = vpop.f32.mrb[0].mxu0
        %v2011 = vadd.f32 0.0, %v2010
        %v2012 = vpop.f32.mrb[0].mxu0
        %2013 = vmatprep.mubr.f32.mxu0 0.0
        %2014 = vmatmul.mubr.f32.gmra.mrb[0].mxu0 %v656
        %v2015 = vpop.f32.mrb[0].mxu0
        %v2016 = vadd.f32 0.0, %v2015
        %v2017 = vpop.f32.mrb[0].mxu0
        %2018 = vmatprep.mubr.f32.mxu0 0.0
        %2019 = vmatmul.mubr.f32.gmra.mrb[0].mxu0 %v659
        %v2020 = vpop.f32.mrb[0].mxu0
        %v2021 = vadd.f32 0.0, %v2020
        %v2022 = vpop.f32.mrb[0].mxu0
        %2023 = vmatprep.mubr.f32.mxu0 0.0
        %2024 = vmatmul.mubr.f32.gmra.mrb[0].mxu0 %v662
        %v2025 = vpop.f32.mrb[0].mxu0
        %v2026 = vadd.f32 0.0, %v2025
        %v2027 = vpop.f32.mrb[0].mxu0
        %2028 = vmatprep.mubr.f32.mxu0 0.0
        %2029 = vmatmul.mubr.f32.gmra.mrb[0].mxu0 %v665
        %v2030 = vpop.f32.mrb[0].mxu0
        %v2031 = vadd.f32 0.0, %v2030
        %v2032 = vpop.f32.mrb[0].mxu0
        %2033 = vdwg.mxu0
        %v2034 = vld [vmem:[#allocation2 + $0x1] sm:$0x7f]
        %v2035 = vld [vmem:[#allocation2 + $0x9] sm:$0x7f]
        %v2036 = vld [vmem:[#allocation2 + $0x11] sm:$0x7f]
        %v2037 = vld [vmem:[#allocation2 + $0x19] sm:$0x7f]
        %v2038 = vld [vmem:[#allocation2 + $0x21] sm:$0x7f]
        %v2039 = vld [vmem:[#allocation2 + $0x29] sm:$0x7f]
        %v2040 = vld [vmem:[#allocation2 + $0x31] sm:$0x7f]
        %v2041 = vld [vmem:[#allocation2 + $0x41] sm:$0x7f]
        %v2042 = vld [vmem:[#allocation2 + $0x49] sm:$0x7f]
        %v2043 = vld [vmem:[#allocation2 + $0x51] sm:$0x7f]
        %v2044 = vld [vmem:[#allocation2 + $0x59] sm:$0x7f]
        %v2045 = vld [vmem:[#allocation2 + $0x61] sm:$0x7f]
        %v2046 = vld [vmem:[#allocation2 + $0x69] sm:$0x7f]
        %v2047 = vld [vmem:[#allocation2 + $0x71] sm:$0x7f]
        %v2048 = vadd.f32 %v2034, %v1962
        %v2049 = vadd.f32 %v2035, %v1967
        %v2050 = vadd.f32 %v2036, %v1972
        %v2051 = vadd.f32 %v2037, %v1977
        %v2052 = vadd.f32 %v2038, %v1982
        %v2053 = vadd.f32 %v2039, %v1987
        %v2054 = vadd.f32 %v2040, %v1992
        %v2055 = vadd.f32 %v2041, %v2001
        %v2056 = vadd.f32 %v2042, %v2006
        %v2057 = vadd.f32 %v2043, %v2011
        %v2058 = vadd.f32 %v2044, %v2016
        %v2059 = vadd.f32 %v2045, %v2021
        %v2060 = vadd.f32 %v2046, %v2026
        %v2061 = vadd.f32 %v2047, %v2031
        %2062 = vst.msk [vmem:[#allocation2 + $0x1] sm:$0x7f] %vm1005, %v2048
        %2063 = vst.msk [vmem:[#allocation2 + $0x9] sm:$0x7f] %vm1005, %v2049
        %2064 = vst.msk [vmem:[#allocation2 + $0x11] sm:$0x7f] %vm1005, %v2050
        %2065 = vst.msk [vmem:[#allocation2 + $0x19] sm:$0x7f] %vm1005, %v2051
        %2066 = vst.msk [vmem:[#allocation2 + $0x21] sm:$0x7f] %vm1005, %v2052
        %2067 = vst.msk [vmem:[#allocation2 + $0x29] sm:$0x7f] %vm1005, %v2053
        %2068 = vst.msk [vmem:[#allocation2 + $0x31] sm:$0x7f] %vm1005, %v2054
        %2069 = vst.msk [vmem:[#allocation2 + $0x41] sm:$0x7f] %vm1005, %v2055
        %2070 = vst.msk [vmem:[#allocation2 + $0x49] sm:$0x7f] %vm1005, %v2056
        %2071 = vst.msk [vmem:[#allocation2 + $0x51] sm:$0x7f] %vm1005, %v2057
        %2072 = vst.msk [vmem:[#allocation2 + $0x59] sm:$0x7f] %vm1005, %v2058
        %2073 = vst.msk [vmem:[#allocation2 + $0x61] sm:$0x7f] %vm1005, %v2059
        %2074 = vst.msk [vmem:[#allocation2 + $0x69] sm:$0x7f] %vm1005, %v2060
        %2075 = vst.msk [vmem:[#allocation2 + $0x71] sm:$0x7f] %vm1005, %v2061
        %s2076 = scalar_lea.vmem [#allocation9], 224
        %v2077 = vld [vmem:[%s2076] sm:$0xff]
        %v2078 = vld [vmem:[%s2076 + $0x8] sm:$0xff]
        %v2079 = vld [vmem:[%s2076 + $0x10] sm:$0xff]
        %v2080 = vld [vmem:[%s2076 + $0x18] sm:$0xff]
        %2081 = vmatprep.subr.mxu0 0.0
        %2082 = vmatpush1.msra.mxu0 %v2077
        %2083 = vmatprep.subr.mxu0 0.0
        %2084 = vmatpush1.msra.mxu0 %v2078
        %2085 = vmatprep.subr.mxu0 0.0
        %2086 = vmatpush1.msra.mxu0 %v2079
        %2087 = vmatprep.subr.mxu0 0.0
        %2088 = vmatpush1.msra.mxu0 %v2080
        %2089 = vmatprep.subr.mxu0 0.0
        %2090 = vmatpush1.msra.mxu0 0.0
        %2091 = vmatprep.subr.mxu0 0.0
        %2092 = vmatpush1.msra.mxu0 0.0
        %2093 = vmatprep.subr.mxu0 0.0
        %2094 = vmatpush1.msra.mxu0 0.0
        %2095 = vmatprep.subr.mxu0 0.0
        %2096 = vmatpush1.msra.mxu0 0.0
        %2097 = vmatprep.subr.mxu0 0.0
        %2098 = vmatpush1.msra.mxu0 0.0
        %2099 = vmatprep.subr.mxu0 0.0
        %2100 = vmatpush1.msra.mxu0 0.0
        %2101 = vmatprep.subr.mxu0 0.0
        %2102 = vmatpush1.msra.mxu0 0.0
        %2103 = vmatprep.subr.mxu0 0.0
        %2104 = vmatpush1.msra.mxu0 0.0
        %2105 = vmatprep.subr.mxu0 0.0
        %2106 = vmatpush1.msra.mxu0 0.0
        %2107 = vmatprep.subr.mxu0 0.0
        %2108 = vmatpush1.msra.mxu0 0.0
        %2109 = vmatprep.subr.mxu0 0.0
        %2110 = vmatpush1.msra.mxu0 0.0
        %2111 = vmatprep.subr.mxu0 0.0
        %2112 = vmatpush1.msra.mxu0 0.0
        %2113 = vmatprep.subr.mxu0 0.0
        %2114 = vmatpush1.msra.mxu0 0.0
        %2115 = vmatprep.subr.mxu0 0.0
        %2116 = vmatpush1.msra.mxu0 0.0
        %2117 = vmatprep.subr.mxu0 0.0
        %2118 = vmatpush1.msra.mxu0 0.0
        %2119 = vmatprep.subr.mxu0 0.0
        %2120 = vmatpush1.msra.mxu0 0.0
        %2121 = vmatprep.subr.mxu0 0.0
        %2122 = vmatpush1.msra.mxu0 0.0
        %2123 = vmatprep.subr.mxu0 0.0
        %2124 = vmatpush1.msra.mxu0 0.0
        %2125 = vmatprep.subr.mxu0 0.0
        %2126 = vmatpush1.msra.mxu0 0.0
        %2127 = vmatprep.subr.mxu0 0.0
        %2128 = vmatpush1.msra.mxu0 0.0
        %2129 = vmatprep.subr.mxu0 0.0
        %2130 = vmatpush1.msra.mxu0 0.0
        %2131 = vmatprep.subr.mxu0 0.0
        %2132 = vmatpush1.msra.mxu0 0.0
        %2133 = vmatprep.subr.mxu0 0.0
        %2134 = vmatpush1.msra.mxu0 0.0
        %2135 = vmatprep.subr.mxu0 0.0
        %2136 = vmatpush1.msra.mxu0 0.0
        %2137 = vmatprep.subr.mxu0 0.0
        %2138 = vmatpush1.msra.mxu0 0.0
        %2139 = vmatprep.subr.mxu0 0.0
        %2140 = vmatpush1.msra.mxu0 0.0
        %2141 = vmatprep.subr.mxu0 0.0
        %2142 = vmatpush1.msra.mxu0 0.0
        %2143 = vmatprep.subr.mxu0 0.0
        %2144 = vmatpush1.msra.mxu0 0.0
        %2145 = vmatprep.mubr.f32.mxu0 0.0
        %2146 = vmatmul.mubr.f32.gmra.mrb[0].mxu0 %v620
        %v2147 = vpop.f32.mrb[0].mxu0
        %v2148 = vpop.f32.mrb[0].mxu0
        %2149 = vmatprep.mubr.f32.mxu0 0.0
        %2150 = vmatmul.mubr.f32.gmra.mrb[0].mxu0 %v623
        %v2151 = vpop.f32.mrb[0].mxu0
        %v2152 = vadd.f32 0.0, %v2151
        %v2153 = vpop.f32.mrb[0].mxu0
        %2154 = vmatprep.mubr.f32.mxu0 0.0
        %2155 = vmatmul.mubr.f32.gmra.mrb[0].mxu0 %v626
        %v2156 = vpop.f32.mrb[0].mxu0
        %v2157 = vadd.f32 0.0, %v2156
        %v2158 = vpop.f32.mrb[0].mxu0
        %2159 = vmatprep.mubr.f32.mxu0 0.0
        %2160 = vmatmul.mubr.f32.gmra.mrb[0].mxu0 %v629
        %v2161 = vpop.f32.mrb[0].mxu0
        %v2162 = vadd.f32 0.0, %v2161
        %v2163 = vpop.f32.mrb[0].mxu0
        %2164 = vmatprep.mubr.f32.mxu0 0.0
        %2165 = vmatmul.mubr.f32.gmra.mrb[0].mxu0 %v632
        %v2166 = vpop.f32.mrb[0].mxu0
        %v2167 = vadd.f32 0.0, %v2166
        %v2168 = vpop.f32.mrb[0].mxu0
        %2169 = vmatprep.mubr.f32.mxu0 0.0
        %2170 = vmatmul.mubr.f32.gmra.mrb[0].mxu0 %v635
        %v2171 = vpop.f32.mrb[0].mxu0
        %v2172 = vadd.f32 0.0, %v2171
        %v2173 = vpop.f32.mrb[0].mxu0
        %2174 = vmatprep.mubr.f32.mxu0 0.0
        %2175 = vmatmul.mubr.f32.gmra.mrb[0].mxu0 %v638
        %v2176 = vpop.f32.mrb[0].mxu0
        %v2177 = vadd.f32 0.0, %v2176
        %v2178 = vpop.f32.mrb[0].mxu0
        %2179 = vmatprep.mubr.f32.mxu0 0.0
        %2180 = vmatmul.mubr.f32.gmra.mrb[0].mxu0 %v641
        %v2181 = vpop.f32.mrb[0].mxu0
        %v2182 = vadd.f32 0.0, %v2181
        %v2183 = vpop.f32.mrb[0].mxu0
        %2184 = vmatprep.mubr.f32.mxu0 0.0
        %2185 = vmatmul.mubr.f32.gmra.mrb[0].mxu0 %v644
        %v2186 = vpop.f32.mrb[0].mxu0
        %v2187 = vpop.f32.mrb[0].mxu0
        %2188 = vmatprep.mubr.f32.mxu0 0.0
        %2189 = vmatmul.mubr.f32.gmra.mrb[0].mxu0 %v647
        %v2190 = vpop.f32.mrb[0].mxu0
        %v2191 = vadd.f32 0.0, %v2190
        %v2192 = vpop.f32.mrb[0].mxu0
        %2193 = vmatprep.mubr.f32.mxu0 0.0
        %2194 = vmatmul.mubr.f32.gmra.mrb[0].mxu0 %v650
        %v2195 = vpop.f32.mrb[0].mxu0
        %v2196 = vadd.f32 0.0, %v2195
        %v2197 = vpop.f32.mrb[0].mxu0
        %2198 = vmatprep.mubr.f32.mxu0 0.0
        %2199 = vmatmul.mubr.f32.gmra.mrb[0].mxu0 %v653
        %v2200 = vpop.f32.mrb[0].mxu0
        %v2201 = vadd.f32 0.0, %v2200
        %v2202 = vpop.f32.mrb[0].mxu0
        %2203 = vmatprep.mubr.f32.mxu0 0.0
        %2204 = vmatmul.mubr.f32.gmra.mrb[0].mxu0 %v656
        %v2205 = vpop.f32.mrb[0].mxu0
        %v2206 = vadd.f32 0.0, %v2205
        %v2207 = vpop.f32.mrb[0].mxu0
        %2208 = vmatprep.mubr.f32.mxu0 0.0
        %2209 = vmatmul.mubr.f32.gmra.mrb[0].mxu0 %v659
        %v2210 = vpop.f32.mrb[0].mxu0
        %v2211 = vadd.f32 0.0, %v2210
        %v2212 = vpop.f32.mrb[0].mxu0
        %2213 = vmatprep.mubr.f32.mxu0 0.0
        %2214 = vmatmul.mubr.f32.gmra.mrb[0].mxu0 %v662
        %v2215 = vpop.f32.mrb[0].mxu0
        %v2216 = vadd.f32 0.0, %v2215
        %v2217 = vpop.f32.mrb[0].mxu0
        %2218 = vmatprep.mubr.f32.mxu0 0.0
        %2219 = vmatmul.mubr.f32.gmra.mrb[0].mxu0 %v665
        %v2220 = vpop.f32.mrb[0].mxu0
        %v2221 = vadd.f32 0.0, %v2220
        %v2222 = vpop.f32.mrb[0].mxu0
        %2223 = vdwg.mxu0
        %v2224 = vld [vmem:[#allocation2] sm:$0xff]
        %v2225 = vld [vmem:[#allocation2 + $0x8] sm:$0xff]
        %v2226 = vld [vmem:[#allocation2 + $0x10] sm:$0xff]
        %v2227 = vld [vmem:[#allocation2 + $0x18] sm:$0xff]
        %v2228 = vld [vmem:[#allocation2 + $0x20] sm:$0xff]
        %v2229 = vld [vmem:[#allocation2 + $0x28] sm:$0xff]
        %v2230 = vld [vmem:[#allocation2 + $0x30] sm:$0xff]
        %v2231 = vld [vmem:[#allocation2 + $0x40] sm:$0xff]
        %v2232 = vld [vmem:[#allocation2 + $0x48] sm:$0xff]
        %v2233 = vld [vmem:[#allocation2 + $0x50] sm:$0xff]
        %v2234 = vld [vmem:[#allocation2 + $0x58] sm:$0xff]
        %v2235 = vld [vmem:[#allocation2 + $0x60] sm:$0xff]
        %v2236 = vld [vmem:[#allocation2 + $0x68] sm:$0xff]
        %v2237 = vld [vmem:[#allocation2 + $0x70] sm:$0xff]
        %v2238 = vadd.f32 %v2224, %v2152
        %v2239 = vadd.f32 %v2225, %v2157
        %v2240 = vadd.f32 %v2226, %v2162
        %v2241 = vadd.f32 %v2227, %v2167
        %v2242 = vadd.f32 %v2228, %v2172
        %v2243 = vadd.f32 %v2229, %v2177
        %v2244 = vadd.f32 %v2230, %v2182
        %v2245 = vadd.f32 %v2231, %v2191
        %v2246 = vadd.f32 %v2232, %v2196
        %v2247 = vadd.f32 %v2233, %v2201
        %v2248 = vadd.f32 %v2234, %v2206
        %v2249 = vadd.f32 %v2235, %v2211
        %v2250 = vadd.f32 %v2236, %v2216
        %v2251 = vadd.f32 %v2237, %v2221
        %2252 = vst.msk [vmem:[#allocation2] sm:$0xff] %vm812, %v2238
        %2253 = vst.msk [vmem:[#allocation2 + $0x8] sm:$0xff] %vm812, %v2239
        %2254 = vst.msk [vmem:[#allocation2 + $0x10] sm:$0xff] %vm812, %v2240
        %2255 = vst.msk [vmem:[#allocation2 + $0x18] sm:$0xff] %vm812, %v2241
        %2256 = vst.msk [vmem:[#allocation2 + $0x20] sm:$0xff] %vm812, %v2242
        %2257 = vst.msk [vmem:[#allocation2 + $0x28] sm:$0xff] %vm812, %v2243
        %2258 = vst.msk [vmem:[#allocation2 + $0x30] sm:$0xff] %vm812, %v2244
        %2259 = vst.msk [vmem:[#allocation2 + $0x40] sm:$0xff] %vm812, %v2245
        %2260 = vst.msk [vmem:[#allocation2 + $0x48] sm:$0xff] %vm812, %v2246
        %2261 = vst.msk [vmem:[#allocation2 + $0x50] sm:$0xff] %vm812, %v2247
        %2262 = vst.msk [vmem:[#allocation2 + $0x58] sm:$0xff] %vm812, %v2248
        %2263 = vst.msk [vmem:[#allocation2 + $0x60] sm:$0xff] %vm812, %v2249
        %2264 = vst.msk [vmem:[#allocation2 + $0x68] sm:$0xff] %vm812, %v2250
        %2265 = vst.msk [vmem:[#allocation2 + $0x70] sm:$0xff] %vm812, %v2251
        %s2266 = scalar_lea.vmem [#allocation9], 256
        %v2267 = vld [vmem:[%s2266] sm:$0xff]
        %v2268 = vld [vmem:[%s2266 + $0x8] sm:$0xff]
        %v2269 = vld [vmem:[%s2266 + $0x10] sm:$0xff]
        %v2270 = vld [vmem:[%s2266 + $0x18] sm:$0xff]
        %2271 = vmatprep.subr.mxu0 0.0
        %2272 = vmatpush1.msra.mxu0 %v2267
        %2273 = vmatprep.subr.mxu0 0.0
        %2274 = vmatpush1.msra.mxu0 %v2268
        %2275 = vmatprep.subr.mxu0 0.0
        %2276 = vmatpush1.msra.mxu0 %v2269
        %2277 = vmatprep.subr.mxu0 0.0
        %2278 = vmatpush1.msra.mxu0 %v2270
        %2279 = vmatprep.subr.mxu0 0.0
        %2280 = vmatpush1.msra.mxu0 0.0
        %2281 = vmatprep.subr.mxu0 0.0
        %2282 = vmatpush1.msra.mxu0 0.0
        %2283 = vmatprep.subr.mxu0 0.0
        %2284 = vmatpush1.msra.mxu0 0.0
        %2285 = vmatprep.subr.mxu0 0.0
        %2286 = vmatpush1.msra.mxu0 0.0
        %2287 = vmatprep.subr.mxu0 0.0
        %2288 = vmatpush1.msra.mxu0 0.0
        %2289 = vmatprep.subr.mxu0 0.0
        %2290 = vmatpush1.msra.mxu0 0.0
        %2291 = vmatprep.subr.mxu0 0.0
        %2292 = vmatpush1.msra.mxu0 0.0
        %2293 = vmatprep.subr.mxu0 0.0
        %2294 = vmatpush1.msra.mxu0 0.0
        %2295 = vmatprep.subr.mxu0 0.0
        %2296 = vmatpush1.msra.mxu0 0.0
        %2297 = vmatprep.subr.mxu0 0.0
        %2298 = vmatpush1.msra.mxu0 0.0
        %2299 = vmatprep.subr.mxu0 0.0
        %2300 = vmatpush1.msra.mxu0 0.0
        %2301 = vmatprep.subr.mxu0 0.0
        %2302 = vmatpush1.msra.mxu0 0.0
        %2303 = vmatprep.subr.mxu0 0.0
        %2304 = vmatpush1.msra.mxu0 0.0
        %2305 = vmatprep.subr.mxu0 0.0
        %2306 = vmatpush1.msra.mxu0 0.0
        %2307 = vmatprep.subr.mxu0 0.0
        %2308 = vmatpush1.msra.mxu0 0.0
        %2309 = vmatprep.subr.mxu0 0.0
        %2310 = vmatpush1.msra.mxu0 0.0
        %2311 = vmatprep.subr.mxu0 0.0
        %2312 = vmatpush1.msra.mxu0 0.0
        %2313 = vmatprep.subr.mxu0 0.0
        %2314 = vmatpush1.msra.mxu0 0.0
        %2315 = vmatprep.subr.mxu0 0.0
        %2316 = vmatpush1.msra.mxu0 0.0
        %2317 = vmatprep.subr.mxu0 0.0
        %2318 = vmatpush1.msra.mxu0 0.0
        %2319 = vmatprep.subr.mxu0 0.0
        %2320 = vmatpush1.msra.mxu0 0.0
        %2321 = vmatprep.subr.mxu0 0.0
        %2322 = vmatpush1.msra.mxu0 0.0
        %2323 = vmatprep.subr.mxu0 0.0
        %2324 = vmatpush1.msra.mxu0 0.0
        %2325 = vmatprep.subr.mxu0 0.0
        %2326 = vmatpush1.msra.mxu0 0.0
        %2327 = vmatprep.subr.mxu0 0.0
        %2328 = vmatpush1.msra.mxu0 0.0
        %2329 = vmatprep.subr.mxu0 0.0
        %2330 = vmatpush1.msra.mxu0 0.0
        %2331 = vmatprep.subr.mxu0 0.0
        %2332 = vmatpush1.msra.mxu0 0.0
        %2333 = vmatprep.subr.mxu0 0.0
        %2334 = vmatpush1.msra.mxu0 0.0
        %2335 = vmatprep.mubr.f32.mxu0 0.0
        %2336 = vmatmul.mubr.f32.gmra.mrb[0].mxu0 %v620
        %v2337 = vpop.f32.mrb[0].mxu0
        %v2338 = vpop.f32.mrb[0].mxu0
        %2339 = vmatprep.mubr.f32.mxu0 0.0
        %2340 = vmatmul.mubr.f32.gmra.mrb[0].mxu0 %v623
        %v2341 = vpop.f32.mrb[0].mxu0
        %v2342 = vadd.f32 0.0, %v2341
        %v2343 = vpop.f32.mrb[0].mxu0
        %2344 = vmatprep.mubr.f32.mxu0 0.0
        %2345 = vmatmul.mubr.f32.gmra.mrb[0].mxu0 %v626
        %v2346 = vpop.f32.mrb[0].mxu0
        %v2347 = vadd.f32 0.0, %v2346
        %v2348 = vpop.f32.mrb[0].mxu0
        %2349 = vmatprep.mubr.f32.mxu0 0.0
        %2350 = vmatmul.mubr.f32.gmra.mrb[0].mxu0 %v629
        %v2351 = vpop.f32.mrb[0].mxu0
        %v2352 = vadd.f32 0.0, %v2351
        %v2353 = vpop.f32.mrb[0].mxu0
        %2354 = vmatprep.mubr.f32.mxu0 0.0
        %2355 = vmatmul.mubr.f32.gmra.mrb[0].mxu0 %v632
        %v2356 = vpop.f32.mrb[0].mxu0
        %v2357 = vadd.f32 0.0, %v2356
        %v2358 = vpop.f32.mrb[0].mxu0
        %2359 = vmatprep.mubr.f32.mxu0 0.0
        %2360 = vmatmul.mubr.f32.gmra.mrb[0].mxu0 %v635
        %v2361 = vpop.f32.mrb[0].mxu0
        %v2362 = vadd.f32 0.0, %v2361
        %v2363 = vpop.f32.mrb[0].mxu0
        %2364 = vmatprep.mubr.f32.mxu0 0.0
        %2365 = vmatmul.mubr.f32.gmra.mrb[0].mxu0 %v638
        %v2366 = vpop.f32.mrb[0].mxu0
        %v2367 = vadd.f32 0.0, %v2366
        %v2368 = vpop.f32.mrb[0].mxu0
        %2369 = vmatprep.mubr.f32.mxu0 0.0
        %2370 = vmatmul.mubr.f32.gmra.mrb[0].mxu0 %v641
        %v2371 = vpop.f32.mrb[0].mxu0
        %v2372 = vadd.f32 0.0, %v2371
        %v2373 = vpop.f32.mrb[0].mxu0
        %2374 = vmatprep.mubr.f32.mxu0 0.0
        %2375 = vmatmul.mubr.f32.gmra.mrb[0].mxu0 %v644
        %v2376 = vpop.f32.mrb[0].mxu0
        %v2377 = vpop.f32.mrb[0].mxu0
        %2378 = vmatprep.mubr.f32.mxu0 0.0
        %2379 = vmatmul.mubr.f32.gmra.mrb[0].mxu0 %v647
        %v2380 = vpop.f32.mrb[0].mxu0
        %v2381 = vadd.f32 0.0, %v2380
        %v2382 = vpop.f32.mrb[0].mxu0
        %2383 = vmatprep.mubr.f32.mxu0 0.0
        %2384 = vmatmul.mubr.f32.gmra.mrb[0].mxu0 %v650
        %v2385 = vpop.f32.mrb[0].mxu0
        %v2386 = vadd.f32 0.0, %v2385
        %v2387 = vpop.f32.mrb[0].mxu0
        %2388 = vmatprep.mubr.f32.mxu0 0.0
        %2389 = vmatmul.mubr.f32.gmra.mrb[0].mxu0 %v653
        %v2390 = vpop.f32.mrb[0].mxu0
        %v2391 = vadd.f32 0.0, %v2390
        %v2392 = vpop.f32.mrb[0].mxu0
        %2393 = vmatprep.mubr.f32.mxu0 0.0
        %2394 = vmatmul.mubr.f32.gmra.mrb[0].mxu0 %v656
        %v2395 = vpop.f32.mrb[0].mxu0
        %v2396 = vadd.f32 0.0, %v2395
        %v2397 = vpop.f32.mrb[0].mxu0
        %2398 = vmatprep.mubr.f32.mxu0 0.0
        %2399 = vmatmul.mubr.f32.gmra.mrb[0].mxu0 %v659
        %v2400 = vpop.f32.mrb[0].mxu0
        %v2401 = vadd.f32 0.0, %v2400
        %v2402 = vpop.f32.mrb[0].mxu0
        %2403 = vmatprep.mubr.f32.mxu0 0.0
        %2404 = vmatmul.mubr.f32.gmra.mrb[0].mxu0 %v662
        %v2405 = vpop.f32.mrb[0].mxu0
        %v2406 = vadd.f32 0.0, %v2405
        %v2407 = vpop.f32.mrb[0].mxu0
        %2408 = vmatprep.mubr.f32.mxu0 0.0
        %2409 = vmatmul.mubr.f32.gmra.mrb[0].mxu0 %v665
        %v2410 = vpop.f32.mrb[0].mxu0
        %v2411 = vadd.f32 0.0, %v2410
        %v2412 = vpop.f32.mrb[0].mxu0
        %2413 = vdwg.mxu0
        %v2414 = vld [vmem:[#allocation2] sm:$0x7f]
        %v2415 = vld [vmem:[#allocation2 + $0x8] sm:$0x7f]
        %v2416 = vld [vmem:[#allocation2 + $0x10] sm:$0x7f]
        %v2417 = vld [vmem:[#allocation2 + $0x18] sm:$0x7f]
        %v2418 = vld [vmem:[#allocation2 + $0x20] sm:$0x7f]
        %v2419 = vld [vmem:[#allocation2 + $0x28] sm:$0x7f]
        %v2420 = vld [vmem:[#allocation2 + $0x30] sm:$0x7f]
        %v2421 = vld [vmem:[#allocation2 + $0x40] sm:$0x7f]
        %v2422 = vld [vmem:[#allocation2 + $0x48] sm:$0x7f]
        %v2423 = vld [vmem:[#allocation2 + $0x50] sm:$0x7f]
        %v2424 = vld [vmem:[#allocation2 + $0x58] sm:$0x7f]
        %v2425 = vld [vmem:[#allocation2 + $0x60] sm:$0x7f]
        %v2426 = vld [vmem:[#allocation2 + $0x68] sm:$0x7f]
        %v2427 = vld [vmem:[#allocation2 + $0x70] sm:$0x7f]
        %v2442 = vrot.slane %v2342, 1
        %v2443 = vrot.slane %v2347, 1
        %v2444 = vrot.slane %v2352, 1
        %v2445 = vrot.slane %v2357, 1
        %v2446 = vrot.slane %v2362, 1
        %v2447 = vrot.slane %v2367, 1
        %v2448 = vrot.slane %v2372, 1
        %v2449 = vrot.slane %v2381, 1
        %v2450 = vrot.slane %v2386, 1
        %v2451 = vrot.slane %v2391, 1
        %v2452 = vrot.slane %v2396, 1
        %v2453 = vrot.slane %v2401, 1
        %v2454 = vrot.slane %v2406, 1
        %v2455 = vrot.slane %v2411, 1
        %v2470 = vadd.f32 %v2414, %v2442
        %v2471 = vadd.f32 %v2415, %v2443
        %v2472 = vadd.f32 %v2416, %v2444
        %v2473 = vadd.f32 %v2417, %v2445
        %v2474 = vadd.f32 %v2418, %v2446
        %v2475 = vadd.f32 %v2419, %v2447
        %v2476 = vadd.f32 %v2420, %v2448
        %v2477 = vadd.f32 %v2421, %v2449
        %v2478 = vadd.f32 %v2422, %v2450
        %v2479 = vadd.f32 %v2423, %v2451
        %v2480 = vadd.f32 %v2424, %v2452
        %v2481 = vadd.f32 %v2425, %v2453
        %v2482 = vadd.f32 %v2426, %v2454
        %v2483 = vadd.f32 %v2427, %v2455
        %2484 = vst.msk [vmem:[#allocation2] sm:$0x7f] %vm1005, %v2470
        %2485 = vst.msk [vmem:[#allocation2 + $0x8] sm:$0x7f] %vm1005, %v2471
        %2486 = vst.msk [vmem:[#allocation2 + $0x10] sm:$0x7f] %vm1005, %v2472
        %2487 = vst.msk [vmem:[#allocation2 + $0x18] sm:$0x7f] %vm1005, %v2473
        %2488 = vst.msk [vmem:[#allocation2 + $0x20] sm:$0x7f] %vm1005, %v2474
        %2489 = vst.msk [vmem:[#allocation2 + $0x28] sm:$0x7f] %vm1005, %v2475
        %2490 = vst.msk [vmem:[#allocation2 + $0x30] sm:$0x7f] %vm1005, %v2476
        %2491 = vst.msk [vmem:[#allocation2 + $0x40] sm:$0x7f] %vm1005, %v2477
        %2492 = vst.msk [vmem:[#allocation2 + $0x48] sm:$0x7f] %vm1005, %v2478
        %2493 = vst.msk [vmem:[#allocation2 + $0x50] sm:$0x7f] %vm1005, %v2479
        %2494 = vst.msk [vmem:[#allocation2 + $0x58] sm:$0x7f] %vm1005, %v2480
        %2495 = vst.msk [vmem:[#allocation2 + $0x60] sm:$0x7f] %vm1005, %v2481
        %2496 = vst.msk [vmem:[#allocation2 + $0x68] sm:$0x7f] %vm1005, %v2482
        %2497 = vst.msk [vmem:[#allocation2 + $0x70] sm:$0x7f] %vm1005, %v2483
        %v2498 = vld [vmem:[#allocation2] sm:$0xff]
        %v2499 = vld [vmem:[#allocation2 + $0x8] sm:$0xff]
        %v2500 = vld [vmem:[#allocation2 + $0x10] sm:$0xff]
        %v2501 = vld [vmem:[#allocation2 + $0x18] sm:$0xff]
        %v2502 = vld [vmem:[#allocation2 + $0x20] sm:$0xff]
        %v2503 = vld [vmem:[#allocation2 + $0x28] sm:$0xff]
        %v2504 = vld [vmem:[#allocation2 + $0x30] sm:$0xff]
        %v2505 = vld [vmem:[#allocation2 + $0x38] sm:$0xff]
        %v2506 = vld [vmem:[#allocation2 + $0x40] sm:$0xff]
        %v2507 = vld [vmem:[#allocation2 + $0x48] sm:$0xff]
        %v2508 = vld [vmem:[#allocation2 + $0x50] sm:$0xff]
        %v2509 = vld [vmem:[#allocation2 + $0x58] sm:$0xff]
        %v2510 = vld [vmem:[#allocation2 + $0x60] sm:$0xff]
        %v2511 = vld [vmem:[#allocation2 + $0x68] sm:$0xff]
        %v2512 = vld [vmem:[#allocation2 + $0x70] sm:$0xff]
        %v2513 = vld [vmem:[#allocation2 + $0x78] sm:$0xff]
        %v2514 = vld [vmem:[#allocation11] sm:$0x1]
        %v2516 = vlaneseq
        %v2517 = vshrl.u32 %v2516, 7
        %v2518 = vsub.s32 0, %v2517
        %v2519 = vrot.slane %v2514, %v2518
        %v2521 = vadd.f32 %v2498, %v2519
        %v2522 = vadd.f32 %v2499, %v2519
        %v2523 = vadd.f32 %v2500, %v2519
        %v2524 = vadd.f32 %v2501, %v2519
        %v2525 = vadd.f32 %v2502, %v2519
        %v2526 = vadd.f32 %v2503, %v2519
        %v2527 = vadd.f32 %v2504, %v2519
        %v2528 = vadd.f32 %v2505, %v2519
        %v2529 = vadd.f32 %v2506, %v2519
        %v2530 = vadd.f32 %v2507, %v2519
        %v2531 = vadd.f32 %v2508, %v2519
        %v2532 = vadd.f32 %v2509, %v2519
        %v2533 = vadd.f32 %v2510, %v2519
        %v2534 = vadd.f32 %v2511, %v2519
        %v2535 = vadd.f32 %v2512, %v2519
        %v2536 = vadd.f32 %v2513, %v2519
        %v2537 = vmax.f32 %v2521, 0.0
        %v2538 = vmax.f32 %v2522, 0.0
        %v2539 = vmax.f32 %v2523, 0.0
        %v2540 = vmax.f32 %v2524, 0.0
        %v2541 = vmax.f32 %v2525, 0.0
        %v2542 = vmax.f32 %v2526, 0.0
        %v2543 = vmax.f32 %v2527, 0.0
        %v2544 = vmax.f32 %v2528, 0.0
        %v2545 = vmax.f32 %v2529, 0.0
        %v2546 = vmax.f32 %v2530, 0.0
        %v2547 = vmax.f32 %v2531, 0.0
        %v2548 = vmax.f32 %v2532, 0.0
        %v2549 = vmax.f32 %v2533, 0.0
        %v2550 = vmax.f32 %v2534, 0.0
        %v2551 = vmax.f32 %v2535, 0.0
        %v2552 = vmax.f32 %v2536, 0.0
        %v2553 = vld [vmem:[#allocation12] sm:$0xff]
        %v2554 = vld [vmem:[#allocation12 + $0x8] sm:$0xff]
        %v2555 = vld [vmem:[#allocation12 + $0x10] sm:$0xff]
        %v2556 = vld [vmem:[#allocation12 + $0x18] sm:$0xff]
        %v2557 = vld [vmem:[#allocation12 + $0x20] sm:$0xff]
        %v2558 = vld [vmem:[#allocation12 + $0x28] sm:$0xff]
        %v2559 = vld [vmem:[#allocation12 + $0x30] sm:$0xff]
        %v2560 = vld [vmem:[#allocation12 + $0x38] sm:$0xff]
        %v2561 = vld [vmem:[#allocation12 + $0x40] sm:$0xff]
        %v2562 = vld [vmem:[#allocation12 + $0x48] sm:$0xff]
        %v2563 = vld [vmem:[#allocation12 + $0x50] sm:$0xff]
        %v2564 = vld [vmem:[#allocation12 + $0x58] sm:$0xff]
        %v2565 = vld [vmem:[#allocation12 + $0x60] sm:$0xff]
        %v2566 = vld [vmem:[#allocation12 + $0x68] sm:$0xff]
        %v2567 = vld [vmem:[#allocation12 + $0x70] sm:$0xff]
        %v2568 = vld [vmem:[#allocation12 + $0x78] sm:$0xff]
        %v2569 = vld [vmem:[%s324] sm:$0xff]
        %v2570 = vld [vmem:[%s324 + $0x8] sm:$0xff]
        %v2571 = vld [vmem:[%s324 + $0x10] sm:$0xff]
        %v2572 = vld [vmem:[%s324 + $0x18] sm:$0xff]
        %v2573 = vld [vmem:[%s324 + $0x20] sm:$0xff]
        %v2574 = vld [vmem:[%s324 + $0x28] sm:$0xff]
        %v2575 = vld [vmem:[%s324 + $0x30] sm:$0xff]
        %v2576 = vld [vmem:[%s324 + $0x38] sm:$0xff]
        %v2577 = vld [vmem:[%s324 + $0x40] sm:$0xff]
        %v2578 = vld [vmem:[%s324 + $0x48] sm:$0xff]
        %v2579 = vld [vmem:[%s324 + $0x50] sm:$0xff]
        %v2580 = vld [vmem:[%s324 + $0x58] sm:$0xff]
        %v2581 = vld [vmem:[%s324 + $0x60] sm:$0xff]
        %v2582 = vld [vmem:[%s324 + $0x68] sm:$0xff]
        %v2583 = vld [vmem:[%s324 + $0x70] sm:$0xff]
        %v2584 = vld [vmem:[%s324 + $0x78] sm:$0xff]
        %v2585 = vld [vmem:[%s324 + $0x80] sm:$0xff]
        %v2586 = vld [vmem:[%s324 + $0x88] sm:$0xff]
        %v2587 = vld [vmem:[%s324 + $0x90] sm:$0xff]
        %v2588 = vld [vmem:[%s324 + $0x98] sm:$0xff]
        %v2589 = vld [vmem:[%s324 + $0xa0] sm:$0xff]
        %v2590 = vld [vmem:[%s324 + $0xa8] sm:$0xff]
        %v2591 = vld [vmem:[%s324 + $0xb0] sm:$0xff]
        %v2592 = vld [vmem:[%s324 + $0xb8] sm:$0xff]
        %v2593 = vld [vmem:[%s324 + $0xc0] sm:$0xff]
        %v2594 = vld [vmem:[%s324 + $0xc8] sm:$0xff]
        %v2595 = vld [vmem:[%s324 + $0xd0] sm:$0xff]
        %v2596 = vld [vmem:[%s324 + $0xd8] sm:$0xff]
        %v2597 = vld [vmem:[%s324 + $0xe0] sm:$0xff]
        %v2598 = vld [vmem:[%s324 + $0xe8] sm:$0xff]
        %v2599 = vld [vmem:[%s324 + $0xf0] sm:$0xff]
        %v2600 = vld [vmem:[%s324 + $0xf8] sm:$0xff]
        %v2601 = vld [vmem:[#allocation14] sm:$0x3]
        %v2603 = vlaneseq
        %v2604 = vshrl.u32 %v2603, 7
        %v2605 = vsub.s32 0, %v2604
        %v2606 = vrot.slane %v2601, %v2605
        %v2607 = vlaneseq
        %v2608 = vshrl.u32 %v2607, 7
        %v2609 = vsub.s32 1, %v2608
        %v2610 = vrot.slane %v2601, %v2609
        %v2614 = vsel %vm812, %v2537, 0
        %v2617 = vsel %vm812, %v2538, 0
        %v2620 = vsel %vm812, %v2539, 0
        %v2623 = vsel %vm812, %v2540, 0
        %v2626 = vsel %vm812, %v2541, 0
        %v2629 = vsel %vm812, %v2542, 0
        %v2632 = vsel %vm812, %v2543, 0
        %v2635 = vsel %vm812, %v2544, 0
        %v2638 = vsel %vm812, %v2545, 0
        %v2641 = vsel %vm812, %v2546, 0
        %v2644 = vsel %vm812, %v2547, 0
        %v2647 = vsel %vm812, %v2548, 0
        %v2650 = vsel %vm812, %v2549, 0
        %v2653 = vsel %vm812, %v2550, 0
        %v2656 = vsel %vm812, %v2551, 0
        %v2659 = vsel %vm812, %v2552, 0
        %2661 = vmatprep.subr.mxu0 %v2554
        %2662 = vmatpush1.msra.mxu0 %v2553
        %2663 = vmatprep.subr.mxu0 %v2556
        %2664 = vmatpush1.msra.mxu0 %v2555
        %2665 = vmatprep.subr.mxu0 %v2558
        %2666 = vmatpush1.msra.mxu0 %v2557
        %2667 = vmatprep.subr.mxu0 %v2560
        %2668 = vmatpush1.msra.mxu0 %v2559
        %2669 = vmatprep.subr.mxu0 %v2562
        %2670 = vmatpush1.msra.mxu0 %v2561
        %2671 = vmatprep.subr.mxu0 %v2564
        %2672 = vmatpush1.msra.mxu0 %v2563
        %2673 = vmatprep.subr.mxu0 %v2566
        %2674 = vmatpush1.msra.mxu0 %v2565
        %2675 = vmatprep.subr.mxu0 %v2568
        %2676 = vmatpush1.msra.mxu0 %v2567
        %2677 = vmatprep.subr.mxu0 0.0
        %2678 = vmatpush1.msra.mxu0 0.0
        %2679 = vmatprep.subr.mxu0 0.0
        %2680 = vmatpush1.msra.mxu0 0.0
        %2681 = vmatprep.subr.mxu0 0.0
        %2682 = vmatpush1.msra.mxu0 0.0
        %2683 = vmatprep.subr.mxu0 0.0
        %2684 = vmatpush1.msra.mxu0 0.0
        %2685 = vmatprep.subr.mxu0 0.0
        %2686 = vmatpush1.msra.mxu0 0.0
        %2687 = vmatprep.subr.mxu0 0.0
        %2688 = vmatpush1.msra.mxu0 0.0
        %2689 = vmatprep.subr.mxu0 0.0
        %2690 = vmatpush1.msra.mxu0 0.0
        %2691 = vmatprep.subr.mxu0 0.0
        %2692 = vmatpush1.msra.mxu0 0.0
        %2693 = vmatprep.subr.mxu0 0.0
        %2694 = vmatpush1.msra.mxu0 0.0
        %2695 = vmatprep.subr.mxu0 0.0
        %2696 = vmatpush1.msra.mxu0 0.0
        %2697 = vmatprep.subr.mxu0 0.0
        %2698 = vmatpush1.msra.mxu0 0.0
        %2699 = vmatprep.subr.mxu0 0.0
        %2700 = vmatpush1.msra.mxu0 0.0
        %2701 = vmatprep.subr.mxu0 0.0
        %2702 = vmatpush1.msra.mxu0 0.0
        %2703 = vmatprep.subr.mxu0 0.0
        %2704 = vmatpush1.msra.mxu0 0.0
        %2705 = vmatprep.subr.mxu0 0.0
        %2706 = vmatpush1.msra.mxu0 0.0
        %2707 = vmatprep.subr.mxu0 0.0
        %2708 = vmatpush1.msra.mxu0 0.0
        %2709 = vmatprep.subr.mxu0 0.0
        %2710 = vmatpush1.msra.mxu0 0.0
        %2711 = vmatprep.subr.mxu0 0.0
        %2712 = vmatpush1.msra.mxu0 0.0
        %2713 = vmatprep.subr.mxu0 0.0
        %2714 = vmatpush1.msra.mxu0 0.0
        %2715 = vmatprep.subr.mxu0 0.0
        %2716 = vmatpush1.msra.mxu0 0.0
        %2717 = vmatprep.subr.mxu0 0.0
        %2718 = vmatpush1.msra.mxu0 0.0
        %2719 = vmatprep.subr.mxu0 0.0
        %2720 = vmatpush1.msra.mxu0 0.0
        %2721 = vmatprep.subr.mxu0 0.0
        %2722 = vmatpush1.msra.mxu0 0.0
        %2723 = vmatprep.subr.mxu0 0.0
        %2724 = vmatpush1.msra.mxu0 0.0
        %2725 = vmatprep.mubr.f32.mxu0 0.0
        %2726 = vmatmul.mubr.f32.gmra.mrb[0].mxu0 %v2614
        %v2727 = vpop.f32.mrb[0].mxu0
        %v2728 = vadd.f32 %v2606, %v2727
        %v2729 = vpop.f32.mrb[0].mxu0
        %v2730 = vadd.f32 %v2610, %v2729
        %2731 = vmatprep.mubr.f32.mxu0 0.0
        %2732 = vmatmul.mubr.f32.gmra.mrb[0].mxu0 %v2617
        %v2733 = vpop.f32.mrb[0].mxu0
        %v2734 = vadd.f32 %v2606, %v2733
        %v2735 = vpop.f32.mrb[0].mxu0
        %v2736 = vadd.f32 %v2610, %v2735
        %2737 = vmatprep.mubr.f32.mxu0 0.0
        %2738 = vmatmul.mubr.f32.gmra.mrb[0].mxu0 %v2620
        %v2739 = vpop.f32.mrb[0].mxu0
        %v2740 = vadd.f32 %v2606, %v2739
        %v2741 = vpop.f32.mrb[0].mxu0
        %v2742 = vadd.f32 %v2610, %v2741
        %2743 = vmatprep.mubr.f32.mxu0 0.0
        %2744 = vmatmul.mubr.f32.gmra.mrb[0].mxu0 %v2623
        %v2745 = vpop.f32.mrb[0].mxu0
        %v2746 = vadd.f32 %v2606, %v2745
        %v2747 = vpop.f32.mrb[0].mxu0
        %v2748 = vadd.f32 %v2610, %v2747
        %2749 = vmatprep.mubr.f32.mxu0 0.0
        %2750 = vmatmul.mubr.f32.gmra.mrb[0].mxu0 %v2626
        %v2751 = vpop.f32.mrb[0].mxu0
        %v2752 = vadd.f32 %v2606, %v2751
        %v2753 = vpop.f32.mrb[0].mxu0
        %v2754 = vadd.f32 %v2610, %v2753
        %2755 = vmatprep.mubr.f32.mxu0 0.0
        %2756 = vmatmul.mubr.f32.gmra.mrb[0].mxu0 %v2629
        %v2757 = vpop.f32.mrb[0].mxu0
        %v2758 = vadd.f32 %v2606, %v2757
        %v2759 = vpop.f32.mrb[0].mxu0
        %v2760 = vadd.f32 %v2610, %v2759
        %2761 = vmatprep.mubr.f32.mxu0 0.0
        %2762 = vmatmul.mubr.f32.gmra.mrb[0].mxu0 %v2632
        %v2763 = vpop.f32.mrb[0].mxu0
        %v2764 = vadd.f32 %v2606, %v2763
        %v2765 = vpop.f32.mrb[0].mxu0
        %v2766 = vadd.f32 %v2610, %v2765
        %2767 = vmatprep.mubr.f32.mxu0 0.0
        %2768 = vmatmul.mubr.f32.gmra.mrb[0].mxu0 %v2635
        %v2769 = vpop.f32.mrb[0].mxu0
        %v2770 = vadd.f32 %v2606, %v2769
        %v2771 = vpop.f32.mrb[0].mxu0
        %v2772 = vadd.f32 %v2610, %v2771
        %2773 = vmatprep.mubr.f32.mxu0 0.0
        %2774 = vmatmul.mubr.f32.gmra.mrb[0].mxu0 %v2638
        %v2775 = vpop.f32.mrb[0].mxu0
        %v2776 = vadd.f32 %v2606, %v2775
        %v2777 = vpop.f32.mrb[0].mxu0
        %v2778 = vadd.f32 %v2610, %v2777
        %2779 = vmatprep.mubr.f32.mxu0 0.0
        %2780 = vmatmul.mubr.f32.gmra.mrb[0].mxu0 %v2641
        %v2781 = vpop.f32.mrb[0].mxu0
        %v2782 = vadd.f32 %v2606, %v2781
        %v2783 = vpop.f32.mrb[0].mxu0
        %v2784 = vadd.f32 %v2610, %v2783
        %2785 = vmatprep.mubr.f32.mxu0 0.0
        %2786 = vmatmul.mubr.f32.gmra.mrb[0].mxu0 %v2644
        %v2787 = vpop.f32.mrb[0].mxu0
        %v2788 = vadd.f32 %v2606, %v2787
        %v2789 = vpop.f32.mrb[0].mxu0
        %v2790 = vadd.f32 %v2610, %v2789
        %2791 = vmatprep.mubr.f32.mxu0 0.0
        %2792 = vmatmul.mubr.f32.gmra.mrb[0].mxu0 %v2647
        %v2793 = vpop.f32.mrb[0].mxu0
        %v2794 = vadd.f32 %v2606, %v2793
        %v2795 = vpop.f32.mrb[0].mxu0
        %v2796 = vadd.f32 %v2610, %v2795
        %2797 = vmatprep.mubr.f32.mxu0 0.0
        %2798 = vmatmul.mubr.f32.gmra.mrb[0].mxu0 %v2650
        %v2799 = vpop.f32.mrb[0].mxu0
        %v2800 = vadd.f32 %v2606, %v2799
        %v2801 = vpop.f32.mrb[0].mxu0
        %v2802 = vadd.f32 %v2610, %v2801
        %2803 = vmatprep.mubr.f32.mxu0 0.0
        %2804 = vmatmul.mubr.f32.gmra.mrb[0].mxu0 %v2653
        %v2805 = vpop.f32.mrb[0].mxu0
        %v2806 = vadd.f32 %v2606, %v2805
        %v2807 = vpop.f32.mrb[0].mxu0
        %v2808 = vadd.f32 %v2610, %v2807
        %2809 = vmatprep.mubr.f32.mxu0 0.0
        %2810 = vmatmul.mubr.f32.gmra.mrb[0].mxu0 %v2656
        %v2811 = vpop.f32.mrb[0].mxu0
        %v2812 = vadd.f32 %v2606, %v2811
        %v2813 = vpop.f32.mrb[0].mxu0
        %v2814 = vadd.f32 %v2610, %v2813
        %2815 = vmatprep.mubr.f32.mxu0 0.0
        %2816 = vmatmul.mubr.f32.gmra.mrb[0].mxu0 %v2659
        %v2817 = vpop.f32.mrb[0].mxu0
        %v2818 = vadd.f32 %v2606, %v2817
        %v2819 = vpop.f32.mrb[0].mxu0
        %v2820 = vadd.f32 %v2610, %v2819
        %2821 = vdwg.mxu0
        %v2822 = vadd.f32 %v2728, %v2569
        %v2823 = vadd.f32 %v2730, %v2570
        %v2824 = vadd.f32 %v2734, %v2571
        %v2825 = vadd.f32 %v2736, %v2572
        %v2826 = vadd.f32 %v2740, %v2573
        %v2827 = vadd.f32 %v2742, %v2574
        %v2828 = vadd.f32 %v2746, %v2575
        %v2829 = vadd.f32 %v2748, %v2576
        %v2830 = vadd.f32 %v2752, %v2577
        %v2831 = vadd.f32 %v2754, %v2578
        %v2832 = vadd.f32 %v2758, %v2579
        %v2833 = vadd.f32 %v2760, %v2580
        %v2834 = vadd.f32 %v2764, %v2581
        %v2835 = vadd.f32 %v2766, %v2582
        %v2836 = vadd.f32 %v2770, %v2583
        %v2837 = vadd.f32 %v2772, %v2584
        %v2838 = vadd.f32 %v2776, %v2585
        %v2839 = vadd.f32 %v2778, %v2586
        %v2840 = vadd.f32 %v2782, %v2587
        %v2841 = vadd.f32 %v2784, %v2588
        %v2842 = vadd.f32 %v2788, %v2589
        %v2843 = vadd.f32 %v2790, %v2590
        %v2844 = vadd.f32 %v2794, %v2591
        %v2845 = vadd.f32 %v2796, %v2592
        %v2846 = vadd.f32 %v2800, %v2593
        %v2847 = vadd.f32 %v2802, %v2594
        %v2848 = vadd.f32 %v2806, %v2595
        %v2849 = vadd.f32 %v2808, %v2596
        %v2850 = vadd.f32 %v2812, %v2597
        %v2851 = vadd.f32 %v2814, %v2598
        %v2852 = vadd.f32 %v2818, %v2599
        %v2853 = vadd.f32 %v2820, %v2600
        %v2854 = vmax.f32 %v2822, 0.0
        %v2855 = vmax.f32 %v2823, 0.0
        %v2856 = vmax.f32 %v2824, 0.0
        %v2857 = vmax.f32 %v2825, 0.0
        %v2858 = vmax.f32 %v2826, 0.0
        %v2859 = vmax.f32 %v2827, 0.0
        %v2860 = vmax.f32 %v2828, 0.0
        %v2861 = vmax.f32 %v2829, 0.0
        %v2862 = vmax.f32 %v2830, 0.0
        %v2863 = vmax.f32 %v2831, 0.0
        %v2864 = vmax.f32 %v2832, 0.0
        %v2865 = vmax.f32 %v2833, 0.0
        %v2866 = vmax.f32 %v2834, 0.0
        %v2867 = vmax.f32 %v2835, 0.0
        %v2868 = vmax.f32 %v2836, 0.0
        %v2869 = vmax.f32 %v2837, 0.0
        %v2870 = vmax.f32 %v2838, 0.0
        %v2871 = vmax.f32 %v2839, 0.0
        %v2872 = vmax.f32 %v2840, 0.0
        %v2873 = vmax.f32 %v2841, 0.0
        %v2874 = vmax.f32 %v2842, 0.0
        %v2875 = vmax.f32 %v2843, 0.0
        %v2876 = vmax.f32 %v2844, 0.0
        %v2877 = vmax.f32 %v2845, 0.0
        %v2878 = vmax.f32 %v2846, 0.0
        %v2879 = vmax.f32 %v2847, 0.0
        %v2880 = vmax.f32 %v2848, 0.0
        %v2881 = vmax.f32 %v2849, 0.0
        %v2882 = vmax.f32 %v2850, 0.0
        %v2883 = vmax.f32 %v2851, 0.0
        %v2884 = vmax.f32 %v2852, 0.0
        %v2885 = vmax.f32 %v2853, 0.0
        %2886 = vst [vmem:[%s378] sm:$0xff] %v2854
        %2887 = vst [vmem:[%s378 + $0x8] sm:$0xff] %v2855
        %2888 = vst [vmem:[%s378 + $0x10] sm:$0xff] %v2856
        %2889 = vst [vmem:[%s378 + $0x18] sm:$0xff] %v2857
        %2890 = vst [vmem:[%s378 + $0x20] sm:$0xff] %v2858
        %2891 = vst [vmem:[%s378 + $0x28] sm:$0xff] %v2859
        %2892 = vst [vmem:[%s378 + $0x30] sm:$0xff] %v2860
        %2893 = vst [vmem:[%s378 + $0x38] sm:$0xff] %v2861
        %2894 = vst [vmem:[%s378 + $0x40] sm:$0xff] %v2862
        %2895 = vst [vmem:[%s378 + $0x48] sm:$0xff] %v2863
        %2896 = vst [vmem:[%s378 + $0x50] sm:$0xff] %v2864
        %2897 = vst [vmem:[%s378 + $0x58] sm:$0xff] %v2865
        %2898 = vst [vmem:[%s378 + $0x60] sm:$0xff] %v2866
        %2899 = vst [vmem:[%s378 + $0x68] sm:$0xff] %v2867
        %2900 = vst [vmem:[%s378 + $0x70] sm:$0xff] %v2868
        %2901 = vst [vmem:[%s378 + $0x78] sm:$0xff] %v2869
        %2902 = vst [vmem:[%s378 + $0x80] sm:$0xff] %v2870
        %2903 = vst [vmem:[%s378 + $0x88] sm:$0xff] %v2871
        %2904 = vst [vmem:[%s378 + $0x90] sm:$0xff] %v2872
        %2905 = vst [vmem:[%s378 + $0x98] sm:$0xff] %v2873
        %2906 = vst [vmem:[%s378 + $0xa0] sm:$0xff] %v2874
        %2907 = vst [vmem:[%s378 + $0xa8] sm:$0xff] %v2875
        %2908 = vst [vmem:[%s378 + $0xb0] sm:$0xff] %v2876
        %2909 = vst [vmem:[%s378 + $0xb8] sm:$0xff] %v2877
        %2910 = vst [vmem:[%s378 + $0xc0] sm:$0xff] %v2878
        %2911 = vst [vmem:[%s378 + $0xc8] sm:$0xff] %v2879
        %2912 = vst [vmem:[%s378 + $0xd0] sm:$0xff] %v2880
        %2913 = vst [vmem:[%s378 + $0xd8] sm:$0xff] %v2881
        %2914 = vst [vmem:[%s378 + $0xe0] sm:$0xff] %v2882
        %2915 = vst [vmem:[%s378 + $0xe8] sm:$0xff] %v2883
        %2916 = vst [vmem:[%s378 + $0xf0] sm:$0xff] %v2884
        %2917 = vst [vmem:[%s378 + $0xf8] sm:$0xff] %v2885
        %s2918 = sand.u32 %s187, 1
        %s2919 = scalar_lea.sflag [#allocation5], %s2918
        %s2920 = sand.u32 %s187, 1
        %s2921 = smul.addr %s2920, 256
        %s2922 = scalar_lea.vmem [#allocation15], %s2921
        // Predicated region
        $region77: #{tpu_custom_call.1} parent=47 // pred_check
          %p2923 = pneg %p197
        $region78: #{tpu_custom_call.1} parent=47 // pred_check_branch
          %2925 = sbr.rel (%p2923) target = $region80
        $region79: #{tpu_custom_call.1} parent=47 // pred_region
          %s2926 = smul.u32 2, %s27
          %s2928 = ssub.s32 4096, 4096
          %2929 = vsyncadd %s2919, %s2928
          %s2930 = smul.addr %s2926, 16
          %s2931 = smul.addr %s2930, 128
          %s2932 = scalar_lea.hbm %s7, %s2931
          %s2933 = sshll.u32 %s2922, 4
          %s2934 = int_to_ptr.vmem [resolvable:$true] %s2933
          %2939 = dma.vmem_to_hbm [thread:$0]  %s2934, 4096, %s2932, %s2919, 256, 256, 16
        $region80: #{tpu_custom_call.1} parent=47 // pred_fallthru
          _
      $region48: #{tpu_custom_call.1} parent=5 // pred_fallthru
        _
      %p2940 = scmp.le.s32.totalorder 2, %s22
      // Predicated region
      $region81: #{tpu_custom_call.1} parent=5 // pred_check
        %p2941 = pneg %p2940
      $region82: #{tpu_custom_call.1} parent=5 // pred_check_branch
        %2943 = sbr.rel (%p2941) target = $region84
      $region83: #{tpu_custom_call.1} parent=5 // pred_region
        %s2944 = ssub.s32 %s22, 2
        // Predicated region
        $region85: #{tpu_custom_call.1} parent=83 // pred_check
          %p2945 = pneg %p203
        $region86: #{tpu_custom_call.1} parent=83 // pred_check_branch
          %2947 = sbr.rel (%p2945) target = $region88
        $region87: #{tpu_custom_call.1} parent=83 // pred_region
          %s2948 = sand.u32 %s188, 1
          %s2949 = scalar_lea.sflag [#allocation5], %s2948
          %s2950 = sand.u32 %s188, 1
          %s2951 = smul.addr %s2950, 256
          %s2952 = scalar_lea.vmem [#allocation15], %s2951
          %2953 = dma.done %s2949, 4096
        $region88: #{tpu_custom_call.1} parent=83 // pred_fallthru
          _
      $region84: #{tpu_custom_call.1} parent=5 // pred_fallthru
        _
    $region6: #{tpu_custom_call.1} parent=1 // loop_footer
      %s26 = sadd.s32 1, %s22
    $region7: #{tpu_custom_call.1} parent=1 // loop_footer_branch
      %21 = sbr.rel target = $region3
    $region8: #{tpu_custom_call.1} parent=1 // loop_exit
      _
    %2954 = vsyncpa [#allocation4], 1
    %s2955 = scalar_lea.sflag [#allocation4], 1
    %2956 = vsyncpa %s2955, 1
    %2957 = vsyncpa [#allocation7], 1
    %2958 = vsyncpa [#allocation10], 1
    %2959 = vsyncpa [#allocation13], 1
    %2960 = vsyncpa [#allocation5], 1
    %s2961 = scalar_lea.sflag [#allocation5], 1
    %2962 = vsyncpa %s2961, 1

</llo_original>
